<compile_context>
chip_gen: v7x
topology: tpu7x:2x2x1
jax: 0.10.0
libtpu: 0.0.40
codegen_flags: <defaults>
</compile_context>

<pallas_src>
import functools

import jax
import jax.numpy as jnp
from jax.experimental import pallas as pl
from jax.experimental.pallas import tpu as pltpu

LANE = 128


def _round_up(x, m=LANE):
    return ((x + m - 1) // m) * m


def _pad_axis(a, axis, new_size):
    if a.shape[axis] == new_size:
        return a
    pads = [(0, 0)] * a.ndim
    pads[axis] = (0, new_size - a.shape[axis])
    return jnp.pad(a, pads)


# ------------------------------------------------------------------------------------------------
# Hardware-aware sizing
# ------------------------------------------------------------------------------------------------

def _tpu_vmem_capacity():
    try:
        return int(pltpu.get_tpu_info().vmem_capacity_bytes)
    except Exception:
        return 64 * 1024 * 1024            # conservative default (v7x per-TensorCore VMEM)


_VMEM_CAP = _tpu_vmem_capacity()
_VMEM_LIMIT = max(32 * 1024 * 1024, min(_VMEM_CAP * 3 // 4, 100 * 1024 * 1024))
_VMEM_BUDGET = max(16 * 1024 * 1024, int(_VMEM_CAP * 0.45))     # target live bytes per kernel


def _pick_row_tile(H, per_row_bytes, fixed_bytes=0, row_tile=None):
    """Largest row tile dividing H (preferring multiples of 8) whose estimated live VMEM fits."""
    if row_tile is not None and H % min(row_tile, H) == 0:
        return min(row_tile, H)
    divisors = [d for d in range(1, H + 1) if H % d == 0]
    preferred = [d for d in divisors if d % 8 == 0] or divisors
    fitting = [d for d in preferred if fixed_bytes + d * per_row_bytes <= _VMEM_BUDGET]
    return max(fitting) if fitting else min(preferred)


def _const_spec(shape):
    """Grid-invariant operand (weights / bias): same block at every grid step, fetched once.
    TODO(synk): pipeline_mode=pl.Buffered(1) would also drop the unused second buffer."""
    return pl.BlockSpec(shape, lambda *_: (0,) * len(shape))


# ------------------------------------------------------------------------------------------------
# In-kernel helpers shared by the conv and SPADE-tail kernels
# ------------------------------------------------------------------------------------------------

def _fill_halo(pad_ref, body_ref, top_ref, bot_ref, TH, W):
    """Fill the (TH+2, W+2, C) bf16 halo scratch for a 3x3 'same' conv over one row tile.

    Only the 1-pixel border columns are zeroed (every step -> no cross-step scratch state, safe
    under megacore sharding); interior and halo rows are fully overwritten.  Halo rows come from
    the neighbouring row tiles (clamped 1-row blocks) and are zeroed at the image boundary.
    """
    r = pl.program_id(1)
    n_rows = pl.num_programs(1)
    C = pad_ref.shape[-1]
    dt = pad_ref.dtype

    zcol = jnp.zeros((TH + 2, 1, C), dt)
    pad_ref[:, pl.ds(0, 1), :] = zcol
    pad_ref[:, pl.ds(W + 1, 1), :] = zcol

    zrow = jnp.zeros((1, W, C), dt)
    top = top_ref[...].reshape(1, W, C).astype(dt)
    bot = bot_ref[...].reshape(1, W, C).astype(dt)
    pad_ref[pl.ds(0, 1), pl.ds(1, W), :] = jnp.where(r > 0, top, zrow)
    pad_ref[pl.ds(TH + 1, 1), pl.ds(1, W), :] = jnp.where(r < n_rows - 1, bot, zrow)

    pad_ref[pl.ds(1, TH), pl.ds(1, W), :] = body_ref[0].astype(dt)


def _conv3x3_accum(pad_ref, w_ref, TH, W):
    """9 per-tap MXU dots accumulated in f32 (no im2col slab is materialised).

    w_ref rows are tap-major ((ky*3+kx)*Cin + cin), i.e. HWIO.reshape(9*Cin, Cout).
    (On v5e/v6e a single K=9*Cin matmul from a staged bf16 slab would amortise MXU drains a bit
    better; per-tap accumulation is the portable / v7x-preferred choice.)
    """
    Cin = pad_ref.shape[-1]
    acc = None
    for dy in range(3):
        for dx in range(3):
            t = dy * 3 + dx
            win = pad_ref[pl.ds(dy, TH), pl.ds(dx, W), :].reshape(TH * W, Cin)
            part = jnp.dot(win, w_ref[pl.ds(t * Cin, Cin), :],
                           preferred_element_type=jnp.float32)
            acc = part if acc is None else acc + part
    return acc                                            # (TH*W, Cout) f32


# ------------------------------------------------------------------------------------------------
# Kernels
# ------------------------------------------------------------------------------------------------

def _conv3x3_common(xb_ref, xt_ref, xbt_ref, w_ref, b_ref, r_ref, o_ref, pad_ref, *, TH, W, act):
    Cout = o_ref.shape[-1]
    _fill_halo(pad_ref, xb_ref, xt_ref, xbt_ref, TH, W)
    acc = _conv3x3_accum(pad_ref, w_ref, TH, W) + b_ref[...]
    if act == "relu":
        acc = jnp.maximum(acc, 0.0)
    if r_ref is not None:                                 # fused residual: out = x_s + conv(...)
        acc = acc + r_ref[0].reshape(TH * W, Cout)
    o_ref[...] = acc.reshape(1, TH, W, Cout).astype(o_ref.dtype)


def _conv3x3_kernel(xb_ref, xt_ref, xbt_ref, w_ref, b_ref, o_ref, pad_ref, *, TH, W, act):
    _conv3x3_common(xb_ref, xt_ref, xbt_ref, w_ref, b_ref, None, o_ref, pad_ref,
                    TH=TH, W=W, act=act)


def _conv3x3_res_kernel(xb_ref, xt_ref, xbt_ref, w_ref, b_ref, r_ref, o_ref, pad_ref,
                        *, TH, W, act):
    _conv3x3_common(xb_ref, xt_ref, xbt_ref, w_ref, b_ref, r_ref, o_ref, pad_ref,
                    TH=TH, W=W, act=act)


def _stats_kernel(x_ref, o_ref, sum_ref, sq_ref, *, HW, eps):
    """Per-(image, channel) instance-norm stats: single pass sum / sum-of-squares accumulated
    over the (arbitrary) row-tile axis; mean and rstd written at the last row tile."""
    r = pl.program_id(1)

    @pl.when(r == 0)
    def _():
        sum_ref[...] = jnp.zeros_like(sum_ref)
        sq_ref[...] = jnp.zeros_like(sq_ref)

    x = x_ref[0].reshape(-1, x_ref.shape[-1])             # (TH*W, C) f32
    sum_ref[...] += jnp.sum(x, axis=0, keepdims=True)
    sq_ref[...] += jnp.sum(x * x, axis=0, keepdims=True)

    @pl.when(r == pl.num_programs(1) - 1)
    def _():
        inv = 1.0 / HW
        mean = sum_ref[...] * inv
        var = jnp.maximum(sq_ref[...] * inv - mean * mean, 0.0)
        rstd = jax.lax.rsqrt(var + eps)
        o_ref[...] = jnp.concatenate([mean, rstd], axis=0).reshape(o_ref.shape)


def _gamma_beta(pad_ref, ab_ref, at_ref, abt_ref, wgb_ref, bgb_ref, TH, W):
    """Merged gamma/beta 3x3 conv (Cout = 2*C) via per-tap MXU accumulation; stays in VMEM."""
    _fill_halo(pad_ref, ab_ref, at_ref, abt_ref, TH, W)
    return _conv3x3_accum(pad_ref, wgb_ref, TH, W) + bgb_ref[...]      # (TH*W, 2*C) f32


def _spade_single_kernel(x_ref, st_ref, ab_ref, at_ref, abt_ref, wgb_ref, bgb_ref,
                         o_ref, pad_ref, *, TH, W, C, leaky):
    gb = _gamma_beta(pad_ref, ab_ref, at_ref, abt_ref, wgb_ref, bgb_ref, TH, W)
    st = st_ref[0]                                        # (2, C): row 0 = mean, row 1 = rstd
    xn = (x_ref[0].reshape(TH * W, C) - st[0:1, :]) * st[1:2, :]
    out = xn * (1.0 + gb[:, :C]) + gb[:, C:]
    if leaky:                                             # block's actvn: leaky_relu(0.2)
        out = jnp.where(out >= 0.0, out, 0.2 * out)
    o_ref[...] = out.reshape(1, TH, W, C).astype(o_ref.dtype)


def _spade_dual_kernel(x_ref, st_ref, a0b_ref, a0t_ref, a0bt_ref, asb_ref, ast_ref, asbt_ref,
                       wgb0_ref, bgb0_ref, wgbs_ref, bgbs_ref, ws_ref,
                       h_ref, xs_ref, pad_ref, *, TH, W, C):
    """Fused norm_0 + norm_s + conv_s: x and its instance-norm application are shared."""
    st = st_ref[0]
    xn = (x_ref[0].reshape(TH * W, C) - st[0:1, :]) * st[1:2, :]

    # main path (norm_0): modulate + leaky_relu(0.2) -> bf16 input of conv_0
    gb0 = _gamma_beta(pad_ref, a0b_ref, a0t_ref, a0bt_ref, wgb0_ref, bgb0_ref, TH, W)
    h = xn * (1.0 + gb0[:, :C]) + gb0[:, C:]
    h = jnp.where(h >= 0.0, h, 0.2 * h)
    h_ref[...] = h.reshape(1, TH, W, C).astype(h_ref.dtype)

    # shortcut path (norm_s): modulate (no activation) + fused 1x1 conv_s
    gbs = _gamma_beta(pad_ref, asb_ref, ast_ref, asbt_ref, wgbs_ref, bgbs_ref, TH, W)
    ms = xn * (1.0 + gbs[:, :C]) + gbs[:, C:]
    xs = jnp.dot(ms.astype(ws_ref.dtype), ws_ref[...], preferred_element_type=jnp.float32)
    xs_ref[...] = xs.reshape(1, TH, W, ws_ref.shape[-1]).astype(xs_ref.dtype)


# ------------------------------------------------------------------------------------------------
# pallas_call wrappers
# ------------------------------------------------------------------------------------------------

def _row_specs(TH, W, C, H, chan_block=0):
    """(body, top-halo-row, bottom-halo-row) BlockSpecs for one row tile of an (N,H,W,*) tensor."""
    body = pl.BlockSpec((1, TH, W, C), lambda n, r: (n, r, 0, chan_block))
    top = pl.BlockSpec((1, 1, W, C),
                       lambda n, r: (n, jnp.maximum(r * TH - 1, 0), 0, chan_block))
    bot = pl.BlockSpec((1, 1, W, C),
                       lambda n, r: (n, jnp.minimum(r * TH + TH, H - 1), 0, chan_block))
    return [body, top, bot]


def conv3x3(x_nhwc, w9, b, *, act="none", residual=None, out_dtype=jnp.float32, row_tile=None):
    """Row-tiled 3x3 'same' conv (per-tap MXU accumulation).  x: (N,H,W,Cin) (cast bf16, Cin a
    multiple of 128), w9: (9*Cin,Cout) bf16, b: (Cout,) f32, residual: optional (N,H,W,Cout) f32
    added to the conv output (act must be 'none').  Returns (N,H,W,Cout) of out_dtype."""
    x_bf = x_nhwc.astype(jnp.bfloat16)
    N, H, W, Cin = x_bf.shape
    Cout = w9.shape[-1]
    assert w9.shape[0] == 9 * Cin
    if residual is not None:
        assert act == "none"
    out_b = 2 if out_dtype == jnp.bfloat16 else 4

    fixed = 2 * 9 * Cin * Cout * 2 + 2 * (W + 2) * Cin * 2            # weights + halo rows
    per_row = W * (2 * Cin * 2 + Cin * 2 + 2 * Cout * out_b + Cout * 4
                   + (2 * Cout * 4 if residual is not None else 0))
    TH = _pick_row_tile(H, per_row, fixed, row_tile)
    nR = H // TH

    in_specs = _row_specs(TH, W, Cin, H) + [_const_spec((9 * Cin, Cout)), _const_spec((1, Cout))]
    inputs = [x_bf, x_bf, x_bf, w9, b.reshape(1, Cout).astype(jnp.float32)]
    if residual is not None:
        in_specs.append(pl.BlockSpec((1, TH, W, Cout), lambda n, r: (n, r, 0, 0)))
        inputs.append(residual.astype(jnp.float32))
        kernel = functools.partial(_conv3x3_res_kernel, TH=TH, W=W, act=act)
    else:
        kernel = functools.partial(_conv3x3_kernel, TH=TH, W=W, act=act)

    return pl.pallas_call(
        kernel,
        out_shape=jax.ShapeDtypeStruct((N, H, W, Cout), out_dtype),
        grid=(N, nR),
        in_specs=in_specs,
        out_specs=pl.BlockSpec((1, TH, W, Cout), lambda n, r: (n, r, 0, 0)),
        scratch_shapes=[pltpu.VMEM((TH + 2, W + 2, Cin), jnp.bfloat16)],
        compiler_params=pltpu.CompilerParams(
            dimension_semantics=("parallel", "parallel"),
            vmem_limit_bytes=_VMEM_LIMIT),
    )(*inputs)


def instance_stats(x_nhwc, *, eps=1e-5, row_tile=None):
    """out[n,0,c] = mean, out[n,1,c] = rstd of x[n,:,:,c] (biased variance, eps=1e-5)."""
    x = x_nhwc.astype(jnp.float32)
    N, H, W, C = x.shape
    TH = _pick_row_tile(H, 2 * W * C * 4, 4 * C * 4, row_tile)
    nR = H // TH
    return pl.pallas_call(
        functools.partial(_stats_kernel, HW=H * W, eps=eps),
        out_shape=jax.ShapeDtypeStruct((N, 2, C), jnp.float32),
        grid=(N, nR),
        in_specs=[pl.BlockSpec((1, TH, W, C), lambda n, r: (n, r, 0, 0))],
        out_specs=pl.BlockSpec((1, 2, C), lambda n, r: (n, 0, 0)),
        scratch_shapes=[pltpu.VMEM((1, C), jnp.float32), pltpu.VMEM((1, C), jnp.float32)],
        compiler_params=pltpu.CompilerParams(
            dimension_semantics=("parallel", "arbitrary"),
            vmem_limit_bytes=_VMEM_LIMIT),
    )(x)


def spade_tail(x_nhwc, stats, actv_all, spade_idx, wgb, bgb, *, nh, leaky,
               shortcut=None, row_tile=None):
    """Fused SPADE tail on row tiles: merged gamma/beta 3x3 conv from this SPADE's chunk of the
    shared actv tensor + instance-norm apply (precomputed mean/rstd) + modulation (+ leaky_relu).
    If shortcut=(idx_s, wgb_s, bgb_s, w_s), the norm_s SPADE and its 1x1 conv_s are fused into the
    same pass and (h, x_s) is returned; otherwise h.  h is emitted as bf16 (MXU-input-only)."""
    x = x_nhwc.astype(jnp.float32)
    actv = actv_all.astype(jnp.bfloat16)
    N, H, W, C = x.shape
    NH = nh
    n_act = 2 if shortcut is not None else 1
    Fout = shortcut[3].shape[-1] if shortcut is not None else 0

    fixed = 2 * n_act * 9 * NH * 2 * C * 2 + 2 * (W + 2) * NH * 2 + 4 * C * 4
    per_row = W * (2 * C * 4 + n_act * 2 * NH * 2 + NH * 2 + 2 * C * 2 + 4 * C * 4
                   + (2 * Fout * 4 if shortcut is not None else 0))
    TH = _pick_row_tile(H, per_row, fixed, row_tile)
    nR = H // TH

    st_spec = pl.BlockSpec((1, 2, C), lambda n, r: (n, 0, 0))
    in_specs = ([pl.BlockSpec((1, TH, W, C), lambda n, r: (n, r, 0, 0)), st_spec]
                + _row_specs(TH, W, NH, H, chan_block=int(spade_idx)))
    inputs = [x, stats, actv, actv, actv]

    h_shape = jax.ShapeDtypeStruct((N, H, W, C), jnp.bfloat16)
    h_spec = pl.BlockSpec((1, TH, W, C), lambda n, r: (n, r, 0, 0))
    scratch = [pltpu.VMEM((TH + 2, W + 2, NH), jnp.bfloat16)]
    cp = pltpu.CompilerParams(dimension_semantics=("parallel", "parallel"),
                              vmem_limit_bytes=_VMEM_LIMIT)

    if shortcut is None:
        in_specs += [_const_spec((9 * NH, 2 * C)), _const_spec((1, 2 * C))]
        inputs += [wgb, bgb.reshape(1, 2 * C).astype(jnp.float32)]
        return pl.pallas_call(
            functools.partial(_spade_single_kernel, TH=TH, W=W, C=C, leaky=leaky),
            out_shape=h_shape, grid=(N, nR),
            in_specs=in_specs, out_specs=h_spec,
            scratch_shapes=scratch, compiler_params=cp,
        )(*inputs)

    idx_s, wgb_s, bgb_s, w_s = shortcut
    in_specs += _row_specs(TH, W, NH, H, chan_block=int(idx_s))
    in_specs += [_const_spec((9 * NH, 2 * C)), _const_spec((1, 2 * C)),
                 _const_spec((9 * NH, 2 * C)), _const_spec((1, 2 * C)),
                 _const_spec((C, Fout))]
    inputs += [actv, actv, actv,
               wgb, bgb.reshape(1, 2 * C).astype(jnp.float32),
               wgb_s, bgb_s.reshape(1, 2 * C).astype(jnp.float32), w_s]
    xs_shape = jax.ShapeDtypeStruct((N, H, W, Fout), jnp.float32)
    xs_spec = pl.BlockSpec((1, TH, W, Fout), lambda n, r: (n, r, 0, 0))
    return pl.pallas_call(
        functools.partial(_spade_dual_kernel, TH=TH, W=W, C=C),
        out_shape=(h_shape, xs_shape), grid=(N, nR),
        in_specs=in_specs, out_specs=(h_spec, xs_spec),
        scratch_shapes=scratch, compiler_params=cp,
    )(*inputs)


# ------------------------------------------------------------------------------------------------
# SPADEResnetBlock forward (glue around the kernels)
# ------------------------------------------------------------------------------------------------

def nearest_resize_nhwc(seg, out_h, out_w):
    # F.interpolate(mode='nearest') equivalent (host-side indexing glue, not a kernel).
    N, H, W, C = seg.shape
    if (H, W) == (out_h, out_w):
        return seg
    hi = (jnp.arange(out_h) * H) // out_h
    wi = (jnp.arange(out_w) * W) // out_w
    return seg[:, hi][:, :, wi]


def spade_resnet_block_forward(x_nchw, seg_nchw, kp, fin, fout, *, row_tile=None):
    """Returns (out_nchw, attn_list), matching SPADEResnetBlock.forward (opt.spade_attn=False)."""
    learned = kp["learned_shortcut"]
    x = jnp.transpose(x_nchw, (0, 2, 3, 1)).astype(jnp.float32)        # NCHW -> NHWC
    seg = jnp.transpose(seg_nchw, (0, 2, 3, 1)).astype(jnp.float32)
    _, H, W, _ = x.shape

    # one-time lane-dense channel padding (exact: padded channels stay identically zero)
    x_p = _pad_axis(x, 3, kp["fin_pad"])
    seg_p = _pad_axis(nearest_resize_nhwc(seg, H, W), 3, kp["cond_pad"]).astype(jnp.bfloat16)

    # merged mlp_shared conv of every SPADE layer (+ fused ReLU); bf16 (MXU-input-only tensor)
    actv_all = conv3x3(seg_p, kp["w_shared"], kp["b_shared"], act="relu",
                       out_dtype=jnp.bfloat16, row_tile=row_tile)

    x_stats = instance_stats(x_p, row_tile=row_tile)                   # hoisted instance-norm stats
    idx = kp["spade_index"]

    if learned:
        # norm_0 + norm_s + conv_s fused: x/stats read once -> h0 (bf16) and x_s (f32)
        h0, x_s = spade_tail(x_p, x_stats, actv_all, idx["norm_0"], kp["wgb_0"], kp["bgb_0"],
                             nh=kp["nh_pad"], leaky=True, row_tile=row_tile,
                             shortcut=(idx["norm_s"], kp["wgb_s"], kp["bgb_s"], kp["w_s"]))
    else:
        h0 = spade_tail(x_p, x_stats, actv_all, idx["norm_0"], kp["wgb_0"], kp["bgb_0"],
                        nh=kp["nh_pad"], leaky=True, row_tile=row_tile)
        x_s = x_p                                                      # identity shortcut

    dx = conv3x3(h0, kp["w0"], kp["b0"], out_dtype=jnp.float32, row_tile=row_tile)       # conv_0
    dx_stats = instance_stats(dx, row_tile=row_tile)
    h1 = spade_tail(dx, dx_stats, actv_all, idx["norm_1"], kp["wgb_1"], kp["bgb_1"],
                    nh=kp["nh_pad"], leaky=True, row_tile=row_tile)
    out_p = conv3x3(h1, kp["w1"], kp["b1"], residual=x_s,
                    out_dtype=jnp.float32, row_tile=row_tile)          # conv_1 + fused residual

    out = out_p[..., :fout]                                            # drop channel padding
    return jnp.transpose(out, (0, 3, 1, 2)), []                        # opt.spade_attn == False


# ------------------------------------------------------------------------------------------------
# Deterministic parameter init (PyTorch-like shapes) + kernel-ready packing
# ------------------------------------------------------------------------------------------------

def _init_conv(key, kh, kw, cin, cout, bias=True, scale=0.1):
    k1, k2 = jax.random.split(key)
    w = scale * jax.random.normal(k1, (kh, kw, cin, cout), jnp.float32)   # HWIO
    b = scale * jax.random.normal(k2, (cout,), jnp.float32) if bias else None
    return w, b


def _init_spade(key, norm_nc, cond_nc, nhidden):
    ks = jax.random.split(key, 3)
    w_sh, b_sh = _init_conv(ks[0], 3, 3, cond_nc, nhidden)
    w_g, b_g = _init_conv(ks[1], 3, 3, nhidden, norm_nc)
    w_b, b_b = _init_conv(ks[2], 3, 3, nhidden, norm_nc)
    return dict(w_shared=w_sh, b_shared=b_sh, w_gamma=w_g, b_gamma=b_g, w_beta=w_b, b_beta=b_b)


def init_block_params(key, fin, fout, cond_nc, nhidden):
    fmid = min(fin, fout)
    ks = jax.random.split(key, 6)
    p = {"norm_0": _init_spade(ks[0], fin, cond_nc, nhidden),
         "norm_1": _init_spade(ks[1], fmid, cond_nc, nhidden)}
    p["w0"], p["b0"] = _init_conv(ks[2], 3, 3, fin, fmid)                 # conv_0
    p["w1"], p["b1"] = _init_conv(ks[3], 3, 3, fmid, fout)                # conv_1
    if fin != fout:
        p["norm_s"] = _init_spade(ks[4], fin, cond_nc, nhidden)
        p["w_s"], _ = _init_conv(ks[5], 1, 1, fin, fout, bias=False)      # conv_s (1x1, no bias)
    return p


def prepare_kernel_params(p, fin, fout, cond_nc, nhidden):
    """Pack raw HWIO/f32 params into lane-padded, merged, bf16 MXU-ready tensors."""
    fmid = min(fin, fout)
    fin_p, fmid_p, fout_p = _round_up(fin), _round_up(fmid), _round_up(fout)
    cond_p, nh_p = _round_up(cond_nc), _round_up(nhidden)
    learned = fin != fout
    order = ["norm_0", "norm_1"] + (["norm_s"] if learned else [])

    kp = dict(fin_pad=fin_p, fmid_pad=fmid_p, fout_pad=fout_p, cond_pad=cond_p, nh_pad=nh_p,
              learned_shortcut=learned, spade_index={name: i for i, name in enumerate(order)})

    # merged mlp_shared conv over the shared resized seg (Cout = n_spades * nhidden)
    w_sh = jnp.concatenate(
        [_pad_axis(_pad_axis(p[k]["w_shared"], 2, cond_p), 3, nh_p) for k in order], axis=3)
    b_sh = jnp.concatenate([_pad_axis(p[k]["b_shared"], 0, nh_p) for k in order], axis=0)
    kp["w_shared"] = w_sh.reshape(9 * cond_p, len(order) * nh_p).astype(jnp.bfloat16)
    kp["b_shared"] = b_sh.astype(jnp.float32)

    def pack_gamma_beta(sp, c_pad):                       # merge mlp_gamma + mlp_beta along Cout
        wg = _pad_axis(_pad_axis(sp["w_gamma"], 2, nh_p), 3, c_pad)
        wb = _pad_axis(_pad_axis(sp["w_beta"], 2, nh_p), 3, c_pad)
        w = jnp.concatenate([wg, wb], axis=3).reshape(9 * nh_p, 2 * c_pad).astype(jnp.bfloat16)
        b = jnp.concatenate([_pad_axis(sp["b_gamma"], 0, c_pad),
                             _pad_axis(sp["b_beta"], 0, c_pad)], axis=0).astype(jnp.float32)
        return w, b

    kp["wgb_0"], kp["bgb_0"] = pack_gamma_beta(p["norm_0"], fin_p)
    kp["wgb_1"], kp["bgb_1"] = pack_gamma_beta(p["norm_1"], fmid_p)

    kp["w0"] = _pad_axis(_pad_axis(p["w0"], 2, fin_p), 3, fmid_p
                         ).reshape(9 * fin_p, fmid_p).astype(jnp.bfloat16)
    kp["b0"] = _pad_axis(p["b0"], 0, fmid_p).astype(jnp.float32)
    kp["w1"] = _pad_axis(_pad_axis(p["w1"], 2, fmid_p), 3, fout_p
                         ).reshape(9 * fmid_p, fout_p).astype(jnp.bfloat16)
    kp["b1"] = _pad_axis(p["b1"], 0, fout_p).astype(jnp.float32)

    if learned:
        kp["wgb_s"], kp["bgb_s"] = pack_gamma_beta(p["norm_s"], fin_p)
        w_s = p["w_s"].reshape(fin, fout)
        kp["w_s"] = _pad_axis(_pad_axis(w_s, 0, fin_p), 1, fout_p).astype(jnp.bfloat16)
    return kp


# ------------------------------------------------------------------------------------------------
# Pure-JAX float32 reference (mirrors the PyTorch module) for the in-script sanity check
# ------------------------------------------------------------------------------------------------

def _conv2d_ref(x, w, b=None):
    y = jax.lax.conv_general_dilated(x, w, window_strides=(1, 1), padding="SAME",
                                     dimension_numbers=("NHWC", "HWIO", "NHWC"),
                                     precision=jax.lax.Precision.HIGHEST)
    return y if b is None else y + b


def _spade_ref(x, seg, sp, eps=1e-5):
    mean = jnp.mean(x, axis=(1, 2), keepdims=True)
    var = jnp.var(x, axis=(1, 2), keepdims=True)
    normalized = (x - mean) / jnp.sqrt(var + eps)
    actv = jax.nn.relu(_conv2d_ref(seg, sp["w_shared"], sp["b_shared"]))
    gamma = _conv2d_ref(actv, sp["w_gamma"], sp["b_gamma"])
    beta = _conv2d_ref(actv, sp["w_beta"], sp["b_beta"])
    return normalized * (1.0 + gamma) + beta


def spade_resnet_block_ref(x_nchw, seg_nchw, p, fin, fout):
    x = jnp.transpose(x_nchw, (0, 2, 3, 1)).astype(jnp.float32)
    seg = jnp.transpose(seg_nchw, (0, 2, 3, 1)).astype(jnp.float32)
    seg = nearest_resize_nhwc(seg, x.shape[1], x.shape[2])
    lrelu = lambda t: jnp.where(t >= 0.0, t, 0.2 * t)
    if fin != fout:
        x_s = _conv2d_ref(_spade_ref(x, seg, p["norm_s"]), p["w_s"])
    else:
        x_s = x
    dx = _conv2d_ref(lrelu(_spade_ref(x, seg, p["norm_0"])), p["w0"], p["b0"])
    dx = _conv2d_ref(lrelu(_spade_ref(dx, seg, p["norm_1"])), p["w1"], p["b1"])
    return jnp.transpose(x_s + dx, (0, 3, 1, 2))


# ------------------------------------------------------------------------------------------------

if __name__ == "__main__":
    N, fin, fout, H, W = 2, 4, 8, 16, 16           # fin != fout -> learned shortcut exercised
    cond_nc = 5                                     # spade_condi_nc (seg-map channels)
    nhidden = 128                                   # SPADE MLP hidden width

    root = jax.random.PRNGKey(0)
    kx, kseg, kparam = jax.random.split(root, 3)
    x_nchw = jax.random.normal(kx, (N, fin, H, W), jnp.float32)
    seg_nchw = jax.random.normal(kseg, (N, cond_nc, H, W), jnp.float32)

    raw_params = init_block_params(kparam, fin, fout, cond_nc, nhidden)
    kparams = prepare_kernel_params(raw_params, fin, fout, cond_nc, nhidden)

    # row_tile=8 -> two row tiles per image: exercises the halo exchange and the row-tiled
    # instance-norm stats accumulation even at the small demo size.
    out, attn_list = spade_resnet_block_forward(x_nchw, seg_nchw, kparams, fin, fout, row_tile=8)
    out = jax.block_until_ready(out)

    assert out.shape == (N, fout, H, W), out.shape
    assert attn_list == []
    assert bool(jnp.all(jnp.isfinite(out)))

    # sanity check vs. a pure-JAX float32 reference (kernels use bf16 MXU operands -> tolerance)
    ref = spade_resnet_block_ref(x_nchw, seg_nchw, raw_params, fin, fout)
    err = float(jnp.max(jnp.abs(out - ref)))
    scale = float(jnp.max(jnp.abs(ref)))
    assert err <= 0.05 * max(scale, 1.0), (err, scale)

    print("KERNEL_OK")
</pallas_src>

<mosaic_0001>
module attributes {stable_mosaic.version = 11 : i64} {
  func.func @_conv3x3_kernel(%arg0: i32, %arg1: i32, %arg2: memref<1x8x16x128xbf16, #tpu.memory_space<vmem>>, %arg3: memref<1x1x16x128xbf16, #tpu.memory_space<vmem>>, %arg4: memref<1x1x16x128xbf16, #tpu.memory_space<vmem>>, %arg5: memref<1152x384xbf16, #tpu.memory_space<vmem>>, %arg6: memref<1x384xf32, #tpu.memory_space<vmem>>, %arg7: memref<1x8x16x384xbf16, #tpu.memory_space<vmem>>, %arg8: memref<10x18x128xbf16, #tpu.memory_space<vmem>>) attributes {dimension_semantics = [#tpu.dimension_semantics<parallel>, #tpu.dimension_semantics<parallel>], iteration_bounds = array<i64: 2, 2>, scalar_prefetch = 0 : i64, scratch_operands = 1 : i64, tpu.core_type = #tpu.core_type<tc>, window_params = [{transform_indices = @transform_0, window_bounds = array<i64: 1, 8, 16, 128>}, {transform_indices = @transform_1, window_bounds = array<i64: 1, 1, 16, 128>}, {transform_indices = @transform_2, window_bounds = array<i64: 1, 1, 16, 128>}, {pipeline_mode = #tpu.pipeline_mode<synchronous>, transform_indices = @transform_3, window_bounds = array<i64: 1152, 384>}, {pipeline_mode = #tpu.pipeline_mode<synchronous>, transform_indices = @transform_4, window_bounds = array<i64: 1, 384>}, {transform_indices = @transform_5, window_bounds = array<i64: 1, 8, 16, 384>}]} {
    %cst = arith.constant 0.000000e+00 : bf16
    %0 = vector.broadcast %cst : bf16 to vector<10x1x128xbf16>
    %c0 = arith.constant 0 : index
    %c0_0 = arith.constant 0 : index
    %c0_1 = arith.constant 0 : index
    %1 = vector.load %arg8[%c0, %c0_0, %c0_1] : memref<10x18x128xbf16, #tpu.memory_space<vmem>>, vector<10x1x128xbf16>
    tpu.vector_store %arg8[%c0, %c0_0, %c0_1], %0 {strides = array<i32>} : memref<10x18x128xbf16, #tpu.memory_space<vmem>>, vector<10x1x128xbf16>,
    %c0_2 = arith.constant 0 : index
    %c17 = arith.constant 17 : index
    %c0_3 = arith.constant 0 : index
    %2 = vector.load %arg8[%c0_2, %c17, %c0_3] : memref<10x18x128xbf16, #tpu.memory_space<vmem>>, vector<10x1x128xbf16>
    tpu.vector_store %arg8[%c0_2, %c17, %c0_3], %0 {strides = array<i32>} : memref<10x18x128xbf16, #tpu.memory_space<vmem>>, vector<10x1x128xbf16>,
    %cst_4 = arith.constant 0.000000e+00 : bf16
    %3 = vector.broadcast %cst_4 : bf16 to vector<1x16x128xbf16>
    %c0_5 = arith.constant 0 : index
    %c0_6 = arith.constant 0 : index
    %c0_7 = arith.constant 0 : index
    %c0_8 = arith.constant 0 : index
    %4 = vector.load %arg3[%c0_5, %c0_6, %c0_7, %c0_8] : memref<1x1x16x128xbf16, #tpu.memory_space<vmem>>, vector<1x1x16x128xbf16>
    %5 = vector.shape_cast %4 : vector<1x1x16x128xbf16> to vector<1x16x128xbf16>
    %c0_9 = arith.constant 0 : index
    %c0_10 = arith.constant 0 : index
    %c0_11 = arith.constant 0 : index
    %c0_12 = arith.constant 0 : index
    %6 = vector.load %arg4[%c0_9, %c0_10, %c0_11, %c0_12] : memref<1x1x16x128xbf16, #tpu.memory_space<vmem>>, vector<1x1x16x128xbf16>
    %7 = vector.shape_cast %6 : vector<1x1x16x128xbf16> to vector<1x16x128xbf16>
    %c0_i32 = arith.constant 0 : i32
    %8 = arith.cmpi sgt, %arg1, %c0_i32 : i32
    %9 = arith.select %8, %5, %3 : vector<1x16x128xbf16>
    %c0_13 = arith.constant 0 : index
    %c1 = arith.constant 1 : index
    %c0_14 = arith.constant 0 : index
    %10 = vector.load %arg8[%c0_13, %c1, %c0_14] : memref<10x18x128xbf16, #tpu.memory_space<vmem>>, vector<1x16x128xbf16>
    tpu.vector_store %arg8[%c0_13, %c1, %c0_14], %9 {strides = array<i32>} : memref<10x18x128xbf16, #tpu.memory_space<vmem>>, vector<1x16x128xbf16>,
    %c1_i32 = arith.constant 1 : i32
    %11 = arith.cmpi slt, %arg1, %c1_i32 : i32
    %12 = arith.select %11, %7, %3 : vector<1x16x128xbf16>
    %c9 = arith.constant 9 : index
    %c1_15 = arith.constant 1 : index
    %c0_16 = arith.constant 0 : index
    %13 = vector.load %arg8[%c9, %c1_15, %c0_16] : memref<10x18x128xbf16, #tpu.memory_space<vmem>>, vector<1x16x128xbf16>
    tpu.vector_store %arg8[%c9, %c1_15, %c0_16], %12 {strides = array<i32>} : memref<10x18x128xbf16, #tpu.memory_space<vmem>>, vector<1x16x128xbf16>,
    %c0_17 = arith.constant 0 : index
    %c0_18 = arith.constant 0 : index
    %c0_19 = arith.constant 0 : index
    %c0_20 = arith.constant 0 : index
    %14 = vector.load %arg2[%c0_17, %c0_18, %c0_19, %c0_20] : memref<1x8x16x128xbf16, #tpu.memory_space<vmem>>, vector<1x8x16x128xbf16>
    %15 = vector.shape_cast %14 : vector<1x8x16x128xbf16> to vector<8x16x128xbf16>
    %c1_21 = arith.constant 1 : index
    %c1_22 = arith.constant 1 : index
    %c0_23 = arith.constant 0 : index
    %16 = vector.load %arg8[%c1_21, %c1_22, %c0_23] : memref<10x18x128xbf16, #tpu.memory_space<vmem>>, vector<8x16x128xbf16>
    tpu.vector_store %arg8[%c1_21, %c1_22, %c0_23], %15 {strides = array<i32>} : memref<10x18x128xbf16, #tpu.memory_space<vmem>>, vector<8x16x128xbf16>,
    %c0_24 = arith.constant 0 : index
    %c0_25 = arith.constant 0 : index
    %c0_26 = arith.constant 0 : index
    %17 = vector.load %arg8[%c0_24, %c0_25, %c0_26] : memref<10x18x128xbf16, #tpu.memory_space<vmem>>, vector<8x16x128xbf16>
    %18 = vector.shape_cast %17 : vector<8x16x128xbf16> to vector<128x128xbf16>
    %c0_27 = arith.constant 0 : index
    %c0_28 = arith.constant 0 : index
    %19 = vector.load %arg5[%c0_27, %c0_28] : memref<1152x384xbf16, #tpu.memory_space<vmem>>, vector<128x384xbf16>
    %cst_29 = arith.constant dense<0.000000e+00> : vector<128x384xf32>
    %20 = tpu.matmul %18, %19, %cst_29 {dimension_numbers = #tpu.dot_dimension_numbers<[1], [0], [0], [1], [0, 0, 1, 1], [], []>} : vector<128x128xbf16>, vector<128x384xbf16>, vector<128x384xf32> -> vector<128x384xf32>
    %c0_30 = arith.constant 0 : index
    %c1_31 = arith.constant 1 : index
    %c0_32 = arith.constant 0 : index
    %21 = vector.load %arg8[%c0_30, %c1_31, %c0_32] : memref<10x18x128xbf16, #tpu.memory_space<vmem>>, vector<8x16x128xbf16>
    %22 = vector.shape_cast %21 : vector<8x16x128xbf16> to vector<128x128xbf16>
    %c128 = arith.constant 128 : index
    %c0_33 = arith.constant 0 : index
    %23 = vector.load %arg5[%c128, %c0_33] : memref<1152x384xbf16, #tpu.memory_space<vmem>>, vector<128x384xbf16>
    %cst_34 = arith.constant dense<0.000000e+00> : vector<128x384xf32>
    %24 = tpu.matmul %22, %23, %cst_34 {dimension_numbers = #tpu.dot_dimension_numbers<[1], [0], [0], [1], [0, 0, 1, 1], [], []>} : vector<128x128xbf16>, vector<128x384xbf16>, vector<128x384xf32> -> vector<128x384xf32>
    %25 = arith.addf %20, %24 : vector<128x384xf32>
    %c0_35 = arith.constant 0 : index
    %c2 = arith.constant 2 : index
    %c0_36 = arith.constant 0 : index
    %26 = vector.load %arg8[%c0_35, %c2, %c0_36] : memref<10x18x128xbf16, #tpu.memory_space<vmem>>, vector<8x16x128xbf16>
    %27 = vector.shape_cast %26 : vector<8x16x128xbf16> to vector<128x128xbf16>
    %c256 = arith.constant 256 : index
    %c0_37 = arith.constant 0 : index
    %28 = vector.load %arg5[%c256, %c0_37] : memref<1152x384xbf16, #tpu.memory_space<vmem>>, vector<128x384xbf16>
    %cst_38 = arith.constant dense<0.000000e+00> : vector<128x384xf32>
    %29 = tpu.matmul %27, %28, %cst_38 {dimension_numbers = #tpu.dot_dimension_numbers<[1], [0], [0], [1], [0, 0, 1, 1], [], []>} : vector<128x128xbf16>, vector<128x384xbf16>, vector<128x384xf32> -> vector<128x384xf32>
    %30 = arith.addf %25, %29 : vector<128x384xf32>
    %c1_39 = arith.constant 1 : index
    %c0_40 = arith.constant 0 : index
    %c0_41 = arith.constant 0 : index
    %31 = vector.load %arg8[%c1_39, %c0_40, %c0_41] : memref<10x18x128xbf16, #tpu.memory_space<vmem>>, vector<8x16x128xbf16>
    %32 = vector.shape_cast %31 : vector<8x16x128xbf16> to vector<128x128xbf16>
    %c384 = arith.constant 384 : index
    %c0_42 = arith.constant 0 : index
    %33 = vector.load %arg5[%c384, %c0_42] : memref<1152x384xbf16, #tpu.memory_space<vmem>>, vector<128x384xbf16>
    %cst_43 = arith.constant dense<0.000000e+00> : vector<128x384xf32>
    %34 = tpu.matmul %32, %33, %cst_43 {dimension_numbers = #tpu.dot_dimension_numbers<[1], [0], [0], [1], [0, 0, 1, 1], [], []>} : vector<128x128xbf16>, vector<128x384xbf16>, vector<128x384xf32> -> vector<128x384xf32>
    %35 = arith.addf %30, %34 : vector<128x384xf32>
    %c1_44 = arith.constant 1 : index
    %c1_45 = arith.constant 1 : index
    %c0_46 = arith.constant 0 : index
    %36 = vector.load %arg8[%c1_44, %c1_45, %c0_46] : memref<10x18x128xbf16, #tpu.memory_space<vmem>>, vector<8x16x128xbf16>
    %37 = vector.shape_cast %36 : vector<8x16x128xbf16> to vector<128x128xbf16>
    %c512 = arith.constant 512 : index
    %c0_47 = arith.constant 0 : index
    %38 = vector.load %arg5[%c512, %c0_47] : memref<1152x384xbf16, #tpu.memory_space<vmem>>, vector<128x384xbf16>
    %cst_48 = arith.constant dense<0.000000e+00> : vector<128x384xf32>
    %39 = tpu.matmul %37, %38, %cst_48 {dimension_numbers = #tpu.dot_dimension_numbers<[1], [0], [0], [1], [0, 0, 1, 1], [], []>} : vector<128x128xbf16>, vector<128x384xbf16>, vector<128x384xf32> -> vector<128x384xf32>
    %40 = arith.addf %35, %39 : vector<128x384xf32>
    %c1_49 = arith.constant 1 : index
    %c2_50 = arith.constant 2 : index
    %c0_51 = arith.constant 0 : index
    %41 = vector.load %arg8[%c1_49, %c2_50, %c0_51] : memref<10x18x128xbf16, #tpu.memory_space<vmem>>, vector<8x16x128xbf16>
    %42 = vector.shape_cast %41 : vector<8x16x128xbf16> to vector<128x128xbf16>
    %c640 = arith.constant 640 : index
    %c0_52 = arith.constant 0 : index
    %43 = vector.load %arg5[%c640, %c0_52] : memref<1152x384xbf16, #tpu.memory_space<vmem>>, vector<128x384xbf16>
    %cst_53 = arith.constant dense<0.000000e+00> : vector<128x384xf32>
    %44 = tpu.matmul %42, %43, %cst_53 {dimension_numbers = #tpu.dot_dimension_numbers<[1], [0], [0], [1], [0, 0, 1, 1], [], []>} : vector<128x128xbf16>, vector<128x384xbf16>, vector<128x384xf32> -> vector<128x384xf32>
    %45 = arith.addf %40, %44 : vector<128x384xf32>
    %c2_54 = arith.constant 2 : index
    %c0_55 = arith.constant 0 : index
    %c0_56 = arith.constant 0 : index
    %46 = vector.load %arg8[%c2_54, %c0_55, %c0_56] : memref<10x18x128xbf16, #tpu.memory_space<vmem>>, vector<8x16x128xbf16>
    %47 = vector.shape_cast %46 : vector<8x16x128xbf16> to vector<128x128xbf16>
    %c768 = arith.constant 768 : index
    %c0_57 = arith.constant 0 : index
    %48 = vector.load %arg5[%c768, %c0_57] : memref<1152x384xbf16, #tpu.memory_space<vmem>>, vector<128x384xbf16>
    %cst_58 = arith.constant dense<0.000000e+00> : vector<128x384xf32>
    %49 = tpu.matmul %47, %48, %cst_58 {dimension_numbers = #tpu.dot_dimension_numbers<[1], [0], [0], [1], [0, 0, 1, 1], [], []>} : vector<128x128xbf16>, vector<128x384xbf16>, vector<128x384xf32> -> vector<128x384xf32>
    %50 = arith.addf %45, %49 : vector<128x384xf32>
    %c2_59 = arith.constant 2 : index
    %c1_60 = arith.constant 1 : index
    %c0_61 = arith.constant 0 : index
    %51 = vector.load %arg8[%c2_59, %c1_60, %c0_61] : memref<10x18x128xbf16, #tpu.memory_space<vmem>>, vector<8x16x128xbf16>
    %52 = vector.shape_cast %51 : vector<8x16x128xbf16> to vector<128x128xbf16>
    %c896 = arith.constant 896 : index
    %c0_62 = arith.constant 0 : index
    %53 = vector.load %arg5[%c896, %c0_62] : memref<1152x384xbf16, #tpu.memory_space<vmem>>, vector<128x384xbf16>
    %cst_63 = arith.constant dense<0.000000e+00> : vector<128x384xf32>
    %54 = tpu.matmul %52, %53, %cst_63 {dimension_numbers = #tpu.dot_dimension_numbers<[1], [0], [0], [1], [0, 0, 1, 1], [], []>} : vector<128x128xbf16>, vector<128x384xbf16>, vector<128x384xf32> -> vector<128x384xf32>
    %55 = arith.addf %50, %54 : vector<128x384xf32>
    %c2_64 = arith.constant 2 : index
    %c2_65 = arith.constant 2 : index
    %c0_66 = arith.constant 0 : index
    %56 = vector.load %arg8[%c2_64, %c2_65, %c0_66] : memref<10x18x128xbf16, #tpu.memory_space<vmem>>, vector<8x16x128xbf16>
    %57 = vector.shape_cast %56 : vector<8x16x128xbf16> to vector<128x128xbf16>
    %c1024 = arith.constant 1024 : index
    %c0_67 = arith.constant 0 : index
    %58 = vector.load %arg5[%c1024, %c0_67] : memref<1152x384xbf16, #tpu.memory_space<vmem>>, vector<128x384xbf16>
    %cst_68 = arith.constant dense<0.000000e+00> : vector<128x384xf32>
    %59 = tpu.matmul %57, %58, %cst_68 {dimension_numbers = #tpu.dot_dimension_numbers<[1], [0], [0], [1], [0, 0, 1, 1], [], []>} : vector<128x128xbf16>, vector<128x384xbf16>, vector<128x384xf32> -> vector<128x384xf32>
    %60 = arith.addf %55, %59 : vector<128x384xf32>
    %c0_69 = arith.constant 0 : index
    %c0_70 = arith.constant 0 : index
    %61 = vector.load %arg6[%c0_69, %c0_70] : memref<1x384xf32, #tpu.memory_space<vmem>>, vector<1x384xf32>
    %62 = vector.broadcast %61 : vector<1x384xf32> to vector<128x384xf32>
    %63 = arith.addf %60, %62 : vector<128x384xf32>
    %cst_71 = arith.constant 0.000000e+00 : f32
    %64 = vector.broadcast %cst_71 : f32 to vector<128x384xf32>
    %65 = arith.maximumf %63, %64 : vector<128x384xf32>
    %66 = vector.shape_cast %65 : vector<128x384xf32> to vector<1x8x16x384xf32>
    %67 = arith.truncf %66 : vector<1x8x16x384xf32> to vector<1x8x16x384xbf16>
    %c0_72 = arith.constant 0 : index
    %c0_73 = arith.constant 0 : index
    %c0_74 = arith.constant 0 : index
    %c0_75 = arith.constant 0 : index
    %68 = vector.load %arg7[%c0_72, %c0_73, %c0_74, %c0_75] : memref<1x8x16x384xbf16, #tpu.memory_space<vmem>>, vector<1x8x16x384xbf16>
    tpu.vector_store %arg7[%c0_72, %c0_73, %c0_74, %c0_75], %67 {strides = array<i32>} : memref<1x8x16x384xbf16, #tpu.memory_space<vmem>>, vector<1x8x16x384xbf16>,
    return
  }
  func.func @transform_0(%arg0: i32, %arg1: i32) -> (i32, i32, i32, i32) {
    %c0_i32 = arith.constant 0 : i32
    %c0_i32_0 = arith.constant 0 : i32
    %c0_i32_1 = arith.constant 0 : i32
    return %arg0, %arg1, %c0_i32, %c0_i32_0 : i32, i32, i32, i32
  }
  func.func @transform_1(%arg0: i32, %arg1: i32) -> (i32, i32, i32, i32) {
    %c8_i32 = arith.constant 8 : i32
    %0 = arith.muli %arg1, %c8_i32 : i32
    %c1_i32 = arith.constant 1 : i32
    %1 = arith.subi %0, %c1_i32 : i32
    %c0_i32 = arith.constant 0 : i32
    %2 = arith.maxsi %1, %c0_i32 : i32
    %c0_i32_0 = arith.constant 0 : i32
    %c0_i32_1 = arith.constant 0 : i32
    %c0_i32_2 = arith.constant 0 : i32
    return %arg0, %2, %c0_i32_0, %c0_i32_1 : i32, i32, i32, i32
  }
  func.func @transform_2(%arg0: i32, %arg1: i32) -> (i32, i32, i32, i32) {
    %c8_i32 = arith.constant 8 : i32
    %0 = arith.muli %arg1, %c8_i32 : i32
    %c8_i32_0 = arith.constant 8 : i32
    %1 = arith.addi %0, %c8_i32_0 : i32
    %c15_i32 = arith.constant 15 : i32
    %2 = arith.minsi %1, %c15_i32 : i32
    %c0_i32 = arith.constant 0 : i32
    %c0_i32_1 = arith.constant 0 : i32
    %c0_i32_2 = arith.constant 0 : i32
    return %arg0, %2, %c0_i32, %c0_i32_1 : i32, i32, i32, i32
  }
  func.func @transform_3(%arg0: i32, %arg1: i32) -> (i32, i32) {
    %c0_i32 = arith.constant 0 : i32
    %c0_i32_0 = arith.constant 0 : i32
    %c0_i32_1 = arith.constant 0 : i32
    return %c0_i32, %c0_i32_0 : i32, i32
  }
  func.func @transform_4(%arg0: i32, %arg1: i32) -> (i32, i32) {
    %c0_i32 = arith.constant 0 : i32
    %c0_i32_0 = arith.constant 0 : i32
    %c0_i32_1 = arith.constant 0 : i32
    return %c0_i32, %c0_i32_0 : i32, i32
  }
  func.func @transform_5(%arg0: i32, %arg1: i32) -> (i32, i32, i32, i32) {
    %c0_i32 = arith.constant 0 : i32
    %c0_i32_0 = arith.constant 0 : i32
    %c0_i32_1 = arith.constant 0 : i32
    return %arg0, %arg1, %c0_i32, %c0_i32_0 : i32, i32, i32, i32
  }
}

</mosaic_0001>

<llo_original>
// kernel: tpu_custom_call.1
$region0: #{tpu_custom_call.1}
  #allocation0 [shape = 'u32[]', space=smem, size = 0x4, offset = 0x4, fixed_abs, tag = 'smem constant byte address 0x4 - core index']
  #allocation1 [shape = 'u32[144,128]{1,0:T(1,128)}', space=vmem, size = 0x12000, scoped, tag = 'internal scratch']
  #allocation2 [shape = 'bf16[10,18,128]{2,1,0:T(8,128)(2,1)}', space=vmem, size = 0xf000, scoped, tag = 'scratch operand']
  %s0 = inlined_call_operand.hbm [shape: bf16[2,16,16,128], index: 0, kind: input, shape index: {}]
  %s1 = inlined_call_operand.hbm [shape: bf16[2,16,16,128], index: 1, kind: input, shape index: {}]
  %s2 = inlined_call_operand.hbm [shape: bf16[2,16,16,128], index: 2, kind: input, shape index: {}]
  %s3 = inlined_call_operand.hbm [shape: bf16[1152,384], index: 3, kind: input, shape index: {}]
  %s4 = inlined_call_operand.vmem [shape: f32[1,384], index: 4, kind: input, shape index: {}]
  %s5 = inlined_call_operand.hbm [shape: bf16[2,16,16,384], index: 5, kind: output, shape index: {}]
  %s6 = sld [smem:[#allocation0]]
  $region69: #{tpu_custom_call.1} parent=0
    _
  %s8 = ssub.s32 1, %s6
  %s9 = scalar_select 0, %s8, %s6
  $region1: #{tpu_custom_call.1} parent=0
    #allocation3 [shape = 'u8[65536]{0}', space=vmem, size = 0x10000, scoped, tag = 'input window, operand 0']
    #allocation4 [shape = 's32[2]{0}', space=sflag, size = 0x8, scoped, tag = 'scoped memory for tpu_custom_call.1']
    #allocation5 [shape = 's32[2]{0}', space=sflag, size = 0x8, scoped, tag = 'scoped memory for tpu_custom_call.1']
    #allocation6 [shape = 'u8[8192]{0}', space=vmem, size = 0x2000, scoped, tag = 'input window, operand 1']
    #allocation7 [shape = 's32[2]{0}', space=sflag, size = 0x8, scoped, tag = 'scoped memory for tpu_custom_call.1']
    #allocation8 [shape = 'u8[8192]{0}', space=vmem, size = 0x2000, scoped, tag = 'input window, operand 2']
    #allocation9 [shape = 'u8[884736]{0}', space=vmem, size = 0xd8000, scoped, tag = 'input window, operand 3, single buffered']
    #allocation10 [shape = 's32[1]{0}', space=sflag, size = 0x4, scoped, tag = 'scoped memory for tpu_custom_call.1']
    #allocation11 [shape = 'u8[196608]{0}', space=vmem, size = 0x30000, scoped, tag = 'output window, operand 0']
    %10 = vsyncpa [#allocation4], 0
    %s11 = scalar_lea.sflag [#allocation4], 1
    %12 = vsyncpa %s11, 0
    %13 = vsyncpa [#allocation7], 0
    %s14 = scalar_lea.sflag [#allocation7], 1
    %15 = vsyncpa %s14, 0
    %16 = vsyncpa [#allocation10], 0
    %17 = vsyncpa [#allocation5], 0
    %s18 = scalar_lea.sflag [#allocation5], 1
    %19 = vsyncpa %s18, 0
    loop: start=0, step=1, limit=6
    $region2: #{tpu_custom_call.1} parent=1 // loop_pre_header
      _
    $region3: #{tpu_custom_call.1} parent=1 // loop_header
      %s21 = sphi 0, %s25
      %p22 = scmp.ge.s32.totalorder %s21, 6
      %s28 = sphi 0, %s40
      %s29 = sphi 0, %s36
      %s30 = sphi 0, %s28
      %s31 = sphi 0, %s29
      %s32 = sphi 0, %s30
      %s33 = sphi 0, %s31
      %s45 = sphi 0, %s47
      %s48 = sphi 0, %s45
      %s49 = sphi 0, %s48
      %s65 = sphi 0, %s49
      %s81 = sphi 0, %s83
      %s84 = sphi 0, %s81
      %s85 = sphi 0, %s84
      %s101 = sphi 0, %s85
      %s117 = sphi 0, %s119
      %s120 = sphi 0, %s117
      %s121 = sphi 0, %s120
      %s137 = sphi 0, %s121
      %s141 = sphi 0, %s141
      %s143 = sphi 0, %s141
      %s144 = sphi 0, %s143
      %s158 = sphi 0, %s144
      %s162 = sphi 0, %s162
      %s164 = sphi 0, %s162
      %s165 = sphi 0, %s164
      %s179 = sphi 0, %s165
      %s187 = sphi 0, %s189
      %s190 = sphi 0, %s187
      %s191 = sphi 0, %s190
      %s207 = sphi 0, %s191
    $region4: #{tpu_custom_call.1} parent=1 // loop_header_branch
      %24 = sbr.rel (%p22) target = $region8
    $region5: #{tpu_custom_call.1} parent=1 // loop_body
      %s26 = ssub.s32 %s21, 1
      %s27 = ssub.s32 %s21, 2
      %s34 = sadd.s32 1, %s29
      %p35 = scmp.ge.s32.totalorder %s34, 2
      %s36 = scalar_select %p35, 0, %s34
      %s37 = sadd.s32 1, %s28
      %s38 = scalar_select %p35, %s37, %s28
      %p39 = scmp.ge.s32.totalorder %s38, 2
      %s40 = scalar_select %p39, 0, %s38
      %s41 = ssub.s32 %s28, %s40
      %s42 = ssub.s32 %s29, %s36
      %s43 = sor.u32 %s41, %s42
      %p44 = scmp.eq.s32.totalorder %s43, 0
      %s46 = sadd.s32 %s45, 1
      %s47 = scalar_select %p44, %s45, %s46
      %p50 = pneg %p44
      %p51 = scmp.eq.s32.totalorder %s21, 3
      %p52 = por %p50, %p51
      %p53 = scmp.ne.s32.totalorder %s45, %s48
      %p54 = scmp.eq.s32.totalorder %s21, 0
      %p55 = por %p53, %p54
      %p56 = scmp.ne.s32.totalorder %s45, %s48
      %p57 = scmp.eq.s32.totalorder %s26, 3
      %p58 = por %p56, %p57
      %p59 = scmp.ne.s32.totalorder %s48, %s49
      %p60 = scmp.eq.s32.totalorder %s26, 0
      %p61 = por %p59, %p60
      %p62 = scmp.ne.s32.totalorder %s48, %s49
      %p63 = scmp.eq.s32.totalorder %s27, 3
      %p64 = por %p62, %p63
      %p66 = scmp.ne.s32.totalorder %s49, %s65
      %p67 = scmp.eq.s32.totalorder %s27, 0
      %p68 = por %p66, %p67
      %s69 = smul.u32 %s29, 8
      %s70 = ssub.s32 %s69, 1
      %p71 = scmp.gt.s32.totalorder %s70, 0
      %s72 = scalar_select %p71, %s70, 0
      %s73 = smul.u32 %s36, 8
      %s74 = ssub.s32 %s73, 1
      %p75 = scmp.gt.s32.totalorder %s74, 0
      %s76 = scalar_select %p75, %s74, 0
      %s77 = ssub.s32 %s28, %s40
      %s78 = ssub.s32 %s72, %s76
      %s79 = sor.u32 %s77, %s78
      %p80 = scmp.eq.s32.totalorder %s79, 0
      %s82 = sadd.s32 %s81, 1
      %s83 = scalar_select %p80, %s81, %s82
      %p86 = pneg %p80
      %p87 = scmp.eq.s32.totalorder %s21, 3
      %p88 = por %p86, %p87
      %p89 = scmp.ne.s32.totalorder %s81, %s84
      %p90 = scmp.eq.s32.totalorder %s21, 0
      %p91 = por %p89, %p90
      %p92 = scmp.ne.s32.totalorder %s81, %s84
      %p93 = scmp.eq.s32.totalorder %s26, 3
      %p94 = por %p92, %p93
      %p95 = scmp.ne.s32.totalorder %s84, %s85
      %p96 = scmp.eq.s32.totalorder %s26, 0
      %p97 = por %p95, %p96
      %p98 = scmp.ne.s32.totalorder %s84, %s85
      %p99 = scmp.eq.s32.totalorder %s27, 3
      %p100 = por %p98, %p99
      %p102 = scmp.ne.s32.totalorder %s85, %s101
      %p103 = scmp.eq.s32.totalorder %s27, 0
      %p104 = por %p102, %p103
      %s105 = smul.u32 %s29, 8
      %s106 = sadd.s32 %s105, 8
      %p107 = scmp.lt.s32.totalorder %s106, 15
      %s108 = scalar_select %p107, %s106, 15
      %s109 = smul.u32 %s36, 8
      %s110 = sadd.s32 %s109, 8
      %p111 = scmp.lt.s32.totalorder %s110, 15
      %s112 = scalar_select %p111, %s110, 15
      %s113 = ssub.s32 %s28, %s40
      %s114 = ssub.s32 %s108, %s112
      %s115 = sor.u32 %s113, %s114
      %p116 = scmp.eq.s32.totalorder %s115, 0
      %s118 = sadd.s32 %s117, 1
      %s119 = scalar_select %p116, %s117, %s118
      %p122 = pneg %p116
      %p123 = scmp.eq.s32.totalorder %s21, 3
      %p124 = por %p122, %p123
      %p125 = scmp.ne.s32.totalorder %s117, %s120
      %p126 = scmp.eq.s32.totalorder %s21, 0
      %p127 = por %p125, %p126
      %p128 = scmp.ne.s32.totalorder %s117, %s120
      %p129 = scmp.eq.s32.totalorder %s26, 3
      %p130 = por %p128, %p129
      %p131 = scmp.ne.s32.totalorder %s120, %s121
      %p132 = scmp.eq.s32.totalorder %s26, 0
      %p133 = por %p131, %p132
      %p134 = scmp.ne.s32.totalorder %s120, %s121
      %p135 = scmp.eq.s32.totalorder %s27, 3
      %p136 = por %p134, %p135
      %p138 = scmp.ne.s32.totalorder %s121, %s137
      %p139 = scmp.eq.s32.totalorder %s27, 0
      %p140 = por %p138, %p139
      %s142 = sadd.s32 %s141, 1
      %p145 = scmp.eq.s32.totalorder %s21, 3
      %p146 = scmp.ne.s32.totalorder %s141, %s143
      %p147 = scmp.eq.s32.totalorder %s21, 0
      %p148 = por %p146, %p147
      %p149 = scmp.ne.s32.totalorder %s141, %s143
      %p150 = scmp.eq.s32.totalorder %s26, 3
      %p151 = por %p149, %p150
      %p152 = scmp.ne.s32.totalorder %s143, %s144
      %p153 = scmp.eq.s32.totalorder %s26, 0
      %p154 = por %p152, %p153
      %p155 = scmp.ne.s32.totalorder %s143, %s144
      %p156 = scmp.eq.s32.totalorder %s27, 3
      %p157 = por %p155, %p156
      %p159 = scmp.ne.s32.totalorder %s144, %s158
      %p160 = scmp.eq.s32.totalorder %s27, 0
      %p161 = por %p159, %p160
      %s163 = sadd.s32 %s162, 1
      %p166 = scmp.eq.s32.totalorder %s21, 3
      %p167 = scmp.ne.s32.totalorder %s162, %s164
      %p168 = scmp.eq.s32.totalorder %s21, 0
      %p169 = por %p167, %p168
      %p170 = scmp.ne.s32.totalorder %s162, %s164
      %p171 = scmp.eq.s32.totalorder %s26, 3
      %p172 = por %p170, %p171
      %p173 = scmp.ne.s32.totalorder %s164, %s165
      %p174 = scmp.eq.s32.totalorder %s26, 0
      %p175 = por %p173, %p174
      %p176 = scmp.ne.s32.totalorder %s164, %s165
      %p177 = scmp.eq.s32.totalorder %s27, 3
      %p178 = por %p176, %p177
      %p180 = scmp.ne.s32.totalorder %s165, %s179
      %p181 = scmp.eq.s32.totalorder %s27, 0
      %p182 = por %p180, %p181
      %s183 = ssub.s32 %s28, %s40
      %s184 = ssub.s32 %s29, %s36
      %s185 = sor.u32 %s183, %s184
      %p186 = scmp.eq.s32.totalorder %s185, 0
      %s188 = sadd.s32 %s187, 1
      %s189 = scalar_select %p186, %s187, %s188
      %p192 = pneg %p186
      %p193 = scmp.eq.s32.totalorder %s21, 3
      %p194 = por %p192, %p193
      %p195 = scmp.ne.s32.totalorder %s187, %s190
      %p196 = scmp.eq.s32.totalorder %s21, 0
      %p197 = por %p195, %p196
      %p198 = scmp.ne.s32.totalorder %s187, %s190
      %p199 = scmp.eq.s32.totalorder %s26, 3
      %p200 = por %p198, %p199
      %p201 = scmp.ne.s32.totalorder %s190, %s191
      %p202 = scmp.eq.s32.totalorder %s26, 0
      %p203 = por %p201, %p202
      %p204 = scmp.ne.s32.totalorder %s190, %s191
      %p205 = scmp.eq.s32.totalorder %s27, 3
      %p206 = por %p204, %p205
      %p208 = scmp.ne.s32.totalorder %s191, %s207
      %p209 = scmp.eq.s32.totalorder %s27, 0
      %p210 = por %p208, %p209
      %p211 = scmp.le.s32.totalorder 1, %s21
      %p212 = scmp.lt.s32.totalorder %s21, 5
      %p213 = pnand %p211, %p212
      %p214 = pneg %p213
      // Predicated region
      $region9: #{tpu_custom_call.1} parent=5 // pred_check
        _
      $region10: #{tpu_custom_call.1} parent=5 // pred_check_branch
        %216 = sbr.rel (%p213) target = $region12
      $region11: #{tpu_custom_call.1} parent=5 // pred_region
        %s217 = ssub.s32 %s21, 1
        // Predicated region
        $region13: #{tpu_custom_call.1} parent=11 // pred_check
          %p218 = pneg %p154
        $region14: #{tpu_custom_call.1} parent=11 // pred_check_branch
          %220 = sbr.rel (%p218) target = $region16
        $region15: #{tpu_custom_call.1} parent=11 // pred_region
          %s222 = ssub.s32 27648, 27648
          %223 = vsyncadd [#allocation10], %s222
          %s224 = sshll.u32 [#allocation9], 4
          %s225 = int_to_ptr.vmem [resolvable:$true] %s224
          %230 = dma.hbm_to_vmem [thread:$0]  %s3, 27648, %s225, [#allocation10], 192, 192, 12
        $region16: #{tpu_custom_call.1} parent=11 // pred_fallthru
          _
        // Predicated region
        $region17: #{tpu_custom_call.1} parent=11 // pred_check
          %p231 = pneg %p175
        $region18: #{tpu_custom_call.1} parent=11 // pred_check_branch
          %233 = sbr.rel (%p231) target = $region20
        $region19: #{tpu_custom_call.1} parent=11 // pred_region
          _
        $region20: #{tpu_custom_call.1} parent=11 // pred_fallthru
          _
      $region12: #{tpu_custom_call.1} parent=5 // pred_fallthru
        _
      %p234 = scmp.lt.s32.totalorder %s21, 4
      // Predicated region
      $region21: #{tpu_custom_call.1} parent=5 // pred_check
        %p235 = pneg %p234
      $region22: #{tpu_custom_call.1} parent=5 // pred_check_branch
        %237 = sbr.rel (%p235) target = $region24
      $region23: #{tpu_custom_call.1} parent=5 // pred_region
        // Predicated region
        $region25: #{tpu_custom_call.1} parent=23 // pred_check
          %p238 = pneg %p55
        $region26: #{tpu_custom_call.1} parent=23 // pred_check_branch
          %240 = sbr.rel (%p238) target = $region28
        $region27: #{tpu_custom_call.1} parent=23 // pred_region
          %s241 = sand.u32 %s45, 1
          %s242 = scalar_lea.sflag [#allocation4], %s241
          %s243 = sand.u32 %s45, 1
          %s244 = smul.addr %s243, 64
          %s245 = scalar_lea.vmem [#allocation3], %s244
          %s246 = smul.u32 8, %s29
          %s248 = ssub.s32 1024, 1024
          %249 = vsyncadd %s242, %s248
          %s250 = smul.addr %s246, 2
          %s251 = smul.addr %s28, 32
          %s252 = sadd.s32 %s250, %s251
          %s253 = smul.addr %s252, 64
          %s254 = scalar_lea.hbm %s0, %s253
          %s255 = sshll.u32 %s245, 4
          %s256 = int_to_ptr.vmem [resolvable:$true] %s255
          %261 = dma.hbm_to_vmem [thread:$0]  %s254, 1024, %s256, %s242, 64, 64, 4
        $region28: #{tpu_custom_call.1} parent=23 // pred_fallthru
          _
        // Predicated region
        $region29: #{tpu_custom_call.1} parent=23 // pred_check
          %p262 = pneg %p91
        $region30: #{tpu_custom_call.1} parent=23 // pred_check_branch
          %264 = sbr.rel (%p262) target = $region32
        $region31: #{tpu_custom_call.1} parent=23 // pred_region
          %s265 = sand.u32 %s21, 1
          %s266 = scalar_lea.sflag [#allocation7], %s265
          %s267 = sand.u32 %s81, 1
          %s268 = smul.addr %s267, 8
          %s269 = scalar_lea.vmem [#allocation6], %s268
          %s270 = smul.u32 %s29, 8
          %s271 = ssub.s32 %s270, 1
          %p272 = scmp.gt.s32.totalorder %s271, 0
          %s273 = scalar_select %p272, %s271, 0
          %s275 = ssub.s32 128, 128
          %276 = vsyncadd %s266, %s275
          %s277 = smul.addr %s273, 2
          %s278 = smul.addr %s28, 32
          %s279 = sadd.s32 %s277, %s278
          %s280 = smul.addr %s279, 64
          %s281 = scalar_lea.hbm %s1, %s280
          %s282 = sshll.u32 %s269, 4
          %s283 = int_to_ptr.vmem [resolvable:$true] %s282
          %288 = dma.hbm_to_vmem [thread:$0]  %s281, 128, %s283, %s266, 64, 64, 4
        $region32: #{tpu_custom_call.1} parent=23 // pred_fallthru
          _
        // Predicated region
        $region33: #{tpu_custom_call.1} parent=23 // pred_check
          %p289 = pneg %p127
        $region34: #{tpu_custom_call.1} parent=23 // pred_check_branch
          %291 = sbr.rel (%p289) target = $region36
        $region35: #{tpu_custom_call.1} parent=23 // pred_region
          %s292 = sand.u32 %s21, 1
          %s293 = scalar_lea.sflag [#allocation7], %s292
          %s294 = sand.u32 %s117, 1
          %s295 = smul.addr %s294, 8
          %s296 = scalar_lea.vmem [#allocation8], %s295
          %s297 = smul.u32 %s29, 8
          %s298 = sadd.s32 %s297, 8
          %p299 = scmp.lt.s32.totalorder %s298, 15
          %s300 = scalar_select %p299, %s298, 15
          %s302 = ssub.s32 128, 128
          %303 = vsyncadd %s293, %s302
          %s304 = smul.addr %s300, 2
          %s305 = smul.addr %s28, 32
          %s306 = sadd.s32 %s304, %s305
          %s307 = smul.addr %s306, 64
          %s308 = scalar_lea.hbm %s2, %s307
          %s309 = sshll.u32 %s296, 4
          %s310 = int_to_ptr.vmem [resolvable:$true] %s309
          %315 = dma.hbm_to_vmem [thread:$0]  %s308, 128, %s310, %s293, 64, 64, 4
        $region36: #{tpu_custom_call.1} parent=23 // pred_fallthru
          _
      $region24: #{tpu_custom_call.1} parent=5 // pred_fallthru
        _
      %p316 = scmp.le.s32.totalorder 1, %s21
      %p317 = scmp.lt.s32.totalorder %s21, 5
      %p318 = pnand %p316, %p317
      %p319 = pneg %p318
      // Predicated region
      $region37: #{tpu_custom_call.1} parent=5 // pred_check
        _
      $region38: #{tpu_custom_call.1} parent=5 // pred_check_branch
        %321 = sbr.rel (%p318) target = $region40
      $region39: #{tpu_custom_call.1} parent=5 // pred_region
        %s322 = ssub.s32 %s21, 1
        %s323 = sand.u32 %s48, 1
        %s324 = scalar_lea.sflag [#allocation4], %s323
        %s325 = sand.u32 %s48, 1
        %s326 = smul.addr %s325, 64
        %s327 = scalar_lea.vmem [#allocation3], %s326
        // Predicated region
        $region41: #{tpu_custom_call.1} parent=39 // pred_check
          %p328 = pneg %p61
        $region42: #{tpu_custom_call.1} parent=39 // pred_check_branch
          %330 = sbr.rel (%p328) target = $region44
        $region43: #{tpu_custom_call.1} parent=39 // pred_region
          %331 = dma.done %s324, 1024
        $region44: #{tpu_custom_call.1} parent=39 // pred_fallthru
          _
        %s332 = sand.u32 %s26, 1
        %s333 = scalar_lea.sflag [#allocation7], %s332
        %s334 = sand.u32 %s84, 1
        %s335 = smul.addr %s334, 8
        %s336 = scalar_lea.vmem [#allocation6], %s335
        // Predicated region
        $region45: #{tpu_custom_call.1} parent=39 // pred_check
          %p337 = pneg %p97
        $region46: #{tpu_custom_call.1} parent=39 // pred_check_branch
          %339 = sbr.rel (%p337) target = $region48
        $region47: #{tpu_custom_call.1} parent=39 // pred_region
          %340 = dma.done %s333, 128
        $region48: #{tpu_custom_call.1} parent=39 // pred_fallthru
          _
        %s341 = sand.u32 %s26, 1
        %s342 = scalar_lea.sflag [#allocation7], %s341
        %s343 = sand.u32 %s120, 1
        %s344 = smul.addr %s343, 8
        %s345 = scalar_lea.vmem [#allocation8], %s344
        // Predicated region
        $region49: #{tpu_custom_call.1} parent=39 // pred_check
          %p346 = pneg %p133
        $region50: #{tpu_custom_call.1} parent=39 // pred_check_branch
          %348 = sbr.rel (%p346) target = $region52
        $region51: #{tpu_custom_call.1} parent=39 // pred_region
          %349 = dma.done %s342, 128
        $region52: #{tpu_custom_call.1} parent=39 // pred_fallthru
          _
        // Predicated region
        $region53: #{tpu_custom_call.1} parent=39 // pred_check
          %p350 = pneg %p154
        $region54: #{tpu_custom_call.1} parent=39 // pred_check_branch
          %352 = sbr.rel (%p350) target = $region56
        $region55: #{tpu_custom_call.1} parent=39 // pred_region
          %353 = dma.done [#allocation10], 27648
        $region56: #{tpu_custom_call.1} parent=39 // pred_fallthru
          _
        %s354 = sand.u32 %s48, 1
        %s355 = scalar_lea.sflag [#allocation4], %s354
        %s356 = sand.u32 %s48, 1
        %s357 = smul.addr %s356, 64
        %s358 = scalar_lea.vmem [#allocation3], %s357
        %p359 = pneg %p61
        %p360 = pneg %p58
        %s361 = sand.u32 %s26, 1
        %s362 = scalar_lea.sflag [#allocation7], %s361
        %s363 = sand.u32 %s84, 1
        %s364 = smul.addr %s363, 8
        %s365 = scalar_lea.vmem [#allocation6], %s364
        %p366 = pneg %p97
        %p367 = pneg %p94
        %s368 = sand.u32 %s26, 1
        %s369 = scalar_lea.sflag [#allocation7], %s368
        %s370 = sand.u32 %s120, 1
        %s371 = smul.addr %s370, 8
        %s372 = scalar_lea.vmem [#allocation8], %s371
        %p373 = pneg %p133
        %p374 = pneg %p130
        %p375 = pneg %p154
        %p376 = pneg %p151
        %p377 = pneg %p175
        %p378 = pneg %p172
        %p379 = pneg %p203
        %p380 = pneg %p200
        %s381 = sand.u32 %s190, 1
        %s382 = scalar_lea.sflag [#allocation5], %s381
        %s383 = sand.u32 %s190, 1
        %s384 = smul.addr %s383, 192
        %s385 = scalar_lea.vmem [#allocation11], %s384
        %s386 = smul.u32 8, %s31
        %s387 = smul.u32 %s31, 8
        %s388 = ssub.s32 %s387, 1
        %p389 = scmp.gt.s32.totalorder %s388, 0
        %s390 = scalar_select %p389, %s388, 0
        %s391 = smul.u32 %s31, 8
        %s392 = sadd.s32 %s391, 8
        %p393 = scmp.lt.s32.totalorder %s392, 15
        %s394 = scalar_select %p393, %s392, 15
        %s395 = smul.u32 8, %s31
        %vm397 = vcmask 1040384
        %vm398 = vsmask.f32 256
        %vm399 = vmand %vm397, %vm398
        %v400 = vld [vmem:[#allocation2] sm:$0x1]
        %v401 = vsel %vm399, 0, %v400
        %402 = vst [vmem:[#allocation2] sm:$0x1] %v401
        %v403 = vld [vmem:[#allocation2 + $0xc] sm:$0x1]
        %v404 = vsel %vm399, 0, %v403
        %405 = vst [vmem:[#allocation2 + $0xc] sm:$0x1] %v404
        %v406 = vld [vmem:[#allocation2 + $0x18] sm:$0x1]
        %v407 = vsel %vm399, 0, %v406
        %408 = vst [vmem:[#allocation2 + $0x18] sm:$0x1] %v407
        %v409 = vld [vmem:[#allocation2 + $0x24] sm:$0x1]
        %v410 = vsel %vm399, 0, %v409
        %411 = vst [vmem:[#allocation2 + $0x24] sm:$0x1] %v410
        %v412 = vld [vmem:[#allocation2 + $0x30] sm:$0x1]
        %v413 = vsel %vm399, 0, %v412
        %414 = vst [vmem:[#allocation2 + $0x30] sm:$0x1] %v413
        %v415 = vld [vmem:[#allocation2 + $0x3c] sm:$0x1]
        %v416 = vsel %vm399, 0, %v415
        %417 = vst [vmem:[#allocation2 + $0x3c] sm:$0x1] %v416
        %v418 = vld [vmem:[#allocation2 + $0x48] sm:$0x1]
        %v419 = vsel %vm399, 0, %v418
        %420 = vst [vmem:[#allocation2 + $0x48] sm:$0x1] %v419
        %v421 = vld [vmem:[#allocation2 + $0x54] sm:$0x1]
        %v422 = vsel %vm399, 0, %v421
        %423 = vst [vmem:[#allocation2 + $0x54] sm:$0x1] %v422
        %v424 = vld [vmem:[#allocation2 + $0x60] sm:$0x1]
        %v425 = vsel %vm399, 0, %v424
        %426 = vst [vmem:[#allocation2 + $0x60] sm:$0x1] %v425
        %v427 = vld [vmem:[#allocation2 + $0x6c] sm:$0x1]
        %v428 = vsel %vm399, 0, %v427
        %429 = vst [vmem:[#allocation2 + $0x6c] sm:$0x1] %v428
        %vm430 = vsmask.f32 7938
        %vm431 = vmand %vm397, %vm430
        %v432 = vld [vmem:[#allocation2 + $0x8] sm:$0x1]
        %v433 = vsel %vm431, 0, %v432
        %434 = vst [vmem:[#allocation2 + $0x8] sm:$0x1] %v433
        %v435 = vld [vmem:[#allocation2 + $0x14] sm:$0x1]
        %v436 = vsel %vm431, 0, %v435
        %437 = vst [vmem:[#allocation2 + $0x14] sm:$0x1] %v436
        %v438 = vld [vmem:[#allocation2 + $0x20] sm:$0x1]
        %v439 = vsel %vm431, 0, %v438
        %440 = vst [vmem:[#allocation2 + $0x20] sm:$0x1] %v439
        %v441 = vld [vmem:[#allocation2 + $0x2c] sm:$0x1]
        %v442 = vsel %vm431, 0, %v441
        %443 = vst [vmem:[#allocation2 + $0x2c] sm:$0x1] %v442
        %v444 = vld [vmem:[#allocation2 + $0x38] sm:$0x1]
        %v445 = vsel %vm431, 0, %v444
        %446 = vst [vmem:[#allocation2 + $0x38] sm:$0x1] %v445
        %v447 = vld [vmem:[#allocation2 + $0x44] sm:$0x1]
        %v448 = vsel %vm431, 0, %v447
        %449 = vst [vmem:[#allocation2 + $0x44] sm:$0x1] %v448
        %v450 = vld [vmem:[#allocation2 + $0x50] sm:$0x1]
        %v451 = vsel %vm431, 0, %v450
        %452 = vst [vmem:[#allocation2 + $0x50] sm:$0x1] %v451
        %v453 = vld [vmem:[#allocation2 + $0x5c] sm:$0x1]
        %v454 = vsel %vm431, 0, %v453
        %455 = vst [vmem:[#allocation2 + $0x5c] sm:$0x1] %v454
        %v456 = vld [vmem:[#allocation2 + $0x68] sm:$0x1]
        %v457 = vsel %vm431, 0, %v456
        %458 = vst [vmem:[#allocation2 + $0x68] sm:$0x1] %v457
        %v459 = vld [vmem:[#allocation2 + $0x74] sm:$0x1]
        %v460 = vsel %vm431, 0, %v459
        %461 = vst [vmem:[#allocation2 + $0x74] sm:$0x1] %v460
        %v462 = vld [vmem:[%s336] sm:$0xf]
        %v463 = vld [vmem:[%s336 + $0x4] sm:$0xf]
        %v464 = vld [vmem:[%s345] sm:$0xf]
        %v465 = vld [vmem:[%s345 + $0x4] sm:$0xf]
        %p466 = scmp.gt.s32.totalorder %s31, 0
        %s467 = scalar_select %p466, 1, 0
        %v468 = vstv %s467
        %vm469 = vcmp.eq.s32.totalorder %v468, 1
        %v470 = vsel %vm469, %v462, 0
        %v471 = vsel %vm469, %v463, 0
        %vm472 = vsmask.f32 4368
        %vm473 = vmor %vm398, %vm472
        %v475 = vshrl.u32 %v470, 16
        %v477 = vrot.slane %v475, 7
        %v478 = vshll.u32 %v470, 16
        %v480 = vor.u32 %v477, %v478
        %v481 = vrot.slane %v477, 4
        %v483 = vshrl.u32 %v471, 16
        %v485 = vrot.slane %v483, 7
        %v486 = vshll.u32 %v471, 16
        %v488 = vor.u32 %v485, %v486
        %v489 = vsel %vm473, %v481, %v488
        %v490 = vrot.slane %v485, 4
        %vm494 = vcmask 1043456
        %vm495 = vmand %vm494, %vm430
        %v496 = vld [vmem:[#allocation2] sm:$0xf]
        %v497 = vsel %vm495, %v480, %v496
        %498 = vst [vmem:[#allocation2] sm:$0xf] %v497
        %499 = vst [vmem:[#allocation2 + $0x4] sm:$0xf] %v489
        %v500 = vld [vmem:[#allocation2 + $0x8] sm:$0x1]
        %v501 = vsel %vm399, %v490, %v500
        %502 = vst [vmem:[#allocation2 + $0x8] sm:$0x1] %v501
        %p503 = scmp.lt.s32.totalorder %s31, 1
        %s504 = scalar_select %p503, 1, 0
        %v505 = vstv %s504
        %vm506 = vcmp.eq.s32.totalorder %v505, 1
        %v507 = vsel %vm506, %v464, 0
        %v508 = vsel %vm506, %v465, 0
        %v510 = vshrl.u32 %v507, 16
        %v512 = vrot.slane %v510, 7
        %v513 = vshll.u32 %v507, 16
        %v515 = vor.u32 %v512, %v513
        %v516 = vrot.slane %v512, 4
        %v518 = vshrl.u32 %v508, 16
        %v520 = vrot.slane %v518, 7
        %v521 = vshll.u32 %v508, 16
        %v523 = vor.u32 %v520, %v521
        %v524 = vsel %vm473, %v516, %v523
        %v525 = vrot.slane %v520, 4
        %s529 = scalar_lea.vmem [#allocation2], 108
        %v530 = vld [vmem:[%s529] sm:$0xf]
        %v531 = vsel %vm495, %v515, %v530
        %532 = vst [vmem:[%s529] sm:$0xf] %v531
        %533 = vst [vmem:[%s529 + $0x4] sm:$0xf] %v524
        %v534 = vld [vmem:[%s529 + $0x8] sm:$0x1]
        %v535 = vsel %vm399, %v525, %v534
        %536 = vst [vmem:[%s529 + $0x8] sm:$0x1] %v535
        %v537 = vld [vmem:[%s327] sm:$0xf]
        %v538 = vld [vmem:[%s327 + $0x4] sm:$0xf]
        %v539 = vld [vmem:[%s327 + $0x8] sm:$0xf]
        %v540 = vld [vmem:[%s327 + $0xc] sm:$0xf]
        %v541 = vld [vmem:[%s327 + $0x10] sm:$0xf]
        %v542 = vld [vmem:[%s327 + $0x14] sm:$0xf]
        %v543 = vld [vmem:[%s327 + $0x18] sm:$0xf]
        %v544 = vld [vmem:[%s327 + $0x1c] sm:$0xf]
        %v545 = vld [vmem:[%s327 + $0x20] sm:$0xf]
        %v546 = vld [vmem:[%s327 + $0x24] sm:$0xf]
        %v547 = vld [vmem:[%s327 + $0x28] sm:$0xf]
        %v548 = vld [vmem:[%s327 + $0x2c] sm:$0xf]
        %v549 = vld [vmem:[%s327 + $0x30] sm:$0xf]
        %v550 = vld [vmem:[%s327 + $0x34] sm:$0xf]
        %v551 = vld [vmem:[%s327 + $0x38] sm:$0xf]
        %v552 = vld [vmem:[%s327 + $0x3c] sm:$0xf]
        %v554 = vshrl.u32 %v537, 16
        %v556 = vrot.slane %v554, 7
        %v557 = vshll.u32 %v537, 16
        %v559 = vor.u32 %v556, %v557
        %v560 = vrot.slane %v556, 4
        %v562 = vshrl.u32 %v538, 16
        %v564 = vrot.slane %v562, 7
        %v565 = vshll.u32 %v538, 16
        %v567 = vor.u32 %v564, %v565
        %v568 = vsel %vm473, %v560, %v567
        %v569 = vrot.slane %v564, 4
        %v571 = vshrl.u32 %v539, 16
        %v573 = vrot.slane %v571, 7
        %v574 = vshll.u32 %v539, 16
        %v576 = vor.u32 %v573, %v574
        %v577 = vrot.slane %v573, 4
        %v579 = vshrl.u32 %v540, 16
        %v581 = vrot.slane %v579, 7
        %v582 = vshll.u32 %v540, 16
        %v584 = vor.u32 %v581, %v582
        %v585 = vsel %vm473, %v577, %v584
        %v586 = vrot.slane %v581, 4
        %v588 = vshrl.u32 %v541, 16
        %v590 = vrot.slane %v588, 7
        %v591 = vshll.u32 %v541, 16
        %v593 = vor.u32 %v590, %v591
        %v594 = vrot.slane %v590, 4
        %v596 = vshrl.u32 %v542, 16
        %v598 = vrot.slane %v596, 7
        %v599 = vshll.u32 %v542, 16
        %v601 = vor.u32 %v598, %v599
        %v602 = vsel %vm473, %v594, %v601
        %v603 = vrot.slane %v598, 4
        %v605 = vshrl.u32 %v543, 16
        %v607 = vrot.slane %v605, 7
        %v608 = vshll.u32 %v543, 16
        %v610 = vor.u32 %v607, %v608
        %v611 = vrot.slane %v607, 4
        %v613 = vshrl.u32 %v544, 16
        %v615 = vrot.slane %v613, 7
        %v616 = vshll.u32 %v544, 16
        %v618 = vor.u32 %v615, %v616
        %v619 = vsel %vm473, %v611, %v618
        %v620 = vrot.slane %v615, 4
        %v622 = vshrl.u32 %v545, 16
        %v624 = vrot.slane %v622, 7
        %v625 = vshll.u32 %v545, 16
        %v627 = vor.u32 %v624, %v625
        %v628 = vrot.slane %v624, 4
        %v630 = vshrl.u32 %v546, 16
        %v632 = vrot.slane %v630, 7
        %v633 = vshll.u32 %v546, 16
        %v635 = vor.u32 %v632, %v633
        %v636 = vsel %vm473, %v628, %v635
        %v637 = vrot.slane %v632, 4
        %v639 = vshrl.u32 %v547, 16
        %v641 = vrot.slane %v639, 7
        %v642 = vshll.u32 %v547, 16
        %v644 = vor.u32 %v641, %v642
        %v645 = vrot.slane %v641, 4
        %v647 = vshrl.u32 %v548, 16
        %v649 = vrot.slane %v647, 7
        %v650 = vshll.u32 %v548, 16
        %v652 = vor.u32 %v649, %v650
        %v653 = vsel %vm473, %v645, %v652
        %v654 = vrot.slane %v649, 4
        %v656 = vshrl.u32 %v549, 16
        %v658 = vrot.slane %v656, 7
        %v659 = vshll.u32 %v549, 16
        %v661 = vor.u32 %v658, %v659
        %v662 = vrot.slane %v658, 4
        %v664 = vshrl.u32 %v550, 16
        %v666 = vrot.slane %v664, 7
        %v667 = vshll.u32 %v550, 16
        %v669 = vor.u32 %v666, %v667
        %v670 = vsel %vm473, %v662, %v669
        %v671 = vrot.slane %v666, 4
        %v673 = vshrl.u32 %v551, 16
        %v675 = vrot.slane %v673, 7
        %v676 = vshll.u32 %v551, 16
        %v678 = vor.u32 %v675, %v676
        %v679 = vrot.slane %v675, 4
        %v681 = vshrl.u32 %v552, 16
        %v683 = vrot.slane %v681, 7
        %v684 = vshll.u32 %v552, 16
        %v686 = vor.u32 %v683, %v684
        %v687 = vsel %vm473, %v679, %v686
        %v688 = vrot.slane %v683, 4
        %s713 = scalar_lea.vmem [#allocation2], 12
        %v714 = vld [vmem:[%s713] sm:$0xf]
        %v715 = vsel %vm495, %v559, %v714
        %716 = vst [vmem:[%s713] sm:$0xf] %v715
        %717 = vst [vmem:[%s713 + $0x4] sm:$0xf] %v568
        %v718 = vld [vmem:[%s713 + $0x8] sm:$0x1]
        %v719 = vsel %vm399, %v569, %v718
        %720 = vst [vmem:[%s713 + $0x8] sm:$0x1] %v719
        %v721 = vld [vmem:[%s713 + $0xc] sm:$0xf]
        %v722 = vsel %vm495, %v576, %v721
        %723 = vst [vmem:[%s713 + $0xc] sm:$0xf] %v722
        %724 = vst [vmem:[%s713 + $0x10] sm:$0xf] %v585
        %v725 = vld [vmem:[%s713 + $0x14] sm:$0x1]
        %v726 = vsel %vm399, %v586, %v725
        %727 = vst [vmem:[%s713 + $0x14] sm:$0x1] %v726
        %v728 = vld [vmem:[%s713 + $0x18] sm:$0xf]
        %v729 = vsel %vm495, %v593, %v728
        %730 = vst [vmem:[%s713 + $0x18] sm:$0xf] %v729
        %731 = vst [vmem:[%s713 + $0x1c] sm:$0xf] %v602
        %v732 = vld [vmem:[%s713 + $0x20] sm:$0x1]
        %v733 = vsel %vm399, %v603, %v732
        %734 = vst [vmem:[%s713 + $0x20] sm:$0x1] %v733
        %v735 = vld [vmem:[%s713 + $0x24] sm:$0xf]
        %v736 = vsel %vm495, %v610, %v735
        %737 = vst [vmem:[%s713 + $0x24] sm:$0xf] %v736
        %738 = vst [vmem:[%s713 + $0x28] sm:$0xf] %v619
        %v739 = vld [vmem:[%s713 + $0x2c] sm:$0x1]
        %v740 = vsel %vm399, %v620, %v739
        %741 = vst [vmem:[%s713 + $0x2c] sm:$0x1] %v740
        %v742 = vld [vmem:[%s713 + $0x30] sm:$0xf]
        %v743 = vsel %vm495, %v627, %v742
        %744 = vst [vmem:[%s713 + $0x30] sm:$0xf] %v743
        %745 = vst [vmem:[%s713 + $0x34] sm:$0xf] %v636
        %v746 = vld [vmem:[%s713 + $0x38] sm:$0x1]
        %v747 = vsel %vm399, %v637, %v746
        %748 = vst [vmem:[%s713 + $0x38] sm:$0x1] %v747
        %v749 = vld [vmem:[%s713 + $0x3c] sm:$0xf]
        %v750 = vsel %vm495, %v644, %v749
        %751 = vst [vmem:[%s713 + $0x3c] sm:$0xf] %v750
        %752 = vst [vmem:[%s713 + $0x40] sm:$0xf] %v653
        %v753 = vld [vmem:[%s713 + $0x44] sm:$0x1]
        %v754 = vsel %vm399, %v654, %v753
        %755 = vst [vmem:[%s713 + $0x44] sm:$0x1] %v754
        %v756 = vld [vmem:[%s713 + $0x48] sm:$0xf]
        %v757 = vsel %vm495, %v661, %v756
        %758 = vst [vmem:[%s713 + $0x48] sm:$0xf] %v757
        %759 = vst [vmem:[%s713 + $0x4c] sm:$0xf] %v670
        %v760 = vld [vmem:[%s713 + $0x50] sm:$0x1]
        %v761 = vsel %vm399, %v671, %v760
        %762 = vst [vmem:[%s713 + $0x50] sm:$0x1] %v761
        %v763 = vld [vmem:[%s713 + $0x54] sm:$0xf]
        %v764 = vsel %vm495, %v678, %v763
        %765 = vst [vmem:[%s713 + $0x54] sm:$0xf] %v764
        %766 = vst [vmem:[%s713 + $0x58] sm:$0xf] %v687
        %v767 = vld [vmem:[%s713 + $0x5c] sm:$0x1]
        %v768 = vsel %vm399, %v688, %v767
        %769 = vst [vmem:[%s713 + $0x5c] sm:$0x1] %v768
        %v770 = vld [vmem:[#allocation2] sm:$0xf]
        %v771 = vld [vmem:[#allocation2 + $0x4] sm:$0xf]
        %v772 = vld [vmem:[#allocation2 + $0xc] sm:$0xf]
        %v773 = vld [vmem:[#allocation2 + $0x10] sm:$0xf]
        %v774 = vld [vmem:[#allocation2 + $0x18] sm:$0xf]
        %v775 = vld [vmem:[#allocation2 + $0x1c] sm:$0xf]
        %v776 = vld [vmem:[#allocation2 + $0x24] sm:$0xf]
        %v777 = vld [vmem:[#allocation2 + $0x28] sm:$0xf]
        %v778 = vld [vmem:[#allocation2 + $0x30] sm:$0xf]
        %v779 = vld [vmem:[#allocation2 + $0x34] sm:$0xf]
        %v780 = vld [vmem:[#allocation2 + $0x3c] sm:$0xf]
        %v781 = vld [vmem:[#allocation2 + $0x40] sm:$0xf]
        %v782 = vld [vmem:[#allocation2 + $0x48] sm:$0xf]
        %v783 = vld [vmem:[#allocation2 + $0x4c] sm:$0xf]
        %v784 = vld [vmem:[#allocation2 + $0x54] sm:$0xf]
        %v785 = vld [vmem:[#allocation2 + $0x58] sm:$0xf]
        %v786 = vld [vmem:[#allocation9] sm:$0xff]
        %v787 = vld [vmem:[#allocation9 + $0x8] sm:$0xf]
        %v788 = vld [vmem:[#allocation9 + $0xc] sm:$0xff]
        %v789 = vld [vmem:[#allocation9 + $0x14] sm:$0xf]
        %v790 = vld [vmem:[#allocation9 + $0x18] sm:$0xff]
        %v791 = vld [vmem:[#allocation9 + $0x20] sm:$0xf]
        %v792 = vld [vmem:[#allocation9 + $0x24] sm:$0xff]
        %v793 = vld [vmem:[#allocation9 + $0x2c] sm:$0xf]
        %v794 = vld [vmem:[#allocation9 + $0x30] sm:$0xff]
        %v795 = vld [vmem:[#allocation9 + $0x38] sm:$0xf]
        %v796 = vld [vmem:[#allocation9 + $0x3c] sm:$0xff]
        %v797 = vld [vmem:[#allocation9 + $0x44] sm:$0xf]
        %v798 = vld [vmem:[#allocation9 + $0x48] sm:$0xff]
        %v799 = vld [vmem:[#allocation9 + $0x50] sm:$0xf]
        %v800 = vld [vmem:[#allocation9 + $0x54] sm:$0xff]
        %v801 = vld [vmem:[#allocation9 + $0x5c] sm:$0xf]
        %v802 = vld [vmem:[#allocation9 + $0x60] sm:$0xff]
        %v803 = vld [vmem:[#allocation9 + $0x68] sm:$0xf]
        %v804 = vld [vmem:[#allocation9 + $0x6c] sm:$0xff]
        %v805 = vld [vmem:[#allocation9 + $0x74] sm:$0xf]
        %v806 = vld [vmem:[#allocation9 + $0x78] sm:$0xff]
        %v807 = vld [vmem:[#allocation9 + $0x80] sm:$0xf]
        %v808 = vld [vmem:[#allocation9 + $0x84] sm:$0xff]
        %v809 = vld [vmem:[#allocation9 + $0x8c] sm:$0xf]
        %v810 = vld [vmem:[#allocation9 + $0x90] sm:$0xff]
        %v811 = vld [vmem:[#allocation9 + $0x98] sm:$0xf]
        %v812 = vld [vmem:[#allocation9 + $0x9c] sm:$0xff]
        %v813 = vld [vmem:[#allocation9 + $0xa4] sm:$0xf]
        %v814 = vld [vmem:[#allocation9 + $0xa8] sm:$0xff]
        %v815 = vld [vmem:[#allocation9 + $0xb0] sm:$0xf]
        %v816 = vld [vmem:[#allocation9 + $0xb4] sm:$0xff]
        %v817 = vld [vmem:[#allocation9 + $0xbc] sm:$0xf]
        %v818 = vld [vmem:[#allocation2 + $0x8] sm:$0x1]
        %v819 = vld [vmem:[#allocation2 + $0x14] sm:$0x1]
        %v820 = vld [vmem:[#allocation2 + $0x20] sm:$0x1]
        %v821 = vld [vmem:[#allocation2 + $0x2c] sm:$0x1]
        %v822 = vld [vmem:[#allocation2 + $0x38] sm:$0x1]
        %v823 = vld [vmem:[#allocation2 + $0x44] sm:$0x1]
        %v824 = vld [vmem:[#allocation2 + $0x50] sm:$0x1]
        %v825 = vld [vmem:[#allocation2 + $0x5c] sm:$0x1]
        %vm826 = vsmask.f32 3328
        %vm827 = vsmask.f32 7440
        %vm828 = vmor %vm826, %vm827
        %v830 = vshrl.u32 %v770, 16
        %v832 = vrot.slane %v830, 4
        %v833 = vshll.u32 %v770, 16
        %v835 = vrot.slane %v833, 5
        %v836 = vor.u32 %v832, %v835
        %v837 = vrot.slane %v836, 4
        %v839 = vshll.u32 %v771, 16
        %v841 = vrot.slane %v839, 5
        %v842 = vsel %vm828, %v837, %v841
        %v843 = vshrl.u32 %v771, 16
        %v845 = vrot.slane %v843, 4
        %v846 = vor.u32 %v845, %v841
        %v847 = vrot.slane %v846, 4
        %v849 = vshll.u32 %v818, 16
        %v851 = vrot.slane %v849, 5
        %v852 = vsel %vm828, %v847, %v851
        %v854 = vshrl.u32 %v772, 16
        %v856 = vrot.slane %v854, 4
        %v857 = vshll.u32 %v772, 16
        %v859 = vrot.slane %v857, 5
        %v860 = vor.u32 %v856, %v859
        %v861 = vrot.slane %v860, 4
        %v863 = vshll.u32 %v773, 16
        %v865 = vrot.slane %v863, 5
        %v866 = vsel %vm828, %v861, %v865
        %v867 = vshrl.u32 %v773, 16
        %v869 = vrot.slane %v867, 4
        %v870 = vor.u32 %v869, %v865
        %v871 = vrot.slane %v870, 4
        %v873 = vshll.u32 %v819, 16
        %v875 = vrot.slane %v873, 5
        %v876 = vsel %vm828, %v871, %v875
        %v878 = vshrl.u32 %v774, 16
        %v880 = vrot.slane %v878, 4
        %v881 = vshll.u32 %v774, 16
        %v883 = vrot.slane %v881, 5
        %v884 = vor.u32 %v880, %v883
        %v885 = vrot.slane %v884, 4
        %v887 = vshll.u32 %v775, 16
        %v889 = vrot.slane %v887, 5
        %v890 = vsel %vm828, %v885, %v889
        %v891 = vshrl.u32 %v775, 16
        %v893 = vrot.slane %v891, 4
        %v894 = vor.u32 %v893, %v889
        %v895 = vrot.slane %v894, 4
        %v897 = vshll.u32 %v820, 16
        %v899 = vrot.slane %v897, 5
        %v900 = vsel %vm828, %v895, %v899
        %v902 = vshrl.u32 %v776, 16
        %v904 = vrot.slane %v902, 4
        %v905 = vshll.u32 %v776, 16
        %v907 = vrot.slane %v905, 5
        %v908 = vor.u32 %v904, %v907
        %v909 = vrot.slane %v908, 4
        %v911 = vshll.u32 %v777, 16
        %v913 = vrot.slane %v911, 5
        %v914 = vsel %vm828, %v909, %v913
        %v915 = vshrl.u32 %v777, 16
        %v917 = vrot.slane %v915, 4
        %v918 = vor.u32 %v917, %v913
        %v919 = vrot.slane %v918, 4
        %v921 = vshll.u32 %v821, 16
        %v923 = vrot.slane %v921, 5
        %v924 = vsel %vm828, %v919, %v923
        %v926 = vshrl.u32 %v778, 16
        %v928 = vrot.slane %v926, 4
        %v929 = vshll.u32 %v778, 16
        %v931 = vrot.slane %v929, 5
        %v932 = vor.u32 %v928, %v931
        %v933 = vrot.slane %v932, 4
        %v935 = vshll.u32 %v779, 16
        %v937 = vrot.slane %v935, 5
        %v938 = vsel %vm828, %v933, %v937
        %v939 = vshrl.u32 %v779, 16
        %v941 = vrot.slane %v939, 4
        %v942 = vor.u32 %v941, %v937
        %v943 = vrot.slane %v942, 4
        %v945 = vshll.u32 %v822, 16
        %v947 = vrot.slane %v945, 5
        %v948 = vsel %vm828, %v943, %v947
        %v950 = vshrl.u32 %v780, 16
        %v952 = vrot.slane %v950, 4
        %v953 = vshll.u32 %v780, 16
        %v955 = vrot.slane %v953, 5
        %v956 = vor.u32 %v952, %v955
        %v957 = vrot.slane %v956, 4
        %v959 = vshll.u32 %v781, 16
        %v961 = vrot.slane %v959, 5
        %v962 = vsel %vm828, %v957, %v961
        %v963 = vshrl.u32 %v781, 16
        %v965 = vrot.slane %v963, 4
        %v966 = vor.u32 %v965, %v961
        %v967 = vrot.slane %v966, 4
        %v969 = vshll.u32 %v823, 16
        %v971 = vrot.slane %v969, 5
        %v972 = vsel %vm828, %v967, %v971
        %v974 = vshrl.u32 %v782, 16
        %v976 = vrot.slane %v974, 4
        %v977 = vshll.u32 %v782, 16
        %v979 = vrot.slane %v977, 5
        %v980 = vor.u32 %v976, %v979
        %v981 = vrot.slane %v980, 4
        %v983 = vshll.u32 %v783, 16
        %v985 = vrot.slane %v983, 5
        %v986 = vsel %vm828, %v981, %v985
        %v987 = vshrl.u32 %v783, 16
        %v989 = vrot.slane %v987, 4
        %v990 = vor.u32 %v989, %v985
        %v991 = vrot.slane %v990, 4
        %v993 = vshll.u32 %v824, 16
        %v995 = vrot.slane %v993, 5
        %v996 = vsel %vm828, %v991, %v995
        %v998 = vshrl.u32 %v784, 16
        %v1000 = vrot.slane %v998, 4
        %v1001 = vshll.u32 %v784, 16
        %v1003 = vrot.slane %v1001, 5
        %v1004 = vor.u32 %v1000, %v1003
        %v1005 = vrot.slane %v1004, 4
        %v1007 = vshll.u32 %v785, 16
        %v1009 = vrot.slane %v1007, 5
        %v1010 = vsel %vm828, %v1005, %v1009
        %v1011 = vshrl.u32 %v785, 16
        %v1013 = vrot.slane %v1011, 4
        %v1014 = vor.u32 %v1013, %v1009
        %v1015 = vrot.slane %v1014, 4
        %v1017 = vshll.u32 %v825, 16
        %v1019 = vrot.slane %v1017, 5
        %v1020 = vsel %vm828, %v1015, %v1019
        %v1021 = vld [vmem:[#allocation9 + $0xc0] sm:$0xff]
        %v1022 = vld [vmem:[#allocation9 + $0xc8] sm:$0xf]
        %v1023 = vld [vmem:[#allocation9 + $0xcc] sm:$0xff]
        %v1024 = vld [vmem:[#allocation9 + $0xd4] sm:$0xf]
        %v1025 = vld [vmem:[#allocation9 + $0xd8] sm:$0xff]
        %v1026 = vld [vmem:[#allocation9 + $0xe0] sm:$0xf]
        %v1027 = vld [vmem:[#allocation9 + $0xe4] sm:$0xff]
        %v1028 = vld [vmem:[#allocation9 + $0xec] sm:$0xf]
        %v1029 = vld [vmem:[#allocation9 + $0xf0] sm:$0xff]
        %v1030 = vld [vmem:[#allocation9 + $0xf8] sm:$0xf]
        %v1031 = vld [vmem:[#allocation9 + $0xfc] sm:$0xff]
        %v1032 = vld [vmem:[#allocation9 + $0x104] sm:$0xf]
        %v1033 = vld [vmem:[#allocation9 + $0x108] sm:$0xff]
        %v1034 = vld [vmem:[#allocation9 + $0x110] sm:$0xf]
        %v1035 = vld [vmem:[#allocation9 + $0x114] sm:$0xff]
        %v1036 = vld [vmem:[#allocation9 + $0x11c] sm:$0xf]
        %v1037 = vld [vmem:[#allocation9 + $0x120] sm:$0xff]
        %v1038 = vld [vmem:[#allocation9 + $0x128] sm:$0xf]
        %v1039 = vld [vmem:[#allocation9 + $0x12c] sm:$0xff]
        %v1040 = vld [vmem:[#allocation9 + $0x134] sm:$0xf]
        %v1041 = vld [vmem:[#allocation9 + $0x138] sm:$0xff]
        %v1042 = vld [vmem:[#allocation9 + $0x140] sm:$0xf]
        %v1043 = vld [vmem:[#allocation9 + $0x144] sm:$0xff]
        %v1044 = vld [vmem:[#allocation9 + $0x14c] sm:$0xf]
        %v1045 = vld [vmem:[#allocation9 + $0x150] sm:$0xff]
        %v1046 = vld [vmem:[#allocation9 + $0x158] sm:$0xf]
        %v1047 = vld [vmem:[#allocation9 + $0x15c] sm:$0xff]
        %v1048 = vld [vmem:[#allocation9 + $0x164] sm:$0xf]
        %v1049 = vld [vmem:[#allocation9 + $0x168] sm:$0xff]
        %v1050 = vld [vmem:[#allocation9 + $0x170] sm:$0xf]
        %v1051 = vld [vmem:[#allocation9 + $0x174] sm:$0xff]
        %v1052 = vld [vmem:[#allocation9 + $0x17c] sm:$0xf]
        %v1053 = vunpack.c.l.b16 %v842
        %v1054 = vunpack.c.l.b16 %v852
        %v1055 = vunpack.c.l.b16 %v866
        %v1056 = vunpack.c.l.b16 %v876
        %v1057 = vunpack.c.l.b16 %v890
        %v1058 = vunpack.c.l.b16 %v900
        %v1059 = vunpack.c.l.b16 %v914
        %v1060 = vunpack.c.l.b16 %v924
        %v1061 = vunpack.c.l.b16 %v938
        %v1062 = vunpack.c.l.b16 %v948
        %v1063 = vunpack.c.l.b16 %v962
        %v1064 = vunpack.c.l.b16 %v972
        %v1065 = vunpack.c.l.b16 %v986
        %v1066 = vunpack.c.l.b16 %v996
        %v1067 = vunpack.c.l.b16 %v1010
        %v1068 = vunpack.c.l.b16 %v1020
        %v1069 = vpack.c.b16 %v1054, %v1053
        %v1070 = vpack.c.b16 %v1056, %v1055
        %v1071 = vpack.c.b16 %v1058, %v1057
        %v1072 = vpack.c.b16 %v1060, %v1059
        %v1073 = vpack.c.b16 %v1062, %v1061
        %v1074 = vpack.c.b16 %v1064, %v1063
        %v1075 = vpack.c.b16 %v1066, %v1065
        %v1076 = vpack.c.b16 %v1068, %v1067
        %v1117 = vunpack.c.l.b16 %v1021
        %v1118 = vunpack.c.h.b16 %v1021
        %v1119 = vunpack.c.l.b16 %v1022
        %v1120 = vunpack.c.l.b16 %v1023
        %v1121 = vunpack.c.h.b16 %v1023
        %v1122 = vunpack.c.l.b16 %v1024
        %v1123 = vunpack.c.l.b16 %v1025
        %v1124 = vunpack.c.h.b16 %v1025
        %v1125 = vunpack.c.l.b16 %v1026
        %v1126 = vunpack.c.l.b16 %v1027
        %v1127 = vunpack.c.h.b16 %v1027
        %v1128 = vunpack.c.l.b16 %v1028
        %v1129 = vunpack.c.l.b16 %v1029
        %v1130 = vunpack.c.h.b16 %v1029
        %v1131 = vunpack.c.l.b16 %v1030
        %v1132 = vunpack.c.l.b16 %v1031
        %v1133 = vunpack.c.h.b16 %v1031
        %v1134 = vunpack.c.l.b16 %v1032
        %v1135 = vunpack.c.l.b16 %v1033
        %v1136 = vunpack.c.h.b16 %v1033
        %v1137 = vunpack.c.l.b16 %v1034
        %v1138 = vunpack.c.l.b16 %v1035
        %v1139 = vunpack.c.h.b16 %v1035
        %v1140 = vunpack.c.l.b16 %v1036
        %v1141 = vunpack.c.l.b16 %v1037
        %v1142 = vunpack.c.h.b16 %v1037
        %v1143 = vunpack.c.l.b16 %v1038
        %v1144 = vunpack.c.l.b16 %v1039
        %v1145 = vunpack.c.h.b16 %v1039
        %v1146 = vunpack.c.l.b16 %v1040
        %v1147 = vunpack.c.l.b16 %v1041
        %v1148 = vunpack.c.h.b16 %v1041
        %v1149 = vunpack.c.l.b16 %v1042
        %v1150 = vunpack.c.l.b16 %v1043
        %v1151 = vunpack.c.h.b16 %v1043
        %v1152 = vunpack.c.l.b16 %v1044
        %v1153 = vunpack.c.l.b16 %v1045
        %v1154 = vunpack.c.h.b16 %v1045
        %v1155 = vunpack.c.l.b16 %v1046
        %v1156 = vunpack.c.l.b16 %v1047
        %v1157 = vunpack.c.h.b16 %v1047
        %v1158 = vunpack.c.l.b16 %v1048
        %v1159 = vunpack.c.l.b16 %v1049
        %v1160 = vunpack.c.h.b16 %v1049
        %v1161 = vunpack.c.l.b16 %v1050
        %v1162 = vunpack.c.l.b16 %v1051
        %v1163 = vunpack.c.h.b16 %v1051
        %v1164 = vunpack.c.l.b16 %v1052
        %v1165 = vpack.c.b16 %v1120, %v1117
        %v1166 = vpack.c.b16 %v1121, %v1118
        %v1167 = vpack.c.b16 %v1122, %v1119
        %v1168 = vpack.c.b16 %v1126, %v1123
        %v1169 = vpack.c.b16 %v1127, %v1124
        %v1170 = vpack.c.b16 %v1128, %v1125
        %v1171 = vpack.c.b16 %v1132, %v1129
        %v1172 = vpack.c.b16 %v1133, %v1130
        %v1173 = vpack.c.b16 %v1134, %v1131
        %v1174 = vpack.c.b16 %v1138, %v1135
        %v1175 = vpack.c.b16 %v1139, %v1136
        %v1176 = vpack.c.b16 %v1140, %v1137
        %v1177 = vpack.c.b16 %v1144, %v1141
        %v1178 = vpack.c.b16 %v1145, %v1142
        %v1179 = vpack.c.b16 %v1146, %v1143
        %v1180 = vpack.c.b16 %v1150, %v1147
        %v1181 = vpack.c.b16 %v1151, %v1148
        %v1182 = vpack.c.b16 %v1152, %v1149
        %v1183 = vpack.c.b16 %v1156, %v1153
        %v1184 = vpack.c.b16 %v1157, %v1154
        %v1185 = vpack.c.b16 %v1158, %v1155
        %v1186 = vpack.c.b16 %v1162, %v1159
        %v1187 = vpack.c.b16 %v1163, %v1160
        %v1188 = vpack.c.b16 %v1164, %v1161
        %1213 = vmatprep.subr.bf16.mxu0 %v1166
        %1214 = vmatpush1.bf16.msra.mxu0 %v1165
        %1215 = vmatprep.subr.bf16.mxu0 %v1169
        %1216 = vmatpush1.bf16.msra.mxu0 %v1168
        %1217 = vmatprep.subr.bf16.mxu0 %v1172
        %1218 = vmatpush1.bf16.msra.mxu0 %v1171
        %1219 = vmatprep.subr.bf16.mxu0 %v1175
        %1220 = vmatpush1.bf16.msra.mxu0 %v1174
        %1221 = vmatprep.subr.bf16.mxu0 %v1178
        %1222 = vmatpush1.bf16.msra.mxu0 %v1177
        %1223 = vmatprep.subr.bf16.mxu0 %v1181
        %1224 = vmatpush1.bf16.msra.mxu0 %v1180
        %1225 = vmatprep.subr.bf16.mxu0 %v1184
        %1226 = vmatpush1.bf16.msra.mxu0 %v1183
        %1227 = vmatprep.subr.bf16.mxu0 %v1187
        %1228 = vmatpush1.bf16.msra.mxu0 %v1186
        %1229 = vmatprep.subr.bf16.mxu0 0
        %1230 = vmatpush1.bf16.msra.mxu0 0
        %1231 = vmatprep.subr.bf16.mxu0 0
        %1232 = vmatpush1.bf16.msra.mxu0 0
        %1233 = vmatprep.subr.bf16.mxu0 0
        %1234 = vmatpush1.bf16.msra.mxu0 0
        %1235 = vmatprep.subr.bf16.mxu0 0
        %1236 = vmatpush1.bf16.msra.mxu0 0
        %1237 = vmatprep.subr.bf16.mxu0 0
        %1238 = vmatpush1.bf16.msra.mxu0 0
        %1239 = vmatprep.subr.bf16.mxu0 0
        %1240 = vmatpush1.bf16.msra.mxu0 0
        %1241 = vmatprep.subr.bf16.mxu0 0
        %1242 = vmatpush1.bf16.msra.mxu0 0
        %1243 = vmatprep.subr.bf16.mxu0 0
        %1244 = vmatpush1.bf16.msra.mxu0 0
        %1245 = vmatprep.mubr.bf16.mxu0 0
        %1246 = vmatmul.mubr.bf16.gmra.mrb[0].mxu0 %v1069
        %v1247 = vpop.f32.mrb[0].mxu0
        %v1248 = vadd.f32 0.0, %v1247
        %v1249 = vpop.f32.mrb[0].mxu0
        %v1250 = vadd.f32 0.0, %v1249
        %v1251 = vpop.f32.mrb[0].mxu0
        %v1252 = vadd.f32 0.0, %v1251
        %v1253 = vpop.f32.mrb[0].mxu0
        %v1254 = vadd.f32 0.0, %v1253
        %1255 = vmatprep.mubr.bf16.mxu0 0
        %1256 = vmatmul.mubr.bf16.gmra.mrb[0].mxu0 %v1070
        %v1257 = vpop.f32.mrb[0].mxu0
        %v1258 = vadd.f32 0.0, %v1257
        %v1259 = vpop.f32.mrb[0].mxu0
        %v1260 = vadd.f32 0.0, %v1259
        %v1261 = vpop.f32.mrb[0].mxu0
        %v1262 = vadd.f32 0.0, %v1261
        %v1263 = vpop.f32.mrb[0].mxu0
        %v1264 = vadd.f32 0.0, %v1263
        %1265 = vmatprep.mubr.bf16.mxu0 0
        %1266 = vmatmul.mubr.bf16.gmra.mrb[0].mxu0 %v1071
        %v1267 = vpop.f32.mrb[0].mxu0
        %v1268 = vadd.f32 0.0, %v1267
        %v1269 = vpop.f32.mrb[0].mxu0
        %v1270 = vadd.f32 0.0, %v1269
        %v1271 = vpop.f32.mrb[0].mxu0
        %v1272 = vadd.f32 0.0, %v1271
        %v1273 = vpop.f32.mrb[0].mxu0
        %v1274 = vadd.f32 0.0, %v1273
        %1275 = vmatprep.mubr.bf16.mxu0 0
        %1276 = vmatmul.mubr.bf16.gmra.mrb[0].mxu0 %v1072
        %v1277 = vpop.f32.mrb[0].mxu0
        %v1278 = vadd.f32 0.0, %v1277
        %v1279 = vpop.f32.mrb[0].mxu0
        %v1280 = vadd.f32 0.0, %v1279
        %v1281 = vpop.f32.mrb[0].mxu0
        %v1282 = vadd.f32 0.0, %v1281
        %v1283 = vpop.f32.mrb[0].mxu0
        %v1284 = vadd.f32 0.0, %v1283
        %1285 = vmatprep.mubr.bf16.mxu0 0
        %1286 = vmatmul.mubr.bf16.gmra.mrb[0].mxu0 %v1073
        %v1287 = vpop.f32.mrb[0].mxu0
        %v1288 = vadd.f32 0.0, %v1287
        %v1289 = vpop.f32.mrb[0].mxu0
        %v1290 = vadd.f32 0.0, %v1289
        %v1291 = vpop.f32.mrb[0].mxu0
        %v1292 = vadd.f32 0.0, %v1291
        %v1293 = vpop.f32.mrb[0].mxu0
        %v1294 = vadd.f32 0.0, %v1293
        %1295 = vmatprep.mubr.bf16.mxu0 0
        %1296 = vmatmul.mubr.bf16.gmra.mrb[0].mxu0 %v1074
        %v1297 = vpop.f32.mrb[0].mxu0
        %v1298 = vadd.f32 0.0, %v1297
        %v1299 = vpop.f32.mrb[0].mxu0
        %v1300 = vadd.f32 0.0, %v1299
        %v1301 = vpop.f32.mrb[0].mxu0
        %v1302 = vadd.f32 0.0, %v1301
        %v1303 = vpop.f32.mrb[0].mxu0
        %v1304 = vadd.f32 0.0, %v1303
        %1305 = vmatprep.mubr.bf16.mxu0 0
        %1306 = vmatmul.mubr.bf16.gmra.mrb[0].mxu0 %v1075
        %v1307 = vpop.f32.mrb[0].mxu0
        %v1308 = vadd.f32 0.0, %v1307
        %v1309 = vpop.f32.mrb[0].mxu0
        %v1310 = vadd.f32 0.0, %v1309
        %v1311 = vpop.f32.mrb[0].mxu0
        %v1312 = vadd.f32 0.0, %v1311
        %v1313 = vpop.f32.mrb[0].mxu0
        %v1314 = vadd.f32 0.0, %v1313
        %1315 = vmatprep.mubr.bf16.mxu0 0
        %1316 = vmatmul.mubr.bf16.gmra.mrb[0].mxu0 %v1076
        %v1317 = vpop.f32.mrb[0].mxu0
        %v1318 = vadd.f32 0.0, %v1317
        %v1319 = vpop.f32.mrb[0].mxu0
        %v1320 = vadd.f32 0.0, %v1319
        %v1321 = vpop.f32.mrb[0].mxu0
        %v1322 = vadd.f32 0.0, %v1321
        %v1323 = vpop.f32.mrb[0].mxu0
        %v1324 = vadd.f32 0.0, %v1323
        %1325 = vdwg.mxu0
        %1326 = vmatprep.subr.bf16.mxu0 0
        %1327 = vmatpush1.bf16.msra.mxu0 %v1167
        %1328 = vmatprep.subr.bf16.mxu0 0
        %1329 = vmatpush1.bf16.msra.mxu0 %v1170
        %1330 = vmatprep.subr.bf16.mxu0 0
        %1331 = vmatpush1.bf16.msra.mxu0 %v1173
        %1332 = vmatprep.subr.bf16.mxu0 0
        %1333 = vmatpush1.bf16.msra.mxu0 %v1176
        %1334 = vmatprep.subr.bf16.mxu0 0
        %1335 = vmatpush1.bf16.msra.mxu0 %v1179
        %1336 = vmatprep.subr.bf16.mxu0 0
        %1337 = vmatpush1.bf16.msra.mxu0 %v1182
        %1338 = vmatprep.subr.bf16.mxu0 0
        %1339 = vmatpush1.bf16.msra.mxu0 %v1185
        %1340 = vmatprep.subr.bf16.mxu0 0
        %1341 = vmatpush1.bf16.msra.mxu0 %v1188
        %1342 = vmatprep.subr.bf16.mxu0 0
        %1343 = vmatpush1.bf16.msra.mxu0 0
        %1344 = vmatprep.subr.bf16.mxu0 0
        %1345 = vmatpush1.bf16.msra.mxu0 0
        %1346 = vmatprep.subr.bf16.mxu0 0
        %1347 = vmatpush1.bf16.msra.mxu0 0
        %1348 = vmatprep.subr.bf16.mxu0 0
        %1349 = vmatpush1.bf16.msra.mxu0 0
        %1350 = vmatprep.subr.bf16.mxu0 0
        %1351 = vmatpush1.bf16.msra.mxu0 0
        %1352 = vmatprep.subr.bf16.mxu0 0
        %1353 = vmatpush1.bf16.msra.mxu0 0
        %1354 = vmatprep.subr.bf16.mxu0 0
        %1355 = vmatpush1.bf16.msra.mxu0 0
        %1356 = vmatprep.subr.bf16.mxu0 0
        %1357 = vmatpush1.bf16.msra.mxu0 0
        %1358 = vmatprep.mubr.bf16.mxu0 0
        %1359 = vmatmul.mubr.bf16.gmra.mrb[0].mxu0 %v1069
        %v1360 = vpop.f32.mrb[0].mxu0
        %v1361 = vadd.f32 0.0, %v1360
        %v1362 = vpop.f32.mrb[0].mxu0
        %v1363 = vpop.f32.mrb[0].mxu0
        %v1364 = vadd.f32 0.0, %v1363
        %v1365 = vpop.f32.mrb[0].mxu0
        %1366 = vmatprep.mubr.bf16.mxu0 0
        %1367 = vmatmul.mubr.bf16.gmra.mrb[0].mxu0 %v1070
        %v1368 = vpop.f32.mrb[0].mxu0
        %v1369 = vadd.f32 0.0, %v1368
        %v1370 = vpop.f32.mrb[0].mxu0
        %v1371 = vpop.f32.mrb[0].mxu0
        %v1372 = vadd.f32 0.0, %v1371
        %v1373 = vpop.f32.mrb[0].mxu0
        %1374 = vmatprep.mubr.bf16.mxu0 0
        %1375 = vmatmul.mubr.bf16.gmra.mrb[0].mxu0 %v1071
        %v1376 = vpop.f32.mrb[0].mxu0
        %v1377 = vadd.f32 0.0, %v1376
        %v1378 = vpop.f32.mrb[0].mxu0
        %v1379 = vpop.f32.mrb[0].mxu0
        %v1380 = vadd.f32 0.0, %v1379
        %v1381 = vpop.f32.mrb[0].mxu0
        %1382 = vmatprep.mubr.bf16.mxu0 0
        %1383 = vmatmul.mubr.bf16.gmra.mrb[0].mxu0 %v1072
        %v1384 = vpop.f32.mrb[0].mxu0
        %v1385 = vadd.f32 0.0, %v1384
        %v1386 = vpop.f32.mrb[0].mxu0
        %v1387 = vpop.f32.mrb[0].mxu0
        %v1388 = vadd.f32 0.0, %v1387
        %v1389 = vpop.f32.mrb[0].mxu0
        %1390 = vmatprep.mubr.bf16.mxu0 0
        %1391 = vmatmul.mubr.bf16.gmra.mrb[0].mxu0 %v1073
        %v1392 = vpop.f32.mrb[0].mxu0
        %v1393 = vadd.f32 0.0, %v1392
        %v1394 = vpop.f32.mrb[0].mxu0
        %v1395 = vpop.f32.mrb[0].mxu0
        %v1396 = vadd.f32 0.0, %v1395
        %v1397 = vpop.f32.mrb[0].mxu0
        %1398 = vmatprep.mubr.bf16.mxu0 0
        %1399 = vmatmul.mubr.bf16.gmra.mrb[0].mxu0 %v1074
        %v1400 = vpop.f32.mrb[0].mxu0
        %v1401 = vadd.f32 0.0, %v1400
        %v1402 = vpop.f32.mrb[0].mxu0
        %v1403 = vpop.f32.mrb[0].mxu0
        %v1404 = vadd.f32 0.0, %v1403
        %v1405 = vpop.f32.mrb[0].mxu0
        %1406 = vmatprep.mubr.bf16.mxu0 0
        %1407 = vmatmul.mubr.bf16.gmra.mrb[0].mxu0 %v1075
        %v1408 = vpop.f32.mrb[0].mxu0
        %v1409 = vadd.f32 0.0, %v1408
        %v1410 = vpop.f32.mrb[0].mxu0
        %v1411 = vpop.f32.mrb[0].mxu0
        %v1412 = vadd.f32 0.0, %v1411
        %v1413 = vpop.f32.mrb[0].mxu0
        %1414 = vmatprep.mubr.bf16.mxu0 0
        %1415 = vmatmul.mubr.bf16.gmra.mrb[0].mxu0 %v1076
        %v1416 = vpop.f32.mrb[0].mxu0
        %v1417 = vadd.f32 0.0, %v1416
        %v1418 = vpop.f32.mrb[0].mxu0
        %v1419 = vpop.f32.mrb[0].mxu0
        %v1420 = vadd.f32 0.0, %v1419
        %v1421 = vpop.f32.mrb[0].mxu0
        %1422 = vdwg.mxu0
        %v1439 = vunpack.c.l.b16 %v770
        %v1440 = vunpack.c.l.b16 %v771
        %v1441 = vunpack.c.l.b16 %v772
        %v1442 = vunpack.c.l.b16 %v773
        %v1443 = vunpack.c.l.b16 %v774
        %v1444 = vunpack.c.l.b16 %v775
        %v1445 = vunpack.c.l.b16 %v776
        %v1446 = vunpack.c.l.b16 %v777
        %v1447 = vunpack.c.l.b16 %v778
        %v1448 = vunpack.c.l.b16 %v779
        %v1449 = vunpack.c.l.b16 %v780
        %v1450 = vunpack.c.l.b16 %v781
        %v1451 = vunpack.c.l.b16 %v782
        %v1452 = vunpack.c.l.b16 %v783
        %v1453 = vunpack.c.l.b16 %v784
        %v1454 = vunpack.c.l.b16 %v785
        %v1455 = vpack.c.b16 %v1440, %v1439
        %v1456 = vpack.c.b16 %v1442, %v1441
        %v1457 = vpack.c.b16 %v1444, %v1443
        %v1458 = vpack.c.b16 %v1446, %v1445
        %v1459 = vpack.c.b16 %v1448, %v1447
        %v1460 = vpack.c.b16 %v1450, %v1449
        %v1461 = vpack.c.b16 %v1452, %v1451
        %v1462 = vpack.c.b16 %v1454, %v1453
        %v1503 = vunpack.c.l.b16 %v786
        %v1504 = vunpack.c.h.b16 %v786
        %v1505 = vunpack.c.l.b16 %v787
        %v1506 = vunpack.c.l.b16 %v788
        %v1507 = vunpack.c.h.b16 %v788
        %v1508 = vunpack.c.l.b16 %v789
        %v1509 = vunpack.c.l.b16 %v790
        %v1510 = vunpack.c.h.b16 %v790
        %v1511 = vunpack.c.l.b16 %v791
        %v1512 = vunpack.c.l.b16 %v792
        %v1513 = vunpack.c.h.b16 %v792
        %v1514 = vunpack.c.l.b16 %v793
        %v1515 = vunpack.c.l.b16 %v794
        %v1516 = vunpack.c.h.b16 %v794
        %v1517 = vunpack.c.l.b16 %v795
        %v1518 = vunpack.c.l.b16 %v796
        %v1519 = vunpack.c.h.b16 %v796
        %v1520 = vunpack.c.l.b16 %v797
        %v1521 = vunpack.c.l.b16 %v798
        %v1522 = vunpack.c.h.b16 %v798
        %v1523 = vunpack.c.l.b16 %v799
        %v1524 = vunpack.c.l.b16 %v800
        %v1525 = vunpack.c.h.b16 %v800
        %v1526 = vunpack.c.l.b16 %v801
        %v1527 = vunpack.c.l.b16 %v802
        %v1528 = vunpack.c.h.b16 %v802
        %v1529 = vunpack.c.l.b16 %v803
        %v1530 = vunpack.c.l.b16 %v804
        %v1531 = vunpack.c.h.b16 %v804
        %v1532 = vunpack.c.l.b16 %v805
        %v1533 = vunpack.c.l.b16 %v806
        %v1534 = vunpack.c.h.b16 %v806
        %v1535 = vunpack.c.l.b16 %v807
        %v1536 = vunpack.c.l.b16 %v808
        %v1537 = vunpack.c.h.b16 %v808
        %v1538 = vunpack.c.l.b16 %v809
        %v1539 = vunpack.c.l.b16 %v810
        %v1540 = vunpack.c.h.b16 %v810
        %v1541 = vunpack.c.l.b16 %v811
        %v1542 = vunpack.c.l.b16 %v812
        %v1543 = vunpack.c.h.b16 %v812
        %v1544 = vunpack.c.l.b16 %v813
        %v1545 = vunpack.c.l.b16 %v814
        %v1546 = vunpack.c.h.b16 %v814
        %v1547 = vunpack.c.l.b16 %v815
        %v1548 = vunpack.c.l.b16 %v816
        %v1549 = vunpack.c.h.b16 %v816
        %v1550 = vunpack.c.l.b16 %v817
        %v1551 = vpack.c.b16 %v1506, %v1503
        %v1552 = vpack.c.b16 %v1507, %v1504
        %v1553 = vpack.c.b16 %v1508, %v1505
        %v1554 = vpack.c.b16 %v1512, %v1509
        %v1555 = vpack.c.b16 %v1513, %v1510
        %v1556 = vpack.c.b16 %v1514, %v1511
        %v1557 = vpack.c.b16 %v1518, %v1515
        %v1558 = vpack.c.b16 %v1519, %v1516
        %v1559 = vpack.c.b16 %v1520, %v1517
        %v1560 = vpack.c.b16 %v1524, %v1521
        %v1561 = vpack.c.b16 %v1525, %v1522
        %v1562 = vpack.c.b16 %v1526, %v1523
        %v1563 = vpack.c.b16 %v1530, %v1527
        %v1564 = vpack.c.b16 %v1531, %v1528
        %v1565 = vpack.c.b16 %v1532, %v1529
        %v1566 = vpack.c.b16 %v1536, %v1533
        %v1567 = vpack.c.b16 %v1537, %v1534
        %v1568 = vpack.c.b16 %v1538, %v1535
        %v1569 = vpack.c.b16 %v1542, %v1539
        %v1570 = vpack.c.b16 %v1543, %v1540
        %v1571 = vpack.c.b16 %v1544, %v1541
        %v1572 = vpack.c.b16 %v1548, %v1545
        %v1573 = vpack.c.b16 %v1549, %v1546
        %v1574 = vpack.c.b16 %v1550, %v1547
        %1599 = vmatprep.subr.bf16.mxu0 %v1552
        %1600 = vmatpush1.bf16.msra.mxu0 %v1551
        %1601 = vmatprep.subr.bf16.mxu0 %v1555
        %1602 = vmatpush1.bf16.msra.mxu0 %v1554
        %1603 = vmatprep.subr.bf16.mxu0 %v1558
        %1604 = vmatpush1.bf16.msra.mxu0 %v1557
        %1605 = vmatprep.subr.bf16.mxu0 %v1561
        %1606 = vmatpush1.bf16.msra.mxu0 %v1560
        %1607 = vmatprep.subr.bf16.mxu0 %v1564
        %1608 = vmatpush1.bf16.msra.mxu0 %v1563
        %1609 = vmatprep.subr.bf16.mxu0 %v1567
        %1610 = vmatpush1.bf16.msra.mxu0 %v1566
        %1611 = vmatprep.subr.bf16.mxu0 %v1570
        %1612 = vmatpush1.bf16.msra.mxu0 %v1569
        %1613 = vmatprep.subr.bf16.mxu0 %v1573
        %1614 = vmatpush1.bf16.msra.mxu0 %v1572
        %1615 = vmatprep.subr.bf16.mxu0 0
        %1616 = vmatpush1.bf16.msra.mxu0 0
        %1617 = vmatprep.subr.bf16.mxu0 0
        %1618 = vmatpush1.bf16.msra.mxu0 0
        %1619 = vmatprep.subr.bf16.mxu0 0
        %1620 = vmatpush1.bf16.msra.mxu0 0
        %1621 = vmatprep.subr.bf16.mxu0 0
        %1622 = vmatpush1.bf16.msra.mxu0 0
        %1623 = vmatprep.subr.bf16.mxu0 0
        %1624 = vmatpush1.bf16.msra.mxu0 0
        %1625 = vmatprep.subr.bf16.mxu0 0
        %1626 = vmatpush1.bf16.msra.mxu0 0
        %1627 = vmatprep.subr.bf16.mxu0 0
        %1628 = vmatpush1.bf16.msra.mxu0 0
        %1629 = vmatprep.subr.bf16.mxu0 0
        %1630 = vmatpush1.bf16.msra.mxu0 0
        %1631 = vmatprep.mubr.bf16.mxu0 0
        %1632 = vmatmul.mubr.bf16.gmra.mrb[0].mxu0 %v1455
        %v1633 = vpop.f32.mrb[0].mxu0
        %v1634 = vadd.f32 %v1248, %v1633
        %v1635 = vpop.f32.mrb[0].mxu0
        %v1636 = vadd.f32 %v1250, %v1635
        %v1637 = vpop.f32.mrb[0].mxu0
        %v1638 = vadd.f32 %v1252, %v1637
        %v1639 = vpop.f32.mrb[0].mxu0
        %v1640 = vadd.f32 %v1254, %v1639
        %1641 = vmatprep.mubr.bf16.mxu0 0
        %1642 = vmatmul.mubr.bf16.gmra.mrb[0].mxu0 %v1456
        %v1643 = vpop.f32.mrb[0].mxu0
        %v1644 = vadd.f32 %v1258, %v1643
        %v1645 = vpop.f32.mrb[0].mxu0
        %v1646 = vadd.f32 %v1260, %v1645
        %v1647 = vpop.f32.mrb[0].mxu0
        %v1648 = vadd.f32 %v1262, %v1647
        %v1649 = vpop.f32.mrb[0].mxu0
        %v1650 = vadd.f32 %v1264, %v1649
        %1651 = vmatprep.mubr.bf16.mxu0 0
        %1652 = vmatmul.mubr.bf16.gmra.mrb[0].mxu0 %v1457
        %v1653 = vpop.f32.mrb[0].mxu0
        %v1654 = vadd.f32 %v1268, %v1653
        %v1655 = vpop.f32.mrb[0].mxu0
        %v1656 = vadd.f32 %v1270, %v1655
        %v1657 = vpop.f32.mrb[0].mxu0
        %v1658 = vadd.f32 %v1272, %v1657
        %v1659 = vpop.f32.mrb[0].mxu0
        %v1660 = vadd.f32 %v1274, %v1659
        %1661 = vmatprep.mubr.bf16.mxu0 0
        %1662 = vmatmul.mubr.bf16.gmra.mrb[0].mxu0 %v1458
        %v1663 = vpop.f32.mrb[0].mxu0
        %v1664 = vadd.f32 %v1278, %v1663
        %v1665 = vpop.f32.mrb[0].mxu0
        %v1666 = vadd.f32 %v1280, %v1665
        %v1667 = vpop.f32.mrb[0].mxu0
        %v1668 = vadd.f32 %v1282, %v1667
        %v1669 = vpop.f32.mrb[0].mxu0
        %v1670 = vadd.f32 %v1284, %v1669
        %1671 = vmatprep.mubr.bf16.mxu0 0
        %1672 = vmatmul.mubr.bf16.gmra.mrb[0].mxu0 %v1459
        %v1673 = vpop.f32.mrb[0].mxu0
        %v1674 = vadd.f32 %v1288, %v1673
        %v1675 = vpop.f32.mrb[0].mxu0
        %v1676 = vadd.f32 %v1290, %v1675
        %v1677 = vpop.f32.mrb[0].mxu0
        %v1678 = vadd.f32 %v1292, %v1677
        %v1679 = vpop.f32.mrb[0].mxu0
        %v1680 = vadd.f32 %v1294, %v1679
        %1681 = vmatprep.mubr.bf16.mxu0 0
        %1682 = vmatmul.mubr.bf16.gmra.mrb[0].mxu0 %v1460
        %v1683 = vpop.f32.mrb[0].mxu0
        %v1684 = vadd.f32 %v1298, %v1683
        %v1685 = vpop.f32.mrb[0].mxu0
        %v1686 = vadd.f32 %v1300, %v1685
        %v1687 = vpop.f32.mrb[0].mxu0
        %v1688 = vadd.f32 %v1302, %v1687
        %v1689 = vpop.f32.mrb[0].mxu0
        %v1690 = vadd.f32 %v1304, %v1689
        %1691 = vmatprep.mubr.bf16.mxu0 0
        %1692 = vmatmul.mubr.bf16.gmra.mrb[0].mxu0 %v1461
        %v1693 = vpop.f32.mrb[0].mxu0
        %v1694 = vadd.f32 %v1308, %v1693
        %v1695 = vpop.f32.mrb[0].mxu0
        %v1696 = vadd.f32 %v1310, %v1695
        %v1697 = vpop.f32.mrb[0].mxu0
        %v1698 = vadd.f32 %v1312, %v1697
        %v1699 = vpop.f32.mrb[0].mxu0
        %v1700 = vadd.f32 %v1314, %v1699
        %1701 = vmatprep.mubr.bf16.mxu0 0
        %1702 = vmatmul.mubr.bf16.gmra.mrb[0].mxu0 %v1462
        %v1703 = vpop.f32.mrb[0].mxu0
        %v1704 = vadd.f32 %v1318, %v1703
        %v1705 = vpop.f32.mrb[0].mxu0
        %v1706 = vadd.f32 %v1320, %v1705
        %v1707 = vpop.f32.mrb[0].mxu0
        %v1708 = vadd.f32 %v1322, %v1707
        %v1709 = vpop.f32.mrb[0].mxu0
        %v1710 = vadd.f32 %v1324, %v1709
        %1711 = vdwg.mxu0
        %1712 = vmatprep.subr.bf16.mxu0 0
        %1713 = vmatpush1.bf16.msra.mxu0 %v1553
        %1714 = vmatprep.subr.bf16.mxu0 0
        %1715 = vmatpush1.bf16.msra.mxu0 %v1556
        %1716 = vmatprep.subr.bf16.mxu0 0
        %1717 = vmatpush1.bf16.msra.mxu0 %v1559
        %1718 = vmatprep.subr.bf16.mxu0 0
        %1719 = vmatpush1.bf16.msra.mxu0 %v1562
        %1720 = vmatprep.subr.bf16.mxu0 0
        %1721 = vmatpush1.bf16.msra.mxu0 %v1565
        %1722 = vmatprep.subr.bf16.mxu0 0
        %1723 = vmatpush1.bf16.msra.mxu0 %v1568
        %1724 = vmatprep.subr.bf16.mxu0 0
        %1725 = vmatpush1.bf16.msra.mxu0 %v1571
        %1726 = vmatprep.subr.bf16.mxu0 0
        %1727 = vmatpush1.bf16.msra.mxu0 %v1574
        %1728 = vmatprep.subr.bf16.mxu0 0
        %1729 = vmatpush1.bf16.msra.mxu0 0
        %1730 = vmatprep.subr.bf16.mxu0 0
        %1731 = vmatpush1.bf16.msra.mxu0 0
        %1732 = vmatprep.subr.bf16.mxu0 0
        %1733 = vmatpush1.bf16.msra.mxu0 0
        %1734 = vmatprep.subr.bf16.mxu0 0
        %1735 = vmatpush1.bf16.msra.mxu0 0
        %1736 = vmatprep.subr.bf16.mxu0 0
        %1737 = vmatpush1.bf16.msra.mxu0 0
        %1738 = vmatprep.subr.bf16.mxu0 0
        %1739 = vmatpush1.bf16.msra.mxu0 0
        %1740 = vmatprep.subr.bf16.mxu0 0
        %1741 = vmatpush1.bf16.msra.mxu0 0
        %1742 = vmatprep.subr.bf16.mxu0 0
        %1743 = vmatpush1.bf16.msra.mxu0 0
        %1744 = vmatprep.mubr.bf16.mxu0 0
        %1745 = vmatmul.mubr.bf16.gmra.mrb[0].mxu0 %v1455
        %v1746 = vpop.f32.mrb[0].mxu0
        %v1747 = vadd.f32 %v1361, %v1746
        %v1748 = vpop.f32.mrb[0].mxu0
        %v1749 = vpop.f32.mrb[0].mxu0
        %v1750 = vadd.f32 %v1364, %v1749
        %v1751 = vpop.f32.mrb[0].mxu0
        %1752 = vmatprep.mubr.bf16.mxu0 0
        %1753 = vmatmul.mubr.bf16.gmra.mrb[0].mxu0 %v1456
        %v1754 = vpop.f32.mrb[0].mxu0
        %v1755 = vadd.f32 %v1369, %v1754
        %v1756 = vpop.f32.mrb[0].mxu0
        %v1757 = vpop.f32.mrb[0].mxu0
        %v1758 = vadd.f32 %v1372, %v1757
        %v1759 = vpop.f32.mrb[0].mxu0
        %1760 = vmatprep.mubr.bf16.mxu0 0
        %1761 = vmatmul.mubr.bf16.gmra.mrb[0].mxu0 %v1457
        %v1762 = vpop.f32.mrb[0].mxu0
        %v1763 = vadd.f32 %v1377, %v1762
        %v1764 = vpop.f32.mrb[0].mxu0
        %v1765 = vpop.f32.mrb[0].mxu0
        %v1766 = vadd.f32 %v1380, %v1765
        %v1767 = vpop.f32.mrb[0].mxu0
        %1768 = vmatprep.mubr.bf16.mxu0 0
        %1769 = vmatmul.mubr.bf16.gmra.mrb[0].mxu0 %v1458
        %v1770 = vpop.f32.mrb[0].mxu0
        %v1771 = vadd.f32 %v1385, %v1770
        %v1772 = vpop.f32.mrb[0].mxu0
        %v1773 = vpop.f32.mrb[0].mxu0
        %v1774 = vadd.f32 %v1388, %v1773
        %v1775 = vpop.f32.mrb[0].mxu0
        %1776 = vmatprep.mubr.bf16.mxu0 0
        %1777 = vmatmul.mubr.bf16.gmra.mrb[0].mxu0 %v1459
        %v1778 = vpop.f32.mrb[0].mxu0
        %v1779 = vadd.f32 %v1393, %v1778
        %v1780 = vpop.f32.mrb[0].mxu0
        %v1781 = vpop.f32.mrb[0].mxu0
        %v1782 = vadd.f32 %v1396, %v1781
        %v1783 = vpop.f32.mrb[0].mxu0
        %1784 = vmatprep.mubr.bf16.mxu0 0
        %1785 = vmatmul.mubr.bf16.gmra.mrb[0].mxu0 %v1460
        %v1786 = vpop.f32.mrb[0].mxu0
        %v1787 = vadd.f32 %v1401, %v1786
        %v1788 = vpop.f32.mrb[0].mxu0
        %v1789 = vpop.f32.mrb[0].mxu0
        %v1790 = vadd.f32 %v1404, %v1789
        %v1791 = vpop.f32.mrb[0].mxu0
        %1792 = vmatprep.mubr.bf16.mxu0 0
        %1793 = vmatmul.mubr.bf16.gmra.mrb[0].mxu0 %v1461
        %v1794 = vpop.f32.mrb[0].mxu0
        %v1795 = vadd.f32 %v1409, %v1794
        %v1796 = vpop.f32.mrb[0].mxu0
        %v1797 = vpop.f32.mrb[0].mxu0
        %v1798 = vadd.f32 %v1412, %v1797
        %v1799 = vpop.f32.mrb[0].mxu0
        %1800 = vmatprep.mubr.bf16.mxu0 0
        %1801 = vmatmul.mubr.bf16.gmra.mrb[0].mxu0 %v1462
        %v1802 = vpop.f32.mrb[0].mxu0
        %v1803 = vadd.f32 %v1417, %v1802
        %v1804 = vpop.f32.mrb[0].mxu0
        %v1805 = vpop.f32.mrb[0].mxu0
        %v1806 = vadd.f32 %v1420, %v1805
        %v1807 = vpop.f32.mrb[0].mxu0
        %1808 = vdwg.mxu0
        %v1809 = vld [vmem:[#allocation2] sm:$0xe]
        %v1810 = vld [vmem:[#allocation2 + $0xc] sm:$0xe]
        %v1811 = vld [vmem:[#allocation2 + $0x18] sm:$0xe]
        %v1812 = vld [vmem:[#allocation2 + $0x24] sm:$0xe]
        %v1813 = vld [vmem:[#allocation2 + $0x30] sm:$0xe]
        %v1814 = vld [vmem:[#allocation2 + $0x3c] sm:$0xe]
        %v1815 = vld [vmem:[#allocation2 + $0x48] sm:$0xe]
        %v1816 = vld [vmem:[#allocation2 + $0x54] sm:$0xe]
        %vm1833 = vcmask 1042432
        %vm1834 = vcmask 1046532
        %vm1835 = vmor %vm1833, %vm1834
        %v1836 = vrot.slane %v1809, 5
        %v1837 = vrot.slane %v1836, 4
        %v1838 = vrot.slane %v771, 5
        %v1839 = vsel %vm1835, %v1837, %v1838
        %v1840 = vrot.slane %v1838, 4
        %v1841 = vrot.slane %v818, 5
        %v1842 = vsel %vm1835, %v1840, %v1841
        %v1843 = vrot.slane %v1810, 5
        %v1844 = vrot.slane %v1843, 4
        %v1845 = vrot.slane %v773, 5
        %v1846 = vsel %vm1835, %v1844, %v1845
        %v1847 = vrot.slane %v1845, 4
        %v1848 = vrot.slane %v819, 5
        %v1849 = vsel %vm1835, %v1847, %v1848
        %v1850 = vrot.slane %v1811, 5
        %v1851 = vrot.slane %v1850, 4
        %v1852 = vrot.slane %v775, 5
        %v1853 = vsel %vm1835, %v1851, %v1852
        %v1854 = vrot.slane %v1852, 4
        %v1855 = vrot.slane %v820, 5
        %v1856 = vsel %vm1835, %v1854, %v1855
        %v1857 = vrot.slane %v1812, 5
        %v1858 = vrot.slane %v1857, 4
        %v1859 = vrot.slane %v777, 5
        %v1860 = vsel %vm1835, %v1858, %v1859
        %v1861 = vrot.slane %v1859, 4
        %v1862 = vrot.slane %v821, 5
        %v1863 = vsel %vm1835, %v1861, %v1862
        %v1864 = vrot.slane %v1813, 5
        %v1865 = vrot.slane %v1864, 4
        %v1866 = vrot.slane %v779, 5
        %v1867 = vsel %vm1835, %v1865, %v1866
        %v1868 = vrot.slane %v1866, 4
        %v1869 = vrot.slane %v822, 5
        %v1870 = vsel %vm1835, %v1868, %v1869
        %v1871 = vrot.slane %v1814, 5
        %v1872 = vrot.slane %v1871, 4
        %v1873 = vrot.slane %v781, 5
        %v1874 = vsel %vm1835, %v1872, %v1873
        %v1875 = vrot.slane %v1873, 4
        %v1876 = vrot.slane %v823, 5
        %v1877 = vsel %vm1835, %v1875, %v1876
        %v1878 = vrot.slane %v1815, 5
        %v1879 = vrot.slane %v1878, 4
        %v1880 = vrot.slane %v783, 5
        %v1881 = vsel %vm1835, %v1879, %v1880
        %v1882 = vrot.slane %v1880, 4
        %v1883 = vrot.slane %v824, 5
        %v1884 = vsel %vm1835, %v1882, %v1883
        %v1885 = vrot.slane %v1816, 5
        %v1886 = vrot.slane %v1885, 4
        %v1887 = vrot.slane %v785, 5
        %v1888 = vsel %vm1835, %v1886, %v1887
        %v1889 = vrot.slane %v1887, 4
        %v1890 = vrot.slane %v825, 5
        %v1891 = vsel %vm1835, %v1889, %v1890
        %v1892 = vld [vmem:[#allocation9 + $0x180] sm:$0xff]
        %v1893 = vld [vmem:[#allocation9 + $0x188] sm:$0xf]
        %v1894 = vld [vmem:[#allocation9 + $0x18c] sm:$0xff]
        %v1895 = vld [vmem:[#allocation9 + $0x194] sm:$0xf]
        %v1896 = vld [vmem:[#allocation9 + $0x198] sm:$0xff]
        %v1897 = vld [vmem:[#allocation9 + $0x1a0] sm:$0xf]
        %v1898 = vld [vmem:[#allocation9 + $0x1a4] sm:$0xff]
        %v1899 = vld [vmem:[#allocation9 + $0x1ac] sm:$0xf]
        %v1900 = vld [vmem:[#allocation9 + $0x1b0] sm:$0xff]
        %v1901 = vld [vmem:[#allocation9 + $0x1b8] sm:$0xf]
        %v1902 = vld [vmem:[#allocation9 + $0x1bc] sm:$0xff]
        %v1903 = vld [vmem:[#allocation9 + $0x1c4] sm:$0xf]
        %v1904 = vld [vmem:[#allocation9 + $0x1c8] sm:$0xff]
        %v1905 = vld [vmem:[#allocation9 + $0x1d0] sm:$0xf]
        %v1906 = vld [vmem:[#allocation9 + $0x1d4] sm:$0xff]
        %v1907 = vld [vmem:[#allocation9 + $0x1dc] sm:$0xf]
        %v1908 = vld [vmem:[#allocation9 + $0x1e0] sm:$0xff]
        %v1909 = vld [vmem:[#allocation9 + $0x1e8] sm:$0xf]
        %v1910 = vld [vmem:[#allocation9 + $0x1ec] sm:$0xff]
        %v1911 = vld [vmem:[#allocation9 + $0x1f4] sm:$0xf]
        %v1912 = vld [vmem:[#allocation9 + $0x1f8] sm:$0xff]
        %v1913 = vld [vmem:[#allocation9 + $0x200] sm:$0xf]
        %v1914 = vld [vmem:[#allocation9 + $0x204] sm:$0xff]
        %v1915 = vld [vmem:[#allocation9 + $0x20c] sm:$0xf]
        %v1916 = vld [vmem:[#allocation9 + $0x210] sm:$0xff]
        %v1917 = vld [vmem:[#allocation9 + $0x218] sm:$0xf]
        %v1918 = vld [vmem:[#allocation9 + $0x21c] sm:$0xff]
        %v1919 = vld [vmem:[#allocation9 + $0x224] sm:$0xf]
        %v1920 = vld [vmem:[#allocation9 + $0x228] sm:$0xff]
        %v1921 = vld [vmem:[#allocation9 + $0x230] sm:$0xf]
        %v1922 = vld [vmem:[#allocation9 + $0x234] sm:$0xff]
        %v1923 = vld [vmem:[#allocation9 + $0x23c] sm:$0xf]
        %v1924 = vunpack.c.l.b16 %v1839
        %v1925 = vunpack.c.l.b16 %v1842
        %v1926 = vunpack.c.l.b16 %v1846
        %v1927 = vunpack.c.l.b16 %v1849
        %v1928 = vunpack.c.l.b16 %v1853
        %v1929 = vunpack.c.l.b16 %v1856
        %v1930 = vunpack.c.l.b16 %v1860
        %v1931 = vunpack.c.l.b16 %v1863
        %v1932 = vunpack.c.l.b16 %v1867
        %v1933 = vunpack.c.l.b16 %v1870
        %v1934 = vunpack.c.l.b16 %v1874
        %v1935 = vunpack.c.l.b16 %v1877
        %v1936 = vunpack.c.l.b16 %v1881
        %v1937 = vunpack.c.l.b16 %v1884
        %v1938 = vunpack.c.l.b16 %v1888
        %v1939 = vunpack.c.l.b16 %v1891
        %v1940 = vpack.c.b16 %v1925, %v1924
        %v1941 = vpack.c.b16 %v1927, %v1926
        %v1942 = vpack.c.b16 %v1929, %v1928
        %v1943 = vpack.c.b16 %v1931, %v1930
        %v1944 = vpack.c.b16 %v1933, %v1932
        %v1945 = vpack.c.b16 %v1935, %v1934
        %v1946 = vpack.c.b16 %v1937, %v1936
        %v1947 = vpack.c.b16 %v1939, %v1938
        %v1988 = vunpack.c.l.b16 %v1892
        %v1989 = vunpack.c.h.b16 %v1892
        %v1990 = vunpack.c.l.b16 %v1893
        %v1991 = vunpack.c.l.b16 %v1894
        %v1992 = vunpack.c.h.b16 %v1894
        %v1993 = vunpack.c.l.b16 %v1895
        %v1994 = vunpack.c.l.b16 %v1896
        %v1995 = vunpack.c.h.b16 %v1896
        %v1996 = vunpack.c.l.b16 %v1897
        %v1997 = vunpack.c.l.b16 %v1898
        %v1998 = vunpack.c.h.b16 %v1898
        %v1999 = vunpack.c.l.b16 %v1899
        %v2000 = vunpack.c.l.b16 %v1900
        %v2001 = vunpack.c.h.b16 %v1900
        %v2002 = vunpack.c.l.b16 %v1901
        %v2003 = vunpack.c.l.b16 %v1902
        %v2004 = vunpack.c.h.b16 %v1902
        %v2005 = vunpack.c.l.b16 %v1903
        %v2006 = vunpack.c.l.b16 %v1904
        %v2007 = vunpack.c.h.b16 %v1904
        %v2008 = vunpack.c.l.b16 %v1905
        %v2009 = vunpack.c.l.b16 %v1906
        %v2010 = vunpack.c.h.b16 %v1906
        %v2011 = vunpack.c.l.b16 %v1907
        %v2012 = vunpack.c.l.b16 %v1908
        %v2013 = vunpack.c.h.b16 %v1908
        %v2014 = vunpack.c.l.b16 %v1909
        %v2015 = vunpack.c.l.b16 %v1910
        %v2016 = vunpack.c.h.b16 %v1910
        %v2017 = vunpack.c.l.b16 %v1911
        %v2018 = vunpack.c.l.b16 %v1912
        %v2019 = vunpack.c.h.b16 %v1912
        %v2020 = vunpack.c.l.b16 %v1913
        %v2021 = vunpack.c.l.b16 %v1914
        %v2022 = vunpack.c.h.b16 %v1914
        %v2023 = vunpack.c.l.b16 %v1915
        %v2024 = vunpack.c.l.b16 %v1916
        %v2025 = vunpack.c.h.b16 %v1916
        %v2026 = vunpack.c.l.b16 %v1917
        %v2027 = vunpack.c.l.b16 %v1918
        %v2028 = vunpack.c.h.b16 %v1918
        %v2029 = vunpack.c.l.b16 %v1919
        %v2030 = vunpack.c.l.b16 %v1920
        %v2031 = vunpack.c.h.b16 %v1920
        %v2032 = vunpack.c.l.b16 %v1921
        %v2033 = vunpack.c.l.b16 %v1922
        %v2034 = vunpack.c.h.b16 %v1922
        %v2035 = vunpack.c.l.b16 %v1923
        %v2036 = vpack.c.b16 %v1991, %v1988
        %v2037 = vpack.c.b16 %v1992, %v1989
        %v2038 = vpack.c.b16 %v1993, %v1990
        %v2039 = vpack.c.b16 %v1997, %v1994
        %v2040 = vpack.c.b16 %v1998, %v1995
        %v2041 = vpack.c.b16 %v1999, %v1996
        %v2042 = vpack.c.b16 %v2003, %v2000
        %v2043 = vpack.c.b16 %v2004, %v2001
        %v2044 = vpack.c.b16 %v2005, %v2002
        %v2045 = vpack.c.b16 %v2009, %v2006
        %v2046 = vpack.c.b16 %v2010, %v2007
        %v2047 = vpack.c.b16 %v2011, %v2008
        %v2048 = vpack.c.b16 %v2015, %v2012
        %v2049 = vpack.c.b16 %v2016, %v2013
        %v2050 = vpack.c.b16 %v2017, %v2014
        %v2051 = vpack.c.b16 %v2021, %v2018
        %v2052 = vpack.c.b16 %v2022, %v2019
        %v2053 = vpack.c.b16 %v2023, %v2020
        %v2054 = vpack.c.b16 %v2027, %v2024
        %v2055 = vpack.c.b16 %v2028, %v2025
        %v2056 = vpack.c.b16 %v2029, %v2026
        %v2057 = vpack.c.b16 %v2033, %v2030
        %v2058 = vpack.c.b16 %v2034, %v2031
        %v2059 = vpack.c.b16 %v2035, %v2032
        %2084 = vmatprep.subr.bf16.mxu0 %v2037
        %2085 = vmatpush1.bf16.msra.mxu0 %v2036
        %2086 = vmatprep.subr.bf16.mxu0 %v2040
        %2087 = vmatpush1.bf16.msra.mxu0 %v2039
        %2088 = vmatprep.subr.bf16.mxu0 %v2043
        %2089 = vmatpush1.bf16.msra.mxu0 %v2042
        %2090 = vmatprep.subr.bf16.mxu0 %v2046
        %2091 = vmatpush1.bf16.msra.mxu0 %v2045
        %2092 = vmatprep.subr.bf16.mxu0 %v2049
        %2093 = vmatpush1.bf16.msra.mxu0 %v2048
        %2094 = vmatprep.subr.bf16.mxu0 %v2052
        %2095 = vmatpush1.bf16.msra.mxu0 %v2051
        %2096 = vmatprep.subr.bf16.mxu0 %v2055
        %2097 = vmatpush1.bf16.msra.mxu0 %v2054
        %2098 = vmatprep.subr.bf16.mxu0 %v2058
        %2099 = vmatpush1.bf16.msra.mxu0 %v2057
        %2100 = vmatprep.subr.bf16.mxu0 0
        %2101 = vmatpush1.bf16.msra.mxu0 0
        %2102 = vmatprep.subr.bf16.mxu0 0
        %2103 = vmatpush1.bf16.msra.mxu0 0
        %2104 = vmatprep.subr.bf16.mxu0 0
        %2105 = vmatpush1.bf16.msra.mxu0 0
        %2106 = vmatprep.subr.bf16.mxu0 0
        %2107 = vmatpush1.bf16.msra.mxu0 0
        %2108 = vmatprep.subr.bf16.mxu0 0
        %2109 = vmatpush1.bf16.msra.mxu0 0
        %2110 = vmatprep.subr.bf16.mxu0 0
        %2111 = vmatpush1.bf16.msra.mxu0 0
        %2112 = vmatprep.subr.bf16.mxu0 0
        %2113 = vmatpush1.bf16.msra.mxu0 0
        %2114 = vmatprep.subr.bf16.mxu0 0
        %2115 = vmatpush1.bf16.msra.mxu0 0
        %2116 = vmatprep.mubr.bf16.mxu0 0
        %2117 = vmatmul.mubr.bf16.gmra.mrb[0].mxu0 %v1940
        %v2118 = vpop.f32.mrb[0].mxu0
        %v2119 = vadd.f32 0.0, %v2118
        %v2120 = vpop.f32.mrb[0].mxu0
        %v2121 = vadd.f32 0.0, %v2120
        %v2122 = vpop.f32.mrb[0].mxu0
        %v2123 = vadd.f32 0.0, %v2122
        %v2124 = vpop.f32.mrb[0].mxu0
        %v2125 = vadd.f32 0.0, %v2124
        %2126 = vmatprep.mubr.bf16.mxu0 0
        %2127 = vmatmul.mubr.bf16.gmra.mrb[0].mxu0 %v1941
        %v2128 = vpop.f32.mrb[0].mxu0
        %v2129 = vadd.f32 0.0, %v2128
        %v2130 = vpop.f32.mrb[0].mxu0
        %v2131 = vadd.f32 0.0, %v2130
        %v2132 = vpop.f32.mrb[0].mxu0
        %v2133 = vadd.f32 0.0, %v2132
        %v2134 = vpop.f32.mrb[0].mxu0
        %v2135 = vadd.f32 0.0, %v2134
        %2136 = vmatprep.mubr.bf16.mxu0 0
        %2137 = vmatmul.mubr.bf16.gmra.mrb[0].mxu0 %v1942
        %v2138 = vpop.f32.mrb[0].mxu0
        %v2139 = vadd.f32 0.0, %v2138
        %v2140 = vpop.f32.mrb[0].mxu0
        %v2141 = vadd.f32 0.0, %v2140
        %v2142 = vpop.f32.mrb[0].mxu0
        %v2143 = vadd.f32 0.0, %v2142
        %v2144 = vpop.f32.mrb[0].mxu0
        %v2145 = vadd.f32 0.0, %v2144
        %2146 = vmatprep.mubr.bf16.mxu0 0
        %2147 = vmatmul.mubr.bf16.gmra.mrb[0].mxu0 %v1943
        %v2148 = vpop.f32.mrb[0].mxu0
        %v2149 = vadd.f32 0.0, %v2148
        %v2150 = vpop.f32.mrb[0].mxu0
        %v2151 = vadd.f32 0.0, %v2150
        %v2152 = vpop.f32.mrb[0].mxu0
        %v2153 = vadd.f32 0.0, %v2152
        %v2154 = vpop.f32.mrb[0].mxu0
        %v2155 = vadd.f32 0.0, %v2154
        %2156 = vmatprep.mubr.bf16.mxu0 0
        %2157 = vmatmul.mubr.bf16.gmra.mrb[0].mxu0 %v1944
        %v2158 = vpop.f32.mrb[0].mxu0
        %v2159 = vadd.f32 0.0, %v2158
        %v2160 = vpop.f32.mrb[0].mxu0
        %v2161 = vadd.f32 0.0, %v2160
        %v2162 = vpop.f32.mrb[0].mxu0
        %v2163 = vadd.f32 0.0, %v2162
        %v2164 = vpop.f32.mrb[0].mxu0
        %v2165 = vadd.f32 0.0, %v2164
        %2166 = vmatprep.mubr.bf16.mxu0 0
        %2167 = vmatmul.mubr.bf16.gmra.mrb[0].mxu0 %v1945
        %v2168 = vpop.f32.mrb[0].mxu0
        %v2169 = vadd.f32 0.0, %v2168
        %v2170 = vpop.f32.mrb[0].mxu0
        %v2171 = vadd.f32 0.0, %v2170
        %v2172 = vpop.f32.mrb[0].mxu0
        %v2173 = vadd.f32 0.0, %v2172
        %v2174 = vpop.f32.mrb[0].mxu0
        %v2175 = vadd.f32 0.0, %v2174
        %2176 = vmatprep.mubr.bf16.mxu0 0
        %2177 = vmatmul.mubr.bf16.gmra.mrb[0].mxu0 %v1946
        %v2178 = vpop.f32.mrb[0].mxu0
        %v2179 = vadd.f32 0.0, %v2178
        %v2180 = vpop.f32.mrb[0].mxu0
        %v2181 = vadd.f32 0.0, %v2180
        %v2182 = vpop.f32.mrb[0].mxu0
        %v2183 = vadd.f32 0.0, %v2182
        %v2184 = vpop.f32.mrb[0].mxu0
        %v2185 = vadd.f32 0.0, %v2184
        %2186 = vmatprep.mubr.bf16.mxu0 0
        %2187 = vmatmul.mubr.bf16.gmra.mrb[0].mxu0 %v1947
        %v2188 = vpop.f32.mrb[0].mxu0
        %v2189 = vadd.f32 0.0, %v2188
        %v2190 = vpop.f32.mrb[0].mxu0
        %v2191 = vadd.f32 0.0, %v2190
        %v2192 = vpop.f32.mrb[0].mxu0
        %v2193 = vadd.f32 0.0, %v2192
        %v2194 = vpop.f32.mrb[0].mxu0
        %v2195 = vadd.f32 0.0, %v2194
        %2196 = vdwg.mxu0
        %2197 = vmatprep.subr.bf16.mxu0 0
        %2198 = vmatpush1.bf16.msra.mxu0 %v2038
        %2199 = vmatprep.subr.bf16.mxu0 0
        %2200 = vmatpush1.bf16.msra.mxu0 %v2041
        %2201 = vmatprep.subr.bf16.mxu0 0
        %2202 = vmatpush1.bf16.msra.mxu0 %v2044
        %2203 = vmatprep.subr.bf16.mxu0 0
        %2204 = vmatpush1.bf16.msra.mxu0 %v2047
        %2205 = vmatprep.subr.bf16.mxu0 0
        %2206 = vmatpush1.bf16.msra.mxu0 %v2050
        %2207 = vmatprep.subr.bf16.mxu0 0
        %2208 = vmatpush1.bf16.msra.mxu0 %v2053
        %2209 = vmatprep.subr.bf16.mxu0 0
        %2210 = vmatpush1.bf16.msra.mxu0 %v2056
        %2211 = vmatprep.subr.bf16.mxu0 0
        %2212 = vmatpush1.bf16.msra.mxu0 %v2059
        %2213 = vmatprep.subr.bf16.mxu0 0
        %2214 = vmatpush1.bf16.msra.mxu0 0
        %2215 = vmatprep.subr.bf16.mxu0 0
        %2216 = vmatpush1.bf16.msra.mxu0 0
        %2217 = vmatprep.subr.bf16.mxu0 0
        %2218 = vmatpush1.bf16.msra.mxu0 0
        %2219 = vmatprep.subr.bf16.mxu0 0
        %2220 = vmatpush1.bf16.msra.mxu0 0
        %2221 = vmatprep.subr.bf16.mxu0 0
        %2222 = vmatpush1.bf16.msra.mxu0 0
        %2223 = vmatprep.subr.bf16.mxu0 0
        %2224 = vmatpush1.bf16.msra.mxu0 0
        %2225 = vmatprep.subr.bf16.mxu0 0
        %2226 = vmatpush1.bf16.msra.mxu0 0
        %2227 = vmatprep.subr.bf16.mxu0 0
        %2228 = vmatpush1.bf16.msra.mxu0 0
        %2229 = vmatprep.mubr.bf16.mxu0 0
        %2230 = vmatmul.mubr.bf16.gmra.mrb[0].mxu0 %v1940
        %v2231 = vpop.f32.mrb[0].mxu0
        %v2232 = vadd.f32 0.0, %v2231
        %v2233 = vpop.f32.mrb[0].mxu0
        %v2234 = vpop.f32.mrb[0].mxu0
        %v2235 = vadd.f32 0.0, %v2234
        %v2236 = vpop.f32.mrb[0].mxu0
        %2237 = vmatprep.mubr.bf16.mxu0 0
        %2238 = vmatmul.mubr.bf16.gmra.mrb[0].mxu0 %v1941
        %v2239 = vpop.f32.mrb[0].mxu0
        %v2240 = vadd.f32 0.0, %v2239
        %v2241 = vpop.f32.mrb[0].mxu0
        %v2242 = vpop.f32.mrb[0].mxu0
        %v2243 = vadd.f32 0.0, %v2242
        %v2244 = vpop.f32.mrb[0].mxu0
        %2245 = vmatprep.mubr.bf16.mxu0 0
        %2246 = vmatmul.mubr.bf16.gmra.mrb[0].mxu0 %v1942
        %v2247 = vpop.f32.mrb[0].mxu0
        %v2248 = vadd.f32 0.0, %v2247
        %v2249 = vpop.f32.mrb[0].mxu0
        %v2250 = vpop.f32.mrb[0].mxu0
        %v2251 = vadd.f32 0.0, %v2250
        %v2252 = vpop.f32.mrb[0].mxu0
        %2253 = vmatprep.mubr.bf16.mxu0 0
        %2254 = vmatmul.mubr.bf16.gmra.mrb[0].mxu0 %v1943
        %v2255 = vpop.f32.mrb[0].mxu0
        %v2256 = vadd.f32 0.0, %v2255
        %v2257 = vpop.f32.mrb[0].mxu0
        %v2258 = vpop.f32.mrb[0].mxu0
        %v2259 = vadd.f32 0.0, %v2258
        %v2260 = vpop.f32.mrb[0].mxu0
        %2261 = vmatprep.mubr.bf16.mxu0 0
        %2262 = vmatmul.mubr.bf16.gmra.mrb[0].mxu0 %v1944
        %v2263 = vpop.f32.mrb[0].mxu0
        %v2264 = vadd.f32 0.0, %v2263
        %v2265 = vpop.f32.mrb[0].mxu0
        %v2266 = vpop.f32.mrb[0].mxu0
        %v2267 = vadd.f32 0.0, %v2266
        %v2268 = vpop.f32.mrb[0].mxu0
        %2269 = vmatprep.mubr.bf16.mxu0 0
        %2270 = vmatmul.mubr.bf16.gmra.mrb[0].mxu0 %v1945
        %v2271 = vpop.f32.mrb[0].mxu0
        %v2272 = vadd.f32 0.0, %v2271
        %v2273 = vpop.f32.mrb[0].mxu0
        %v2274 = vpop.f32.mrb[0].mxu0
        %v2275 = vadd.f32 0.0, %v2274
        %v2276 = vpop.f32.mrb[0].mxu0
        %2277 = vmatprep.mubr.bf16.mxu0 0
        %2278 = vmatmul.mubr.bf16.gmra.mrb[0].mxu0 %v1946
        %v2279 = vpop.f32.mrb[0].mxu0
        %v2280 = vadd.f32 0.0, %v2279
        %v2281 = vpop.f32.mrb[0].mxu0
        %v2282 = vpop.f32.mrb[0].mxu0
        %v2283 = vadd.f32 0.0, %v2282
        %v2284 = vpop.f32.mrb[0].mxu0
        %2285 = vmatprep.mubr.bf16.mxu0 0
        %2286 = vmatmul.mubr.bf16.gmra.mrb[0].mxu0 %v1947
        %v2287 = vpop.f32.mrb[0].mxu0
        %v2288 = vadd.f32 0.0, %v2287
        %v2289 = vpop.f32.mrb[0].mxu0
        %v2290 = vpop.f32.mrb[0].mxu0
        %v2291 = vadd.f32 0.0, %v2290
        %v2292 = vpop.f32.mrb[0].mxu0
        %2293 = vdwg.mxu0
        %v2294 = vadd.f32 %v1634, %v2119
        %v2295 = vadd.f32 %v1636, %v2121
        %v2296 = vadd.f32 %v1747, %v2232
        %v2297 = vadd.f32 %v1638, %v2123
        %v2298 = vadd.f32 %v1640, %v2125
        %v2299 = vadd.f32 %v1750, %v2235
        %v2300 = vadd.f32 %v1644, %v2129
        %v2301 = vadd.f32 %v1646, %v2131
        %v2302 = vadd.f32 %v1755, %v2240
        %v2303 = vadd.f32 %v1648, %v2133
        %v2304 = vadd.f32 %v1650, %v2135
        %v2305 = vadd.f32 %v1758, %v2243
        %v2306 = vadd.f32 %v1654, %v2139
        %v2307 = vadd.f32 %v1656, %v2141
        %v2308 = vadd.f32 %v1763, %v2248
        %v2309 = vadd.f32 %v1658, %v2143
        %v2310 = vadd.f32 %v1660, %v2145
        %v2311 = vadd.f32 %v1766, %v2251
        %v2312 = vadd.f32 %v1664, %v2149
        %v2313 = vadd.f32 %v1666, %v2151
        %v2314 = vadd.f32 %v1771, %v2256
        %v2315 = vadd.f32 %v1668, %v2153
        %v2316 = vadd.f32 %v1670, %v2155
        %v2317 = vadd.f32 %v1774, %v2259
        %v2318 = vadd.f32 %v1674, %v2159
        %v2319 = vadd.f32 %v1676, %v2161
        %v2320 = vadd.f32 %v1779, %v2264
        %v2321 = vadd.f32 %v1678, %v2163
        %v2322 = vadd.f32 %v1680, %v2165
        %v2323 = vadd.f32 %v1782, %v2267
        %v2324 = vadd.f32 %v1684, %v2169
        %v2325 = vadd.f32 %v1686, %v2171
        %v2326 = vadd.f32 %v1787, %v2272
        %v2327 = vadd.f32 %v1688, %v2173
        %v2328 = vadd.f32 %v1690, %v2175
        %v2329 = vadd.f32 %v1790, %v2275
        %v2330 = vadd.f32 %v1694, %v2179
        %v2331 = vadd.f32 %v1696, %v2181
        %v2332 = vadd.f32 %v1795, %v2280
        %v2333 = vadd.f32 %v1698, %v2183
        %v2334 = vadd.f32 %v1700, %v2185
        %v2335 = vadd.f32 %v1798, %v2283
        %v2336 = vadd.f32 %v1704, %v2189
        %v2337 = vadd.f32 %v1706, %v2191
        %v2338 = vadd.f32 %v1803, %v2288
        %v2339 = vadd.f32 %v1708, %v2193
        %v2340 = vadd.f32 %v1710, %v2195
        %v2341 = vadd.f32 %v1806, %v2291
        %v2342 = vld [vmem:[%s713] sm:$0xf]
        %v2343 = vld [vmem:[%s713 + $0x4] sm:$0xf]
        %v2344 = vld [vmem:[%s713 + $0xc] sm:$0xf]
        %v2345 = vld [vmem:[%s713 + $0x10] sm:$0xf]
        %v2346 = vld [vmem:[%s713 + $0x18] sm:$0xf]
        %v2347 = vld [vmem:[%s713 + $0x1c] sm:$0xf]
        %v2348 = vld [vmem:[%s713 + $0x24] sm:$0xf]
        %v2349 = vld [vmem:[%s713 + $0x28] sm:$0xf]
        %v2350 = vld [vmem:[%s713 + $0x30] sm:$0xf]
        %v2351 = vld [vmem:[%s713 + $0x34] sm:$0xf]
        %v2352 = vld [vmem:[%s713 + $0x3c] sm:$0xf]
        %v2353 = vld [vmem:[%s713 + $0x40] sm:$0xf]
        %v2354 = vld [vmem:[%s713 + $0x48] sm:$0xf]
        %v2355 = vld [vmem:[%s713 + $0x4c] sm:$0xf]
        %v2356 = vld [vmem:[%s713 + $0x54] sm:$0xf]
        %v2357 = vld [vmem:[%s713 + $0x58] sm:$0xf]
        %v2358 = vld [vmem:[#allocation9 + $0x240] sm:$0xff]
        %v2359 = vld [vmem:[#allocation9 + $0x248] sm:$0xf]
        %v2360 = vld [vmem:[#allocation9 + $0x24c] sm:$0xff]
        %v2361 = vld [vmem:[#allocation9 + $0x254] sm:$0xf]
        %v2362 = vld [vmem:[#allocation9 + $0x258] sm:$0xff]
        %v2363 = vld [vmem:[#allocation9 + $0x260] sm:$0xf]
        %v2364 = vld [vmem:[#allocation9 + $0x264] sm:$0xff]
        %v2365 = vld [vmem:[#allocation9 + $0x26c] sm:$0xf]
        %v2366 = vld [vmem:[#allocation9 + $0x270] sm:$0xff]
        %v2367 = vld [vmem:[#allocation9 + $0x278] sm:$0xf]
        %v2368 = vld [vmem:[#allocation9 + $0x27c] sm:$0xff]
        %v2369 = vld [vmem:[#allocation9 + $0x284] sm:$0xf]
        %v2370 = vld [vmem:[#allocation9 + $0x288] sm:$0xff]
        %v2371 = vld [vmem:[#allocation9 + $0x290] sm:$0xf]
        %v2372 = vld [vmem:[#allocation9 + $0x294] sm:$0xff]
        %v2373 = vld [vmem:[#allocation9 + $0x29c] sm:$0xf]
        %v2374 = vld [vmem:[#allocation9 + $0x2a0] sm:$0xff]
        %v2375 = vld [vmem:[#allocation9 + $0x2a8] sm:$0xf]
        %v2376 = vld [vmem:[#allocation9 + $0x2ac] sm:$0xff]
        %v2377 = vld [vmem:[#allocation9 + $0x2b4] sm:$0xf]
        %v2378 = vld [vmem:[#allocation9 + $0x2b8] sm:$0xff]
        %v2379 = vld [vmem:[#allocation9 + $0x2c0] sm:$0xf]
        %v2380 = vld [vmem:[#allocation9 + $0x2c4] sm:$0xff]
        %v2381 = vld [vmem:[#allocation9 + $0x2cc] sm:$0xf]
        %v2382 = vld [vmem:[#allocation9 + $0x2d0] sm:$0xff]
        %v2383 = vld [vmem:[#allocation9 + $0x2d8] sm:$0xf]
        %v2384 = vld [vmem:[#allocation9 + $0x2dc] sm:$0xff]
        %v2385 = vld [vmem:[#allocation9 + $0x2e4] sm:$0xf]
        %v2386 = vld [vmem:[#allocation9 + $0x2e8] sm:$0xff]
        %v2387 = vld [vmem:[#allocation9 + $0x2f0] sm:$0xf]
        %v2388 = vld [vmem:[#allocation9 + $0x2f4] sm:$0xff]
        %v2389 = vld [vmem:[#allocation9 + $0x2fc] sm:$0xf]
        %v2406 = vunpack.c.l.b16 %v2342
        %v2407 = vunpack.c.l.b16 %v2343
        %v2408 = vunpack.c.l.b16 %v2344
        %v2409 = vunpack.c.l.b16 %v2345
        %v2410 = vunpack.c.l.b16 %v2346
        %v2411 = vunpack.c.l.b16 %v2347
        %v2412 = vunpack.c.l.b16 %v2348
        %v2413 = vunpack.c.l.b16 %v2349
        %v2414 = vunpack.c.l.b16 %v2350
        %v2415 = vunpack.c.l.b16 %v2351
        %v2416 = vunpack.c.l.b16 %v2352
        %v2417 = vunpack.c.l.b16 %v2353
        %v2418 = vunpack.c.l.b16 %v2354
        %v2419 = vunpack.c.l.b16 %v2355
        %v2420 = vunpack.c.l.b16 %v2356
        %v2421 = vunpack.c.l.b16 %v2357
        %v2422 = vpack.c.b16 %v2407, %v2406
        %v2423 = vpack.c.b16 %v2409, %v2408
        %v2424 = vpack.c.b16 %v2411, %v2410
        %v2425 = vpack.c.b16 %v2413, %v2412
        %v2426 = vpack.c.b16 %v2415, %v2414
        %v2427 = vpack.c.b16 %v2417, %v2416
        %v2428 = vpack.c.b16 %v2419, %v2418
        %v2429 = vpack.c.b16 %v2421, %v2420
        %v2470 = vunpack.c.l.b16 %v2358
        %v2471 = vunpack.c.h.b16 %v2358
        %v2472 = vunpack.c.l.b16 %v2359
        %v2473 = vunpack.c.l.b16 %v2360
        %v2474 = vunpack.c.h.b16 %v2360
        %v2475 = vunpack.c.l.b16 %v2361
        %v2476 = vunpack.c.l.b16 %v2362
        %v2477 = vunpack.c.h.b16 %v2362
        %v2478 = vunpack.c.l.b16 %v2363
        %v2479 = vunpack.c.l.b16 %v2364
        %v2480 = vunpack.c.h.b16 %v2364
        %v2481 = vunpack.c.l.b16 %v2365
        %v2482 = vunpack.c.l.b16 %v2366
        %v2483 = vunpack.c.h.b16 %v2366
        %v2484 = vunpack.c.l.b16 %v2367
        %v2485 = vunpack.c.l.b16 %v2368
        %v2486 = vunpack.c.h.b16 %v2368
        %v2487 = vunpack.c.l.b16 %v2369
        %v2488 = vunpack.c.l.b16 %v2370
        %v2489 = vunpack.c.h.b16 %v2370
        %v2490 = vunpack.c.l.b16 %v2371
        %v2491 = vunpack.c.l.b16 %v2372
        %v2492 = vunpack.c.h.b16 %v2372
        %v2493 = vunpack.c.l.b16 %v2373
        %v2494 = vunpack.c.l.b16 %v2374
        %v2495 = vunpack.c.h.b16 %v2374
        %v2496 = vunpack.c.l.b16 %v2375
        %v2497 = vunpack.c.l.b16 %v2376
        %v2498 = vunpack.c.h.b16 %v2376
        %v2499 = vunpack.c.l.b16 %v2377
        %v2500 = vunpack.c.l.b16 %v2378
        %v2501 = vunpack.c.h.b16 %v2378
        %v2502 = vunpack.c.l.b16 %v2379
        %v2503 = vunpack.c.l.b16 %v2380
        %v2504 = vunpack.c.h.b16 %v2380
        %v2505 = vunpack.c.l.b16 %v2381
        %v2506 = vunpack.c.l.b16 %v2382
        %v2507 = vunpack.c.h.b16 %v2382
        %v2508 = vunpack.c.l.b16 %v2383
        %v2509 = vunpack.c.l.b16 %v2384
        %v2510 = vunpack.c.h.b16 %v2384
        %v2511 = vunpack.c.l.b16 %v2385
        %v2512 = vunpack.c.l.b16 %v2386
        %v2513 = vunpack.c.h.b16 %v2386
        %v2514 = vunpack.c.l.b16 %v2387
        %v2515 = vunpack.c.l.b16 %v2388
        %v2516 = vunpack.c.h.b16 %v2388
        %v2517 = vunpack.c.l.b16 %v2389
        %v2518 = vpack.c.b16 %v2473, %v2470
        %v2519 = vpack.c.b16 %v2474, %v2471
        %v2520 = vpack.c.b16 %v2475, %v2472
        %v2521 = vpack.c.b16 %v2479, %v2476
        %v2522 = vpack.c.b16 %v2480, %v2477
        %v2523 = vpack.c.b16 %v2481, %v2478
        %v2524 = vpack.c.b16 %v2485, %v2482
        %v2525 = vpack.c.b16 %v2486, %v2483
        %v2526 = vpack.c.b16 %v2487, %v2484
        %v2527 = vpack.c.b16 %v2491, %v2488
        %v2528 = vpack.c.b16 %v2492, %v2489
        %v2529 = vpack.c.b16 %v2493, %v2490
        %v2530 = vpack.c.b16 %v2497, %v2494
        %v2531 = vpack.c.b16 %v2498, %v2495
        %v2532 = vpack.c.b16 %v2499, %v2496
        %v2533 = vpack.c.b16 %v2503, %v2500
        %v2534 = vpack.c.b16 %v2504, %v2501
        %v2535 = vpack.c.b16 %v2505, %v2502
        %v2536 = vpack.c.b16 %v2509, %v2506
        %v2537 = vpack.c.b16 %v2510, %v2507
        %v2538 = vpack.c.b16 %v2511, %v2508
        %v2539 = vpack.c.b16 %v2515, %v2512
        %v2540 = vpack.c.b16 %v2516, %v2513
        %v2541 = vpack.c.b16 %v2517, %v2514
        %2566 = vmatprep.subr.bf16.mxu0 %v2519
        %2567 = vmatpush1.bf16.msra.mxu0 %v2518
        %2568 = vmatprep.subr.bf16.mxu0 %v2522
        %2569 = vmatpush1.bf16.msra.mxu0 %v2521
        %2570 = vmatprep.subr.bf16.mxu0 %v2525
        %2571 = vmatpush1.bf16.msra.mxu0 %v2524
        %2572 = vmatprep.subr.bf16.mxu0 %v2528
        %2573 = vmatpush1.bf16.msra.mxu0 %v2527
        %2574 = vmatprep.subr.bf16.mxu0 %v2531
        %2575 = vmatpush1.bf16.msra.mxu0 %v2530
        %2576 = vmatprep.subr.bf16.mxu0 %v2534
        %2577 = vmatpush1.bf16.msra.mxu0 %v2533
        %2578 = vmatprep.subr.bf16.mxu0 %v2537
        %2579 = vmatpush1.bf16.msra.mxu0 %v2536
        %2580 = vmatprep.subr.bf16.mxu0 %v2540
        %2581 = vmatpush1.bf16.msra.mxu0 %v2539
        %2582 = vmatprep.subr.bf16.mxu0 0
        %2583 = vmatpush1.bf16.msra.mxu0 0
        %2584 = vmatprep.subr.bf16.mxu0 0
        %2585 = vmatpush1.bf16.msra.mxu0 0
        %2586 = vmatprep.subr.bf16.mxu0 0
        %2587 = vmatpush1.bf16.msra.mxu0 0
        %2588 = vmatprep.subr.bf16.mxu0 0
        %2589 = vmatpush1.bf16.msra.mxu0 0
        %2590 = vmatprep.subr.bf16.mxu0 0
        %2591 = vmatpush1.bf16.msra.mxu0 0
        %2592 = vmatprep.subr.bf16.mxu0 0
        %2593 = vmatpush1.bf16.msra.mxu0 0
        %2594 = vmatprep.subr.bf16.mxu0 0
        %2595 = vmatpush1.bf16.msra.mxu0 0
        %2596 = vmatprep.subr.bf16.mxu0 0
        %2597 = vmatpush1.bf16.msra.mxu0 0
        %2598 = vmatprep.mubr.bf16.mxu0 0
        %2599 = vmatmul.mubr.bf16.gmra.mrb[0].mxu0 %v2422
        %v2600 = vpop.f32.mrb[0].mxu0
        %v2601 = vadd.f32 0.0, %v2600
        %v2602 = vpop.f32.mrb[0].mxu0
        %v2603 = vadd.f32 0.0, %v2602
        %v2604 = vpop.f32.mrb[0].mxu0
        %v2605 = vadd.f32 0.0, %v2604
        %v2606 = vpop.f32.mrb[0].mxu0
        %v2607 = vadd.f32 0.0, %v2606
        %2608 = vmatprep.mubr.bf16.mxu0 0
        %2609 = vmatmul.mubr.bf16.gmra.mrb[0].mxu0 %v2423
        %v2610 = vpop.f32.mrb[0].mxu0
        %v2611 = vadd.f32 0.0, %v2610
        %v2612 = vpop.f32.mrb[0].mxu0
        %v2613 = vadd.f32 0.0, %v2612
        %v2614 = vpop.f32.mrb[0].mxu0
        %v2615 = vadd.f32 0.0, %v2614
        %v2616 = vpop.f32.mrb[0].mxu0
        %v2617 = vadd.f32 0.0, %v2616
        %2618 = vmatprep.mubr.bf16.mxu0 0
        %2619 = vmatmul.mubr.bf16.gmra.mrb[0].mxu0 %v2424
        %v2620 = vpop.f32.mrb[0].mxu0
        %v2621 = vadd.f32 0.0, %v2620
        %v2622 = vpop.f32.mrb[0].mxu0
        %v2623 = vadd.f32 0.0, %v2622
        %v2624 = vpop.f32.mrb[0].mxu0
        %v2625 = vadd.f32 0.0, %v2624
        %v2626 = vpop.f32.mrb[0].mxu0
        %v2627 = vadd.f32 0.0, %v2626
        %2628 = vmatprep.mubr.bf16.mxu0 0
        %2629 = vmatmul.mubr.bf16.gmra.mrb[0].mxu0 %v2425
        %v2630 = vpop.f32.mrb[0].mxu0
        %v2631 = vadd.f32 0.0, %v2630
        %v2632 = vpop.f32.mrb[0].mxu0
        %v2633 = vadd.f32 0.0, %v2632
        %v2634 = vpop.f32.mrb[0].mxu0
        %v2635 = vadd.f32 0.0, %v2634
        %v2636 = vpop.f32.mrb[0].mxu0
        %v2637 = vadd.f32 0.0, %v2636
        %2638 = vmatprep.mubr.bf16.mxu0 0
        %2639 = vmatmul.mubr.bf16.gmra.mrb[0].mxu0 %v2426
        %v2640 = vpop.f32.mrb[0].mxu0
        %v2641 = vadd.f32 0.0, %v2640
        %v2642 = vpop.f32.mrb[0].mxu0
        %v2643 = vadd.f32 0.0, %v2642
        %v2644 = vpop.f32.mrb[0].mxu0
        %v2645 = vadd.f32 0.0, %v2644
        %v2646 = vpop.f32.mrb[0].mxu0
        %v2647 = vadd.f32 0.0, %v2646
        %2648 = vmatprep.mubr.bf16.mxu0 0
        %2649 = vmatmul.mubr.bf16.gmra.mrb[0].mxu0 %v2427
        %v2650 = vpop.f32.mrb[0].mxu0
        %v2651 = vadd.f32 0.0, %v2650
        %v2652 = vpop.f32.mrb[0].mxu0
        %v2653 = vadd.f32 0.0, %v2652
        %v2654 = vpop.f32.mrb[0].mxu0
        %v2655 = vadd.f32 0.0, %v2654
        %v2656 = vpop.f32.mrb[0].mxu0
        %v2657 = vadd.f32 0.0, %v2656
        %2658 = vmatprep.mubr.bf16.mxu0 0
        %2659 = vmatmul.mubr.bf16.gmra.mrb[0].mxu0 %v2428
        %v2660 = vpop.f32.mrb[0].mxu0
        %v2661 = vadd.f32 0.0, %v2660
        %v2662 = vpop.f32.mrb[0].mxu0
        %v2663 = vadd.f32 0.0, %v2662
        %v2664 = vpop.f32.mrb[0].mxu0
        %v2665 = vadd.f32 0.0, %v2664
        %v2666 = vpop.f32.mrb[0].mxu0
        %v2667 = vadd.f32 0.0, %v2666
        %2668 = vmatprep.mubr.bf16.mxu0 0
        %2669 = vmatmul.mubr.bf16.gmra.mrb[0].mxu0 %v2429
        %v2670 = vpop.f32.mrb[0].mxu0
        %v2671 = vadd.f32 0.0, %v2670
        %v2672 = vpop.f32.mrb[0].mxu0
        %v2673 = vadd.f32 0.0, %v2672
        %v2674 = vpop.f32.mrb[0].mxu0
        %v2675 = vadd.f32 0.0, %v2674
        %v2676 = vpop.f32.mrb[0].mxu0
        %v2677 = vadd.f32 0.0, %v2676
        %2678 = vdwg.mxu0
        %2679 = vmatprep.subr.bf16.mxu0 0
        %2680 = vmatpush1.bf16.msra.mxu0 %v2520
        %2681 = vmatprep.subr.bf16.mxu0 0
        %2682 = vmatpush1.bf16.msra.mxu0 %v2523
        %2683 = vmatprep.subr.bf16.mxu0 0
        %2684 = vmatpush1.bf16.msra.mxu0 %v2526
        %2685 = vmatprep.subr.bf16.mxu0 0
        %2686 = vmatpush1.bf16.msra.mxu0 %v2529
        %2687 = vmatprep.subr.bf16.mxu0 0
        %2688 = vmatpush1.bf16.msra.mxu0 %v2532
        %2689 = vmatprep.subr.bf16.mxu0 0
        %2690 = vmatpush1.bf16.msra.mxu0 %v2535
        %2691 = vmatprep.subr.bf16.mxu0 0
        %2692 = vmatpush1.bf16.msra.mxu0 %v2538
        %2693 = vmatprep.subr.bf16.mxu0 0
        %2694 = vmatpush1.bf16.msra.mxu0 %v2541
        %2695 = vmatprep.subr.bf16.mxu0 0
        %2696 = vmatpush1.bf16.msra.mxu0 0
        %2697 = vmatprep.subr.bf16.mxu0 0
        %2698 = vmatpush1.bf16.msra.mxu0 0
        %2699 = vmatprep.subr.bf16.mxu0 0
        %2700 = vmatpush1.bf16.msra.mxu0 0
        %2701 = vmatprep.subr.bf16.mxu0 0
        %2702 = vmatpush1.bf16.msra.mxu0 0
        %2703 = vmatprep.subr.bf16.mxu0 0
        %2704 = vmatpush1.bf16.msra.mxu0 0
        %2705 = vmatprep.subr.bf16.mxu0 0
        %2706 = vmatpush1.bf16.msra.mxu0 0
        %2707 = vmatprep.subr.bf16.mxu0 0
        %2708 = vmatpush1.bf16.msra.mxu0 0
        %2709 = vmatprep.subr.bf16.mxu0 0
        %2710 = vmatpush1.bf16.msra.mxu0 0
        %2711 = vmatprep.mubr.bf16.mxu0 0
        %2712 = vmatmul.mubr.bf16.gmra.mrb[0].mxu0 %v2422
        %v2713 = vpop.f32.mrb[0].mxu0
        %v2714 = vadd.f32 0.0, %v2713
        %v2715 = vpop.f32.mrb[0].mxu0
        %v2716 = vpop.f32.mrb[0].mxu0
        %v2717 = vadd.f32 0.0, %v2716
        %v2718 = vpop.f32.mrb[0].mxu0
        %2719 = vmatprep.mubr.bf16.mxu0 0
        %2720 = vmatmul.mubr.bf16.gmra.mrb[0].mxu0 %v2423
        %v2721 = vpop.f32.mrb[0].mxu0
        %v2722 = vadd.f32 0.0, %v2721
        %v2723 = vpop.f32.mrb[0].mxu0
        %v2724 = vpop.f32.mrb[0].mxu0
        %v2725 = vadd.f32 0.0, %v2724
        %v2726 = vpop.f32.mrb[0].mxu0
        %2727 = vmatprep.mubr.bf16.mxu0 0
        %2728 = vmatmul.mubr.bf16.gmra.mrb[0].mxu0 %v2424
        %v2729 = vpop.f32.mrb[0].mxu0
        %v2730 = vadd.f32 0.0, %v2729
        %v2731 = vpop.f32.mrb[0].mxu0
        %v2732 = vpop.f32.mrb[0].mxu0
        %v2733 = vadd.f32 0.0, %v2732
        %v2734 = vpop.f32.mrb[0].mxu0
        %2735 = vmatprep.mubr.bf16.mxu0 0
        %2736 = vmatmul.mubr.bf16.gmra.mrb[0].mxu0 %v2425
        %v2737 = vpop.f32.mrb[0].mxu0
        %v2738 = vadd.f32 0.0, %v2737
        %v2739 = vpop.f32.mrb[0].mxu0
        %v2740 = vpop.f32.mrb[0].mxu0
        %v2741 = vadd.f32 0.0, %v2740
        %v2742 = vpop.f32.mrb[0].mxu0
        %2743 = vmatprep.mubr.bf16.mxu0 0
        %2744 = vmatmul.mubr.bf16.gmra.mrb[0].mxu0 %v2426
        %v2745 = vpop.f32.mrb[0].mxu0
        %v2746 = vadd.f32 0.0, %v2745
        %v2747 = vpop.f32.mrb[0].mxu0
        %v2748 = vpop.f32.mrb[0].mxu0
        %v2749 = vadd.f32 0.0, %v2748
        %v2750 = vpop.f32.mrb[0].mxu0
        %2751 = vmatprep.mubr.bf16.mxu0 0
        %2752 = vmatmul.mubr.bf16.gmra.mrb[0].mxu0 %v2427
        %v2753 = vpop.f32.mrb[0].mxu0
        %v2754 = vadd.f32 0.0, %v2753
        %v2755 = vpop.f32.mrb[0].mxu0
        %v2756 = vpop.f32.mrb[0].mxu0
        %v2757 = vadd.f32 0.0, %v2756
        %v2758 = vpop.f32.mrb[0].mxu0
        %2759 = vmatprep.mubr.bf16.mxu0 0
        %2760 = vmatmul.mubr.bf16.gmra.mrb[0].mxu0 %v2428
        %v2761 = vpop.f32.mrb[0].mxu0
        %v2762 = vadd.f32 0.0, %v2761
        %v2763 = vpop.f32.mrb[0].mxu0
        %v2764 = vpop.f32.mrb[0].mxu0
        %v2765 = vadd.f32 0.0, %v2764
        %v2766 = vpop.f32.mrb[0].mxu0
        %2767 = vmatprep.mubr.bf16.mxu0 0
        %2768 = vmatmul.mubr.bf16.gmra.mrb[0].mxu0 %v2429
        %v2769 = vpop.f32.mrb[0].mxu0
        %v2770 = vadd.f32 0.0, %v2769
        %v2771 = vpop.f32.mrb[0].mxu0
        %v2772 = vpop.f32.mrb[0].mxu0
        %v2773 = vadd.f32 0.0, %v2772
        %v2774 = vpop.f32.mrb[0].mxu0
        %2775 = vdwg.mxu0
        %v2776 = vadd.f32 %v2294, %v2601
        %v2777 = vadd.f32 %v2295, %v2603
        %v2778 = vadd.f32 %v2296, %v2714
        %v2779 = vadd.f32 %v2297, %v2605
        %v2780 = vadd.f32 %v2298, %v2607
        %v2781 = vadd.f32 %v2299, %v2717
        %v2782 = vadd.f32 %v2300, %v2611
        %v2783 = vadd.f32 %v2301, %v2613
        %v2784 = vadd.f32 %v2302, %v2722
        %v2785 = vadd.f32 %v2303, %v2615
        %v2786 = vadd.f32 %v2304, %v2617
        %v2787 = vadd.f32 %v2305, %v2725
        %v2788 = vadd.f32 %v2306, %v2621
        %v2789 = vadd.f32 %v2307, %v2623
        %v2790 = vadd.f32 %v2308, %v2730
        %v2791 = vadd.f32 %v2309, %v2625
        %v2792 = vadd.f32 %v2310, %v2627
        %v2793 = vadd.f32 %v2311, %v2733
        %v2794 = vadd.f32 %v2312, %v2631
        %v2795 = vadd.f32 %v2313, %v2633
        %v2796 = vadd.f32 %v2314, %v2738
        %v2797 = vadd.f32 %v2315, %v2635
        %v2798 = vadd.f32 %v2316, %v2637
        %v2799 = vadd.f32 %v2317, %v2741
        %v2800 = vadd.f32 %v2318, %v2641
        %v2801 = vadd.f32 %v2319, %v2643
        %v2802 = vadd.f32 %v2320, %v2746
        %v2803 = vadd.f32 %v2321, %v2645
        %v2804 = vadd.f32 %v2322, %v2647
        %v2805 = vadd.f32 %v2323, %v2749
        %v2806 = vadd.f32 %v2324, %v2651
        %v2807 = vadd.f32 %v2325, %v2653
        %v2808 = vadd.f32 %v2326, %v2754
        %v2809 = vadd.f32 %v2327, %v2655
        %v2810 = vadd.f32 %v2328, %v2657
        %v2811 = vadd.f32 %v2329, %v2757
        %v2812 = vadd.f32 %v2330, %v2661
        %v2813 = vadd.f32 %v2331, %v2663
        %v2814 = vadd.f32 %v2332, %v2762
        %v2815 = vadd.f32 %v2333, %v2665
        %v2816 = vadd.f32 %v2334, %v2667
        %v2817 = vadd.f32 %v2335, %v2765
        %v2818 = vadd.f32 %v2336, %v2671
        %v2819 = vadd.f32 %v2337, %v2673
        %v2820 = vadd.f32 %v2338, %v2770
        %v2821 = vadd.f32 %v2339, %v2675
        %v2822 = vadd.f32 %v2340, %v2677
        %v2823 = vadd.f32 %v2341, %v2773
        %v2824 = vld [vmem:[%s713] sm:$0xf]
        %v2825 = vld [vmem:[%s713 + $0x4] sm:$0xf]
        %v2826 = vld [vmem:[%s713 + $0x8] sm:$0x1]
        %v2827 = vld [vmem:[%s713 + $0xc] sm:$0xf]
        %v2828 = vld [vmem:[%s713 + $0x10] sm:$0xf]
        %v2829 = vld [vmem:[%s713 + $0x14] sm:$0x1]
        %v2830 = vld [vmem:[%s713 + $0x18] sm:$0xf]
        %v2831 = vld [vmem:[%s713 + $0x1c] sm:$0xf]
        %v2832 = vld [vmem:[%s713 + $0x20] sm:$0x1]
        %v2833 = vld [vmem:[%s713 + $0x24] sm:$0xf]
        %v2834 = vld [vmem:[%s713 + $0x28] sm:$0xf]
        %v2835 = vld [vmem:[%s713 + $0x2c] sm:$0x1]
        %v2836 = vld [vmem:[%s713 + $0x30] sm:$0xf]
        %v2837 = vld [vmem:[%s713 + $0x34] sm:$0xf]
        %v2838 = vld [vmem:[%s713 + $0x38] sm:$0x1]
        %v2839 = vld [vmem:[%s713 + $0x3c] sm:$0xf]
        %v2840 = vld [vmem:[%s713 + $0x40] sm:$0xf]
        %v2841 = vld [vmem:[%s713 + $0x44] sm:$0x1]
        %v2842 = vld [vmem:[%s713 + $0x48] sm:$0xf]
        %v2843 = vld [vmem:[%s713 + $0x4c] sm:$0xf]
        %v2844 = vld [vmem:[%s713 + $0x50] sm:$0x1]
        %v2845 = vld [vmem:[%s713 + $0x54] sm:$0xf]
        %v2846 = vld [vmem:[%s713 + $0x58] sm:$0xf]
        %v2847 = vld [vmem:[%s713 + $0x5c] sm:$0x1]
        %v2849 = vshrl.u32 %v2824, 16
        %v2851 = vrot.slane %v2849, 4
        %v2852 = vshll.u32 %v2824, 16
        %v2854 = vrot.slane %v2852, 5
        %v2855 = vor.u32 %v2851, %v2854
        %v2856 = vrot.slane %v2855, 4
        %v2858 = vshll.u32 %v2825, 16
        %v2860 = vrot.slane %v2858, 5
        %v2861 = vsel %vm828, %v2856, %v2860
        %v2862 = vshrl.u32 %v2825, 16
        %v2864 = vrot.slane %v2862, 4
        %v2865 = vor.u32 %v2864, %v2860
        %v2866 = vrot.slane %v2865, 4
        %v2868 = vshll.u32 %v2826, 16
        %v2870 = vrot.slane %v2868, 5
        %v2871 = vsel %vm828, %v2866, %v2870
        %v2873 = vshrl.u32 %v2827, 16
        %v2875 = vrot.slane %v2873, 4
        %v2876 = vshll.u32 %v2827, 16
        %v2878 = vrot.slane %v2876, 5
        %v2879 = vor.u32 %v2875, %v2878
        %v2880 = vrot.slane %v2879, 4
        %v2882 = vshll.u32 %v2828, 16
        %v2884 = vrot.slane %v2882, 5
        %v2885 = vsel %vm828, %v2880, %v2884
        %v2886 = vshrl.u32 %v2828, 16
        %v2888 = vrot.slane %v2886, 4
        %v2889 = vor.u32 %v2888, %v2884
        %v2890 = vrot.slane %v2889, 4
        %v2892 = vshll.u32 %v2829, 16
        %v2894 = vrot.slane %v2892, 5
        %v2895 = vsel %vm828, %v2890, %v2894
        %v2897 = vshrl.u32 %v2830, 16
        %v2899 = vrot.slane %v2897, 4
        %v2900 = vshll.u32 %v2830, 16
        %v2902 = vrot.slane %v2900, 5
        %v2903 = vor.u32 %v2899, %v2902
        %v2904 = vrot.slane %v2903, 4
        %v2906 = vshll.u32 %v2831, 16
        %v2908 = vrot.slane %v2906, 5
        %v2909 = vsel %vm828, %v2904, %v2908
        %v2910 = vshrl.u32 %v2831, 16
        %v2912 = vrot.slane %v2910, 4
        %v2913 = vor.u32 %v2912, %v2908
        %v2914 = vrot.slane %v2913, 4
        %v2916 = vshll.u32 %v2832, 16
        %v2918 = vrot.slane %v2916, 5
        %v2919 = vsel %vm828, %v2914, %v2918
        %v2921 = vshrl.u32 %v2833, 16
        %v2923 = vrot.slane %v2921, 4
        %v2924 = vshll.u32 %v2833, 16
        %v2926 = vrot.slane %v2924, 5
        %v2927 = vor.u32 %v2923, %v2926
        %v2928 = vrot.slane %v2927, 4
        %v2930 = vshll.u32 %v2834, 16
        %v2932 = vrot.slane %v2930, 5
        %v2933 = vsel %vm828, %v2928, %v2932
        %v2934 = vshrl.u32 %v2834, 16
        %v2936 = vrot.slane %v2934, 4
        %v2937 = vor.u32 %v2936, %v2932
        %v2938 = vrot.slane %v2937, 4
        %v2940 = vshll.u32 %v2835, 16
        %v2942 = vrot.slane %v2940, 5
        %v2943 = vsel %vm828, %v2938, %v2942
        %v2945 = vshrl.u32 %v2836, 16
        %v2947 = vrot.slane %v2945, 4
        %v2948 = vshll.u32 %v2836, 16
        %v2950 = vrot.slane %v2948, 5
        %v2951 = vor.u32 %v2947, %v2950
        %v2952 = vrot.slane %v2951, 4
        %v2954 = vshll.u32 %v2837, 16
        %v2956 = vrot.slane %v2954, 5
        %v2957 = vsel %vm828, %v2952, %v2956
        %v2958 = vshrl.u32 %v2837, 16
        %v2960 = vrot.slane %v2958, 4
        %v2961 = vor.u32 %v2960, %v2956
        %v2962 = vrot.slane %v2961, 4
        %v2964 = vshll.u32 %v2838, 16
        %v2966 = vrot.slane %v2964, 5
        %v2967 = vsel %vm828, %v2962, %v2966
        %v2969 = vshrl.u32 %v2839, 16
        %v2971 = vrot.slane %v2969, 4
        %v2972 = vshll.u32 %v2839, 16
        %v2974 = vrot.slane %v2972, 5
        %v2975 = vor.u32 %v2971, %v2974
        %v2976 = vrot.slane %v2975, 4
        %v2978 = vshll.u32 %v2840, 16
        %v2980 = vrot.slane %v2978, 5
        %v2981 = vsel %vm828, %v2976, %v2980
        %v2982 = vshrl.u32 %v2840, 16
        %v2984 = vrot.slane %v2982, 4
        %v2985 = vor.u32 %v2984, %v2980
        %v2986 = vrot.slane %v2985, 4
        %v2988 = vshll.u32 %v2841, 16
        %v2990 = vrot.slane %v2988, 5
        %v2991 = vsel %vm828, %v2986, %v2990
        %v2993 = vshrl.u32 %v2842, 16
        %v2995 = vrot.slane %v2993, 4
        %v2996 = vshll.u32 %v2842, 16
        %v2998 = vrot.slane %v2996, 5
        %v2999 = vor.u32 %v2995, %v2998
        %v3000 = vrot.slane %v2999, 4
        %v3002 = vshll.u32 %v2843, 16
        %v3004 = vrot.slane %v3002, 5
        %v3005 = vsel %vm828, %v3000, %v3004
        %v3006 = vshrl.u32 %v2843, 16
        %v3008 = vrot.slane %v3006, 4
        %v3009 = vor.u32 %v3008, %v3004
        %v3010 = vrot.slane %v3009, 4
        %v3012 = vshll.u32 %v2844, 16
        %v3014 = vrot.slane %v3012, 5
        %v3015 = vsel %vm828, %v3010, %v3014
        %v3017 = vshrl.u32 %v2845, 16
        %v3019 = vrot.slane %v3017, 4
        %v3020 = vshll.u32 %v2845, 16
        %v3022 = vrot.slane %v3020, 5
        %v3023 = vor.u32 %v3019, %v3022
        %v3024 = vrot.slane %v3023, 4
        %v3026 = vshll.u32 %v2846, 16
        %v3028 = vrot.slane %v3026, 5
        %v3029 = vsel %vm828, %v3024, %v3028
        %v3030 = vshrl.u32 %v2846, 16
        %v3032 = vrot.slane %v3030, 4
        %v3033 = vor.u32 %v3032, %v3028
        %v3034 = vrot.slane %v3033, 4
        %v3036 = vshll.u32 %v2847, 16
        %v3038 = vrot.slane %v3036, 5
        %v3039 = vsel %vm828, %v3034, %v3038
        %v3040 = vld [vmem:[#allocation9 + $0x300] sm:$0xff]
        %v3041 = vld [vmem:[#allocation9 + $0x308] sm:$0xf]
        %v3042 = vld [vmem:[#allocation9 + $0x30c] sm:$0xff]
        %v3043 = vld [vmem:[#allocation9 + $0x314] sm:$0xf]
        %v3044 = vld [vmem:[#allocation9 + $0x318] sm:$0xff]
        %v3045 = vld [vmem:[#allocation9 + $0x320] sm:$0xf]
        %v3046 = vld [vmem:[#allocation9 + $0x324] sm:$0xff]
        %v3047 = vld [vmem:[#allocation9 + $0x32c] sm:$0xf]
        %v3048 = vld [vmem:[#allocation9 + $0x330] sm:$0xff]
        %v3049 = vld [vmem:[#allocation9 + $0x338] sm:$0xf]
        %v3050 = vld [vmem:[#allocation9 + $0x33c] sm:$0xff]
        %v3051 = vld [vmem:[#allocation9 + $0x344] sm:$0xf]
        %v3052 = vld [vmem:[#allocation9 + $0x348] sm:$0xff]
        %v3053 = vld [vmem:[#allocation9 + $0x350] sm:$0xf]
        %v3054 = vld [vmem:[#allocation9 + $0x354] sm:$0xff]
        %v3055 = vld [vmem:[#allocation9 + $0x35c] sm:$0xf]
        %v3056 = vld [vmem:[#allocation9 + $0x360] sm:$0xff]
        %v3057 = vld [vmem:[#allocation9 + $0x368] sm:$0xf]
        %v3058 = vld [vmem:[#allocation9 + $0x36c] sm:$0xff]
        %v3059 = vld [vmem:[#allocation9 + $0x374] sm:$0xf]
        %v3060 = vld [vmem:[#allocation9 + $0x378] sm:$0xff]
        %v3061 = vld [vmem:[#allocation9 + $0x380] sm:$0xf]
        %v3062 = vld [vmem:[#allocation9 + $0x384] sm:$0xff]
        %v3063 = vld [vmem:[#allocation9 + $0x38c] sm:$0xf]
        %v3064 = vld [vmem:[#allocation9 + $0x390] sm:$0xff]
        %v3065 = vld [vmem:[#allocation9 + $0x398] sm:$0xf]
        %v3066 = vld [vmem:[#allocation9 + $0x39c] sm:$0xff]
        %v3067 = vld [vmem:[#allocation9 + $0x3a4] sm:$0xf]
        %v3068 = vld [vmem:[#allocation9 + $0x3a8] sm:$0xff]
        %v3069 = vld [vmem:[#allocation9 + $0x3b0] sm:$0xf]
        %v3070 = vld [vmem:[#allocation9 + $0x3b4] sm:$0xff]
        %v3071 = vld [vmem:[#allocation9 + $0x3bc] sm:$0xf]
        %v3072 = vunpack.c.l.b16 %v2861
        %v3073 = vunpack.c.l.b16 %v2871
        %v3074 = vunpack.c.l.b16 %v2885
        %v3075 = vunpack.c.l.b16 %v2895
        %v3076 = vunpack.c.l.b16 %v2909
        %v3077 = vunpack.c.l.b16 %v2919
        %v3078 = vunpack.c.l.b16 %v2933
        %v3079 = vunpack.c.l.b16 %v2943
        %v3080 = vunpack.c.l.b16 %v2957
        %v3081 = vunpack.c.l.b16 %v2967
        %v3082 = vunpack.c.l.b16 %v2981
        %v3083 = vunpack.c.l.b16 %v2991
        %v3084 = vunpack.c.l.b16 %v3005
        %v3085 = vunpack.c.l.b16 %v3015
        %v3086 = vunpack.c.l.b16 %v3029
        %v3087 = vunpack.c.l.b16 %v3039
        %v3088 = vpack.c.b16 %v3073, %v3072
        %v3089 = vpack.c.b16 %v3075, %v3074
        %v3090 = vpack.c.b16 %v3077, %v3076
        %v3091 = vpack.c.b16 %v3079, %v3078
        %v3092 = vpack.c.b16 %v3081, %v3080
        %v3093 = vpack.c.b16 %v3083, %v3082
        %v3094 = vpack.c.b16 %v3085, %v3084
        %v3095 = vpack.c.b16 %v3087, %v3086
        %v3136 = vunpack.c.l.b16 %v3040
        %v3137 = vunpack.c.h.b16 %v3040
        %v3138 = vunpack.c.l.b16 %v3041
        %v3139 = vunpack.c.l.b16 %v3042
        %v3140 = vunpack.c.h.b16 %v3042
        %v3141 = vunpack.c.l.b16 %v3043
        %v3142 = vunpack.c.l.b16 %v3044
        %v3143 = vunpack.c.h.b16 %v3044
        %v3144 = vunpack.c.l.b16 %v3045
        %v3145 = vunpack.c.l.b16 %v3046
        %v3146 = vunpack.c.h.b16 %v3046
        %v3147 = vunpack.c.l.b16 %v3047
        %v3148 = vunpack.c.l.b16 %v3048
        %v3149 = vunpack.c.h.b16 %v3048
        %v3150 = vunpack.c.l.b16 %v3049
        %v3151 = vunpack.c.l.b16 %v3050
        %v3152 = vunpack.c.h.b16 %v3050
        %v3153 = vunpack.c.l.b16 %v3051
        %v3154 = vunpack.c.l.b16 %v3052
        %v3155 = vunpack.c.h.b16 %v3052
        %v3156 = vunpack.c.l.b16 %v3053
        %v3157 = vunpack.c.l.b16 %v3054
        %v3158 = vunpack.c.h.b16 %v3054
        %v3159 = vunpack.c.l.b16 %v3055
        %v3160 = vunpack.c.l.b16 %v3056
        %v3161 = vunpack.c.h.b16 %v3056
        %v3162 = vunpack.c.l.b16 %v3057
        %v3163 = vunpack.c.l.b16 %v3058
        %v3164 = vunpack.c.h.b16 %v3058
        %v3165 = vunpack.c.l.b16 %v3059
        %v3166 = vunpack.c.l.b16 %v3060
        %v3167 = vunpack.c.h.b16 %v3060
        %v3168 = vunpack.c.l.b16 %v3061
        %v3169 = vunpack.c.l.b16 %v3062
        %v3170 = vunpack.c.h.b16 %v3062
        %v3171 = vunpack.c.l.b16 %v3063
        %v3172 = vunpack.c.l.b16 %v3064
        %v3173 = vunpack.c.h.b16 %v3064
        %v3174 = vunpack.c.l.b16 %v3065
        %v3175 = vunpack.c.l.b16 %v3066
        %v3176 = vunpack.c.h.b16 %v3066
        %v3177 = vunpack.c.l.b16 %v3067
        %v3178 = vunpack.c.l.b16 %v3068
        %v3179 = vunpack.c.h.b16 %v3068
        %v3180 = vunpack.c.l.b16 %v3069
        %v3181 = vunpack.c.l.b16 %v3070
        %v3182 = vunpack.c.h.b16 %v3070
        %v3183 = vunpack.c.l.b16 %v3071
        %v3184 = vpack.c.b16 %v3139, %v3136
        %v3185 = vpack.c.b16 %v3140, %v3137
        %v3186 = vpack.c.b16 %v3141, %v3138
        %v3187 = vpack.c.b16 %v3145, %v3142
        %v3188 = vpack.c.b16 %v3146, %v3143
        %v3189 = vpack.c.b16 %v3147, %v3144
        %v3190 = vpack.c.b16 %v3151, %v3148
        %v3191 = vpack.c.b16 %v3152, %v3149
        %v3192 = vpack.c.b16 %v3153, %v3150
        %v3193 = vpack.c.b16 %v3157, %v3154
        %v3194 = vpack.c.b16 %v3158, %v3155
        %v3195 = vpack.c.b16 %v3159, %v3156
        %v3196 = vpack.c.b16 %v3163, %v3160
        %v3197 = vpack.c.b16 %v3164, %v3161
        %v3198 = vpack.c.b16 %v3165, %v3162
        %v3199 = vpack.c.b16 %v3169, %v3166
        %v3200 = vpack.c.b16 %v3170, %v3167
        %v3201 = vpack.c.b16 %v3171, %v3168
        %v3202 = vpack.c.b16 %v3175, %v3172
        %v3203 = vpack.c.b16 %v3176, %v3173
        %v3204 = vpack.c.b16 %v3177, %v3174
        %v3205 = vpack.c.b16 %v3181, %v3178
        %v3206 = vpack.c.b16 %v3182, %v3179
        %v3207 = vpack.c.b16 %v3183, %v3180
        %3232 = vmatprep.subr.bf16.mxu0 %v3185
        %3233 = vmatpush1.bf16.msra.mxu0 %v3184
        %3234 = vmatprep.subr.bf16.mxu0 %v3188
        %3235 = vmatpush1.bf16.msra.mxu0 %v3187
        %3236 = vmatprep.subr.bf16.mxu0 %v3191
        %3237 = vmatpush1.bf16.msra.mxu0 %v3190
        %3238 = vmatprep.subr.bf16.mxu0 %v3194
        %3239 = vmatpush1.bf16.msra.mxu0 %v3193
        %3240 = vmatprep.subr.bf16.mxu0 %v3197
        %3241 = vmatpush1.bf16.msra.mxu0 %v3196
        %3242 = vmatprep.subr.bf16.mxu0 %v3200
        %3243 = vmatpush1.bf16.msra.mxu0 %v3199
        %3244 = vmatprep.subr.bf16.mxu0 %v3203
        %3245 = vmatpush1.bf16.msra.mxu0 %v3202
        %3246 = vmatprep.subr.bf16.mxu0 %v3206
        %3247 = vmatpush1.bf16.msra.mxu0 %v3205
        %3248 = vmatprep.subr.bf16.mxu0 0
        %3249 = vmatpush1.bf16.msra.mxu0 0
        %3250 = vmatprep.subr.bf16.mxu0 0
        %3251 = vmatpush1.bf16.msra.mxu0 0
        %3252 = vmatprep.subr.bf16.mxu0 0
        %3253 = vmatpush1.bf16.msra.mxu0 0
        %3254 = vmatprep.subr.bf16.mxu0 0
        %3255 = vmatpush1.bf16.msra.mxu0 0
        %3256 = vmatprep.subr.bf16.mxu0 0
        %3257 = vmatpush1.bf16.msra.mxu0 0
        %3258 = vmatprep.subr.bf16.mxu0 0
        %3259 = vmatpush1.bf16.msra.mxu0 0
        %3260 = vmatprep.subr.bf16.mxu0 0
        %3261 = vmatpush1.bf16.msra.mxu0 0
        %3262 = vmatprep.subr.bf16.mxu0 0
        %3263 = vmatpush1.bf16.msra.mxu0 0
        %3264 = vmatprep.mubr.bf16.mxu0 0
        %3265 = vmatmul.mubr.bf16.gmra.mrb[0].mxu0 %v3088
        %v3266 = vpop.f32.mrb[0].mxu0
        %v3267 = vadd.f32 0.0, %v3266
        %v3268 = vpop.f32.mrb[0].mxu0
        %v3269 = vadd.f32 0.0, %v3268
        %v3270 = vpop.f32.mrb[0].mxu0
        %v3271 = vadd.f32 0.0, %v3270
        %v3272 = vpop.f32.mrb[0].mxu0
        %v3273 = vadd.f32 0.0, %v3272
        %3274 = vmatprep.mubr.bf16.mxu0 0
        %3275 = vmatmul.mubr.bf16.gmra.mrb[0].mxu0 %v3089
        %v3276 = vpop.f32.mrb[0].mxu0
        %v3277 = vadd.f32 0.0, %v3276
        %v3278 = vpop.f32.mrb[0].mxu0
        %v3279 = vadd.f32 0.0, %v3278
        %v3280 = vpop.f32.mrb[0].mxu0
        %v3281 = vadd.f32 0.0, %v3280
        %v3282 = vpop.f32.mrb[0].mxu0
        %v3283 = vadd.f32 0.0, %v3282
        %3284 = vmatprep.mubr.bf16.mxu0 0
        %3285 = vmatmul.mubr.bf16.gmra.mrb[0].mxu0 %v3090
        %v3286 = vpop.f32.mrb[0].mxu0
        %v3287 = vadd.f32 0.0, %v3286
        %v3288 = vpop.f32.mrb[0].mxu0
        %v3289 = vadd.f32 0.0, %v3288
        %v3290 = vpop.f32.mrb[0].mxu0
        %v3291 = vadd.f32 0.0, %v3290
        %v3292 = vpop.f32.mrb[0].mxu0
        %v3293 = vadd.f32 0.0, %v3292
        %3294 = vmatprep.mubr.bf16.mxu0 0
        %3295 = vmatmul.mubr.bf16.gmra.mrb[0].mxu0 %v3091
        %v3296 = vpop.f32.mrb[0].mxu0
        %v3297 = vadd.f32 0.0, %v3296
        %v3298 = vpop.f32.mrb[0].mxu0
        %v3299 = vadd.f32 0.0, %v3298
        %v3300 = vpop.f32.mrb[0].mxu0
        %v3301 = vadd.f32 0.0, %v3300
        %v3302 = vpop.f32.mrb[0].mxu0
        %v3303 = vadd.f32 0.0, %v3302
        %3304 = vmatprep.mubr.bf16.mxu0 0
        %3305 = vmatmul.mubr.bf16.gmra.mrb[0].mxu0 %v3092
        %v3306 = vpop.f32.mrb[0].mxu0
        %v3307 = vadd.f32 0.0, %v3306
        %v3308 = vpop.f32.mrb[0].mxu0
        %v3309 = vadd.f32 0.0, %v3308
        %v3310 = vpop.f32.mrb[0].mxu0
        %v3311 = vadd.f32 0.0, %v3310
        %v3312 = vpop.f32.mrb[0].mxu0
        %v3313 = vadd.f32 0.0, %v3312
        %3314 = vmatprep.mubr.bf16.mxu0 0
        %3315 = vmatmul.mubr.bf16.gmra.mrb[0].mxu0 %v3093
        %v3316 = vpop.f32.mrb[0].mxu0
        %v3317 = vadd.f32 0.0, %v3316
        %v3318 = vpop.f32.mrb[0].mxu0
        %v3319 = vadd.f32 0.0, %v3318
        %v3320 = vpop.f32.mrb[0].mxu0
        %v3321 = vadd.f32 0.0, %v3320
        %v3322 = vpop.f32.mrb[0].mxu0
        %v3323 = vadd.f32 0.0, %v3322
        %3324 = vmatprep.mubr.bf16.mxu0 0
        %3325 = vmatmul.mubr.bf16.gmra.mrb[0].mxu0 %v3094
        %v3326 = vpop.f32.mrb[0].mxu0
        %v3327 = vadd.f32 0.0, %v3326
        %v3328 = vpop.f32.mrb[0].mxu0
        %v3329 = vadd.f32 0.0, %v3328
        %v3330 = vpop.f32.mrb[0].mxu0
        %v3331 = vadd.f32 0.0, %v3330
        %v3332 = vpop.f32.mrb[0].mxu0
        %v3333 = vadd.f32 0.0, %v3332
        %3334 = vmatprep.mubr.bf16.mxu0 0
        %3335 = vmatmul.mubr.bf16.gmra.mrb[0].mxu0 %v3095
        %v3336 = vpop.f32.mrb[0].mxu0
        %v3337 = vadd.f32 0.0, %v3336
        %v3338 = vpop.f32.mrb[0].mxu0
        %v3339 = vadd.f32 0.0, %v3338
        %v3340 = vpop.f32.mrb[0].mxu0
        %v3341 = vadd.f32 0.0, %v3340
        %v3342 = vpop.f32.mrb[0].mxu0
        %v3343 = vadd.f32 0.0, %v3342
        %3344 = vdwg.mxu0
        %3345 = vmatprep.subr.bf16.mxu0 0
        %3346 = vmatpush1.bf16.msra.mxu0 %v3186
        %3347 = vmatprep.subr.bf16.mxu0 0
        %3348 = vmatpush1.bf16.msra.mxu0 %v3189
        %3349 = vmatprep.subr.bf16.mxu0 0
        %3350 = vmatpush1.bf16.msra.mxu0 %v3192
        %3351 = vmatprep.subr.bf16.mxu0 0
        %3352 = vmatpush1.bf16.msra.mxu0 %v3195
        %3353 = vmatprep.subr.bf16.mxu0 0
        %3354 = vmatpush1.bf16.msra.mxu0 %v3198
        %3355 = vmatprep.subr.bf16.mxu0 0
        %3356 = vmatpush1.bf16.msra.mxu0 %v3201
        %3357 = vmatprep.subr.bf16.mxu0 0
        %3358 = vmatpush1.bf16.msra.mxu0 %v3204
        %3359 = vmatprep.subr.bf16.mxu0 0
        %3360 = vmatpush1.bf16.msra.mxu0 %v3207
        %3361 = vmatprep.subr.bf16.mxu0 0
        %3362 = vmatpush1.bf16.msra.mxu0 0
        %3363 = vmatprep.subr.bf16.mxu0 0
        %3364 = vmatpush1.bf16.msra.mxu0 0
        %3365 = vmatprep.subr.bf16.mxu0 0
        %3366 = vmatpush1.bf16.msra.mxu0 0
        %3367 = vmatprep.subr.bf16.mxu0 0
        %3368 = vmatpush1.bf16.msra.mxu0 0
        %3369 = vmatprep.subr.bf16.mxu0 0
        %3370 = vmatpush1.bf16.msra.mxu0 0
        %3371 = vmatprep.subr.bf16.mxu0 0
        %3372 = vmatpush1.bf16.msra.mxu0 0
        %3373 = vmatprep.subr.bf16.mxu0 0
        %3374 = vmatpush1.bf16.msra.mxu0 0
        %3375 = vmatprep.subr.bf16.mxu0 0
        %3376 = vmatpush1.bf16.msra.mxu0 0
        %3377 = vmatprep.mubr.bf16.mxu0 0
        %3378 = vmatmul.mubr.bf16.gmra.mrb[0].mxu0 %v3088
        %v3379 = vpop.f32.mrb[0].mxu0
        %v3380 = vadd.f32 0.0, %v3379
        %v3381 = vpop.f32.mrb[0].mxu0
        %v3382 = vpop.f32.mrb[0].mxu0
        %v3383 = vadd.f32 0.0, %v3382
        %v3384 = vpop.f32.mrb[0].mxu0
        %3385 = vmatprep.mubr.bf16.mxu0 0
        %3386 = vmatmul.mubr.bf16.gmra.mrb[0].mxu0 %v3089
        %v3387 = vpop.f32.mrb[0].mxu0
        %v3388 = vadd.f32 0.0, %v3387
        %v3389 = vpop.f32.mrb[0].mxu0
        %v3390 = vpop.f32.mrb[0].mxu0
        %v3391 = vadd.f32 0.0, %v3390
        %v3392 = vpop.f32.mrb[0].mxu0
        %3393 = vmatprep.mubr.bf16.mxu0 0
        %3394 = vmatmul.mubr.bf16.gmra.mrb[0].mxu0 %v3090
        %v3395 = vpop.f32.mrb[0].mxu0
        %v3396 = vadd.f32 0.0, %v3395
        %v3397 = vpop.f32.mrb[0].mxu0
        %v3398 = vpop.f32.mrb[0].mxu0
        %v3399 = vadd.f32 0.0, %v3398
        %v3400 = vpop.f32.mrb[0].mxu0
        %3401 = vmatprep.mubr.bf16.mxu0 0
        %3402 = vmatmul.mubr.bf16.gmra.mrb[0].mxu0 %v3091
        %v3403 = vpop.f32.mrb[0].mxu0
        %v3404 = vadd.f32 0.0, %v3403
        %v3405 = vpop.f32.mrb[0].mxu0
        %v3406 = vpop.f32.mrb[0].mxu0
        %v3407 = vadd.f32 0.0, %v3406
        %v3408 = vpop.f32.mrb[0].mxu0
        %3409 = vmatprep.mubr.bf16.mxu0 0
        %3410 = vmatmul.mubr.bf16.gmra.mrb[0].mxu0 %v3092
        %v3411 = vpop.f32.mrb[0].mxu0
        %v3412 = vadd.f32 0.0, %v3411
        %v3413 = vpop.f32.mrb[0].mxu0
        %v3414 = vpop.f32.mrb[0].mxu0
        %v3415 = vadd.f32 0.0, %v3414
        %v3416 = vpop.f32.mrb[0].mxu0
        %3417 = vmatprep.mubr.bf16.mxu0 0
        %3418 = vmatmul.mubr.bf16.gmra.mrb[0].mxu0 %v3093
        %v3419 = vpop.f32.mrb[0].mxu0
        %v3420 = vadd.f32 0.0, %v3419
        %v3421 = vpop.f32.mrb[0].mxu0
        %v3422 = vpop.f32.mrb[0].mxu0
        %v3423 = vadd.f32 0.0, %v3422
        %v3424 = vpop.f32.mrb[0].mxu0
        %3425 = vmatprep.mubr.bf16.mxu0 0
        %3426 = vmatmul.mubr.bf16.gmra.mrb[0].mxu0 %v3094
        %v3427 = vpop.f32.mrb[0].mxu0
        %v3428 = vadd.f32 0.0, %v3427
        %v3429 = vpop.f32.mrb[0].mxu0
        %v3430 = vpop.f32.mrb[0].mxu0
        %v3431 = vadd.f32 0.0, %v3430
        %v3432 = vpop.f32.mrb[0].mxu0
        %3433 = vmatprep.mubr.bf16.mxu0 0
        %3434 = vmatmul.mubr.bf16.gmra.mrb[0].mxu0 %v3095
        %v3435 = vpop.f32.mrb[0].mxu0
        %v3436 = vadd.f32 0.0, %v3435
        %v3437 = vpop.f32.mrb[0].mxu0
        %v3438 = vpop.f32.mrb[0].mxu0
        %v3439 = vadd.f32 0.0, %v3438
        %v3440 = vpop.f32.mrb[0].mxu0
        %3441 = vdwg.mxu0
        %v3442 = vadd.f32 %v2776, %v3267
        %v3443 = vadd.f32 %v2777, %v3269
        %v3444 = vadd.f32 %v2778, %v3380
        %v3445 = vadd.f32 %v2779, %v3271
        %v3446 = vadd.f32 %v2780, %v3273
        %v3447 = vadd.f32 %v2781, %v3383
        %v3448 = vadd.f32 %v2782, %v3277
        %v3449 = vadd.f32 %v2783, %v3279
        %v3450 = vadd.f32 %v2784, %v3388
        %v3451 = vadd.f32 %v2785, %v3281
        %v3452 = vadd.f32 %v2786, %v3283
        %v3453 = vadd.f32 %v2787, %v3391
        %v3454 = vadd.f32 %v2788, %v3287
        %v3455 = vadd.f32 %v2789, %v3289
        %v3456 = vadd.f32 %v2790, %v3396
        %v3457 = vadd.f32 %v2791, %v3291
        %v3458 = vadd.f32 %v2792, %v3293
        %v3459 = vadd.f32 %v2793, %v3399
        %v3460 = vadd.f32 %v2794, %v3297
        %v3461 = vadd.f32 %v2795, %v3299
        %v3462 = vadd.f32 %v2796, %v3404
        %v3463 = vadd.f32 %v2797, %v3301
        %v3464 = vadd.f32 %v2798, %v3303
        %v3465 = vadd.f32 %v2799, %v3407
        %v3466 = vadd.f32 %v2800, %v3307
        %v3467 = vadd.f32 %v2801, %v3309
        %v3468 = vadd.f32 %v2802, %v3412
        %v3469 = vadd.f32 %v2803, %v3311
        %v3470 = vadd.f32 %v2804, %v3313
        %v3471 = vadd.f32 %v2805, %v3415
        %v3472 = vadd.f32 %v2806, %v3317
        %v3473 = vadd.f32 %v2807, %v3319
        %v3474 = vadd.f32 %v2808, %v3420
        %v3475 = vadd.f32 %v2809, %v3321
        %v3476 = vadd.f32 %v2810, %v3323
        %v3477 = vadd.f32 %v2811, %v3423
        %v3478 = vadd.f32 %v2812, %v3327
        %v3479 = vadd.f32 %v2813, %v3329
        %v3480 = vadd.f32 %v2814, %v3428
        %v3481 = vadd.f32 %v2815, %v3331
        %v3482 = vadd.f32 %v2816, %v3333
        %v3483 = vadd.f32 %v2817, %v3431
        %v3484 = vadd.f32 %v2818, %v3337
        %v3485 = vadd.f32 %v2819, %v3339
        %v3486 = vadd.f32 %v2820, %v3436
        %v3487 = vadd.f32 %v2821, %v3341
        %v3488 = vadd.f32 %v2822, %v3343
        %v3489 = vadd.f32 %v2823, %v3439
        %v3490 = vld [vmem:[%s713] sm:$0xe]
        %v3491 = vld [vmem:[%s713 + $0xc] sm:$0xe]
        %v3492 = vld [vmem:[%s713 + $0x18] sm:$0xe]
        %v3493 = vld [vmem:[%s713 + $0x24] sm:$0xe]
        %v3494 = vld [vmem:[%s713 + $0x30] sm:$0xe]
        %v3495 = vld [vmem:[%s713 + $0x3c] sm:$0xe]
        %v3496 = vld [vmem:[%s713 + $0x48] sm:$0xe]
        %v3497 = vld [vmem:[%s713 + $0x54] sm:$0xe]
        %v3522 = vrot.slane %v3490, 5
        %v3523 = vrot.slane %v3522, 4
        %v3524 = vrot.slane %v2825, 5
        %v3525 = vsel %vm1835, %v3523, %v3524
        %v3526 = vrot.slane %v3524, 4
        %v3527 = vrot.slane %v2826, 5
        %v3528 = vsel %vm1835, %v3526, %v3527
        %v3529 = vrot.slane %v3491, 5
        %v3530 = vrot.slane %v3529, 4
        %v3531 = vrot.slane %v2828, 5
        %v3532 = vsel %vm1835, %v3530, %v3531
        %v3533 = vrot.slane %v3531, 4
        %v3534 = vrot.slane %v2829, 5
        %v3535 = vsel %vm1835, %v3533, %v3534
        %v3536 = vrot.slane %v3492, 5
        %v3537 = vrot.slane %v3536, 4
        %v3538 = vrot.slane %v2831, 5
        %v3539 = vsel %vm1835, %v3537, %v3538
        %v3540 = vrot.slane %v3538, 4
        %v3541 = vrot.slane %v2832, 5
        %v3542 = vsel %vm1835, %v3540, %v3541
        %v3543 = vrot.slane %v3493, 5
        %v3544 = vrot.slane %v3543, 4
        %v3545 = vrot.slane %v2834, 5
        %v3546 = vsel %vm1835, %v3544, %v3545
        %v3547 = vrot.slane %v3545, 4
        %v3548 = vrot.slane %v2835, 5
        %v3549 = vsel %vm1835, %v3547, %v3548
        %v3550 = vrot.slane %v3494, 5
        %v3551 = vrot.slane %v3550, 4
        %v3552 = vrot.slane %v2837, 5
        %v3553 = vsel %vm1835, %v3551, %v3552
        %v3554 = vrot.slane %v3552, 4
        %v3555 = vrot.slane %v2838, 5
        %v3556 = vsel %vm1835, %v3554, %v3555
        %v3557 = vrot.slane %v3495, 5
        %v3558 = vrot.slane %v3557, 4
        %v3559 = vrot.slane %v2840, 5
        %v3560 = vsel %vm1835, %v3558, %v3559
        %v3561 = vrot.slane %v3559, 4
        %v3562 = vrot.slane %v2841, 5
        %v3563 = vsel %vm1835, %v3561, %v3562
        %v3564 = vrot.slane %v3496, 5
        %v3565 = vrot.slane %v3564, 4
        %v3566 = vrot.slane %v2843, 5
        %v3567 = vsel %vm1835, %v3565, %v3566
        %v3568 = vrot.slane %v3566, 4
        %v3569 = vrot.slane %v2844, 5
        %v3570 = vsel %vm1835, %v3568, %v3569
        %v3571 = vrot.slane %v3497, 5
        %v3572 = vrot.slane %v3571, 4
        %v3573 = vrot.slane %v2846, 5
        %v3574 = vsel %vm1835, %v3572, %v3573
        %v3575 = vrot.slane %v3573, 4
        %v3576 = vrot.slane %v2847, 5
        %v3577 = vsel %vm1835, %v3575, %v3576
        %v3578 = vld [vmem:[#allocation9 + $0x3c0] sm:$0xff]
        %v3579 = vld [vmem:[#allocation9 + $0x3c8] sm:$0xf]
        %v3580 = vld [vmem:[#allocation9 + $0x3cc] sm:$0xff]
        %v3581 = vld [vmem:[#allocation9 + $0x3d4] sm:$0xf]
        %v3582 = vld [vmem:[#allocation9 + $0x3d8] sm:$0xff]
        %v3583 = vld [vmem:[#allocation9 + $0x3e0] sm:$0xf]
        %v3584 = vld [vmem:[#allocation9 + $0x3e4] sm:$0xff]
        %v3585 = vld [vmem:[#allocation9 + $0x3ec] sm:$0xf]
        %v3586 = vld [vmem:[#allocation9 + $0x3f0] sm:$0xff]
        %v3587 = vld [vmem:[#allocation9 + $0x3f8] sm:$0xf]
        %v3588 = vld [vmem:[#allocation9 + $0x3fc] sm:$0xff]
        %v3589 = vld [vmem:[#allocation9 + $0x404] sm:$0xf]
        %v3590 = vld [vmem:[#allocation9 + $0x408] sm:$0xff]
        %v3591 = vld [vmem:[#allocation9 + $0x410] sm:$0xf]
        %v3592 = vld [vmem:[#allocation9 + $0x414] sm:$0xff]
        %v3593 = vld [vmem:[#allocation9 + $0x41c] sm:$0xf]
        %v3594 = vld [vmem:[#allocation9 + $0x420] sm:$0xff]
        %v3595 = vld [vmem:[#allocation9 + $0x428] sm:$0xf]
        %v3596 = vld [vmem:[#allocation9 + $0x42c] sm:$0xff]
        %v3597 = vld [vmem:[#allocation9 + $0x434] sm:$0xf]
        %v3598 = vld [vmem:[#allocation9 + $0x438] sm:$0xff]
        %v3599 = vld [vmem:[#allocation9 + $0x440] sm:$0xf]
        %v3600 = vld [vmem:[#allocation9 + $0x444] sm:$0xff]
        %v3601 = vld [vmem:[#allocation9 + $0x44c] sm:$0xf]
        %v3602 = vld [vmem:[#allocation9 + $0x450] sm:$0xff]
        %v3603 = vld [vmem:[#allocation9 + $0x458] sm:$0xf]
        %v3604 = vld [vmem:[#allocation9 + $0x45c] sm:$0xff]
        %v3605 = vld [vmem:[#allocation9 + $0x464] sm:$0xf]
        %v3606 = vld [vmem:[#allocation9 + $0x468] sm:$0xff]
        %v3607 = vld [vmem:[#allocation9 + $0x470] sm:$0xf]
        %v3608 = vld [vmem:[#allocation9 + $0x474] sm:$0xff]
        %v3609 = vld [vmem:[#allocation9 + $0x47c] sm:$0xf]
        %v3610 = vunpack.c.l.b16 %v3525
        %v3611 = vunpack.c.l.b16 %v3528
        %v3612 = vunpack.c.l.b16 %v3532
        %v3613 = vunpack.c.l.b16 %v3535
        %v3614 = vunpack.c.l.b16 %v3539
        %v3615 = vunpack.c.l.b16 %v3542
        %v3616 = vunpack.c.l.b16 %v3546
        %v3617 = vunpack.c.l.b16 %v3549
        %v3618 = vunpack.c.l.b16 %v3553
        %v3619 = vunpack.c.l.b16 %v3556
        %v3620 = vunpack.c.l.b16 %v3560
        %v3621 = vunpack.c.l.b16 %v3563
        %v3622 = vunpack.c.l.b16 %v3567
        %v3623 = vunpack.c.l.b16 %v3570
        %v3624 = vunpack.c.l.b16 %v3574
        %v3625 = vunpack.c.l.b16 %v3577
        %v3626 = vpack.c.b16 %v3611, %v3610
        %v3627 = vpack.c.b16 %v3613, %v3612
        %v3628 = vpack.c.b16 %v3615, %v3614
        %v3629 = vpack.c.b16 %v3617, %v3616
        %v3630 = vpack.c.b16 %v3619, %v3618
        %v3631 = vpack.c.b16 %v3621, %v3620
        %v3632 = vpack.c.b16 %v3623, %v3622
        %v3633 = vpack.c.b16 %v3625, %v3624
        %v3674 = vunpack.c.l.b16 %v3578
        %v3675 = vunpack.c.h.b16 %v3578
        %v3676 = vunpack.c.l.b16 %v3579
        %v3677 = vunpack.c.l.b16 %v3580
        %v3678 = vunpack.c.h.b16 %v3580
        %v3679 = vunpack.c.l.b16 %v3581
        %v3680 = vunpack.c.l.b16 %v3582
        %v3681 = vunpack.c.h.b16 %v3582
        %v3682 = vunpack.c.l.b16 %v3583
        %v3683 = vunpack.c.l.b16 %v3584
        %v3684 = vunpack.c.h.b16 %v3584
        %v3685 = vunpack.c.l.b16 %v3585
        %v3686 = vunpack.c.l.b16 %v3586
        %v3687 = vunpack.c.h.b16 %v3586
        %v3688 = vunpack.c.l.b16 %v3587
        %v3689 = vunpack.c.l.b16 %v3588
        %v3690 = vunpack.c.h.b16 %v3588
        %v3691 = vunpack.c.l.b16 %v3589
        %v3692 = vunpack.c.l.b16 %v3590
        %v3693 = vunpack.c.h.b16 %v3590
        %v3694 = vunpack.c.l.b16 %v3591
        %v3695 = vunpack.c.l.b16 %v3592
        %v3696 = vunpack.c.h.b16 %v3592
        %v3697 = vunpack.c.l.b16 %v3593
        %v3698 = vunpack.c.l.b16 %v3594
        %v3699 = vunpack.c.h.b16 %v3594
        %v3700 = vunpack.c.l.b16 %v3595
        %v3701 = vunpack.c.l.b16 %v3596
        %v3702 = vunpack.c.h.b16 %v3596
        %v3703 = vunpack.c.l.b16 %v3597
        %v3704 = vunpack.c.l.b16 %v3598
        %v3705 = vunpack.c.h.b16 %v3598
        %v3706 = vunpack.c.l.b16 %v3599
        %v3707 = vunpack.c.l.b16 %v3600
        %v3708 = vunpack.c.h.b16 %v3600
        %v3709 = vunpack.c.l.b16 %v3601
        %v3710 = vunpack.c.l.b16 %v3602
        %v3711 = vunpack.c.h.b16 %v3602
        %v3712 = vunpack.c.l.b16 %v3603
        %v3713 = vunpack.c.l.b16 %v3604
        %v3714 = vunpack.c.h.b16 %v3604
        %v3715 = vunpack.c.l.b16 %v3605
        %v3716 = vunpack.c.l.b16 %v3606
        %v3717 = vunpack.c.h.b16 %v3606
        %v3718 = vunpack.c.l.b16 %v3607
        %v3719 = vunpack.c.l.b16 %v3608
        %v3720 = vunpack.c.h.b16 %v3608
        %v3721 = vunpack.c.l.b16 %v3609
        %v3722 = vpack.c.b16 %v3677, %v3674
        %v3723 = vpack.c.b16 %v3678, %v3675
        %v3724 = vpack.c.b16 %v3679, %v3676
        %v3725 = vpack.c.b16 %v3683, %v3680
        %v3726 = vpack.c.b16 %v3684, %v3681
        %v3727 = vpack.c.b16 %v3685, %v3682
        %v3728 = vpack.c.b16 %v3689, %v3686
        %v3729 = vpack.c.b16 %v3690, %v3687
        %v3730 = vpack.c.b16 %v3691, %v3688
        %v3731 = vpack.c.b16 %v3695, %v3692
        %v3732 = vpack.c.b16 %v3696, %v3693
        %v3733 = vpack.c.b16 %v3697, %v3694
        %v3734 = vpack.c.b16 %v3701, %v3698
        %v3735 = vpack.c.b16 %v3702, %v3699
        %v3736 = vpack.c.b16 %v3703, %v3700
        %v3737 = vpack.c.b16 %v3707, %v3704
        %v3738 = vpack.c.b16 %v3708, %v3705
        %v3739 = vpack.c.b16 %v3709, %v3706
        %v3740 = vpack.c.b16 %v3713, %v3710
        %v3741 = vpack.c.b16 %v3714, %v3711
        %v3742 = vpack.c.b16 %v3715, %v3712
        %v3743 = vpack.c.b16 %v3719, %v3716
        %v3744 = vpack.c.b16 %v3720, %v3717
        %v3745 = vpack.c.b16 %v3721, %v3718
        %3770 = vmatprep.subr.bf16.mxu0 %v3723
        %3771 = vmatpush1.bf16.msra.mxu0 %v3722
        %3772 = vmatprep.subr.bf16.mxu0 %v3726
        %3773 = vmatpush1.bf16.msra.mxu0 %v3725
        %3774 = vmatprep.subr.bf16.mxu0 %v3729
        %3775 = vmatpush1.bf16.msra.mxu0 %v3728
        %3776 = vmatprep.subr.bf16.mxu0 %v3732
        %3777 = vmatpush1.bf16.msra.mxu0 %v3731
        %3778 = vmatprep.subr.bf16.mxu0 %v3735
        %3779 = vmatpush1.bf16.msra.mxu0 %v3734
        %3780 = vmatprep.subr.bf16.mxu0 %v3738
        %3781 = vmatpush1.bf16.msra.mxu0 %v3737
        %3782 = vmatprep.subr.bf16.mxu0 %v3741
        %3783 = vmatpush1.bf16.msra.mxu0 %v3740
        %3784 = vmatprep.subr.bf16.mxu0 %v3744
        %3785 = vmatpush1.bf16.msra.mxu0 %v3743
        %3786 = vmatprep.subr.bf16.mxu0 0
        %3787 = vmatpush1.bf16.msra.mxu0 0
        %3788 = vmatprep.subr.bf16.mxu0 0
        %3789 = vmatpush1.bf16.msra.mxu0 0
        %3790 = vmatprep.subr.bf16.mxu0 0
        %3791 = vmatpush1.bf16.msra.mxu0 0
        %3792 = vmatprep.subr.bf16.mxu0 0
        %3793 = vmatpush1.bf16.msra.mxu0 0
        %3794 = vmatprep.subr.bf16.mxu0 0
        %3795 = vmatpush1.bf16.msra.mxu0 0
        %3796 = vmatprep.subr.bf16.mxu0 0
        %3797 = vmatpush1.bf16.msra.mxu0 0
        %3798 = vmatprep.subr.bf16.mxu0 0
        %3799 = vmatpush1.bf16.msra.mxu0 0
        %3800 = vmatprep.subr.bf16.mxu0 0
        %3801 = vmatpush1.bf16.msra.mxu0 0
        %3802 = vmatprep.mubr.bf16.mxu0 0
        %3803 = vmatmul.mubr.bf16.gmra.mrb[0].mxu0 %v3626
        %v3804 = vpop.f32.mrb[0].mxu0
        %v3805 = vadd.f32 0.0, %v3804
        %v3806 = vpop.f32.mrb[0].mxu0
        %v3807 = vadd.f32 0.0, %v3806
        %v3808 = vpop.f32.mrb[0].mxu0
        %v3809 = vadd.f32 0.0, %v3808
        %v3810 = vpop.f32.mrb[0].mxu0
        %v3811 = vadd.f32 0.0, %v3810
        %3812 = vmatprep.mubr.bf16.mxu0 0
        %3813 = vmatmul.mubr.bf16.gmra.mrb[0].mxu0 %v3627
        %v3814 = vpop.f32.mrb[0].mxu0
        %v3815 = vadd.f32 0.0, %v3814
        %v3816 = vpop.f32.mrb[0].mxu0
        %v3817 = vadd.f32 0.0, %v3816
        %v3818 = vpop.f32.mrb[0].mxu0
        %v3819 = vadd.f32 0.0, %v3818
        %v3820 = vpop.f32.mrb[0].mxu0
        %v3821 = vadd.f32 0.0, %v3820
        %3822 = vmatprep.mubr.bf16.mxu0 0
        %3823 = vmatmul.mubr.bf16.gmra.mrb[0].mxu0 %v3628
        %v3824 = vpop.f32.mrb[0].mxu0
        %v3825 = vadd.f32 0.0, %v3824
        %v3826 = vpop.f32.mrb[0].mxu0
        %v3827 = vadd.f32 0.0, %v3826
        %v3828 = vpop.f32.mrb[0].mxu0
        %v3829 = vadd.f32 0.0, %v3828
        %v3830 = vpop.f32.mrb[0].mxu0
        %v3831 = vadd.f32 0.0, %v3830
        %3832 = vmatprep.mubr.bf16.mxu0 0
        %3833 = vmatmul.mubr.bf16.gmra.mrb[0].mxu0 %v3629
        %v3834 = vpop.f32.mrb[0].mxu0
        %v3835 = vadd.f32 0.0, %v3834
        %v3836 = vpop.f32.mrb[0].mxu0
        %v3837 = vadd.f32 0.0, %v3836
        %v3838 = vpop.f32.mrb[0].mxu0
        %v3839 = vadd.f32 0.0, %v3838
        %v3840 = vpop.f32.mrb[0].mxu0
        %v3841 = vadd.f32 0.0, %v3840
        %3842 = vmatprep.mubr.bf16.mxu0 0
        %3843 = vmatmul.mubr.bf16.gmra.mrb[0].mxu0 %v3630
        %v3844 = vpop.f32.mrb[0].mxu0
        %v3845 = vadd.f32 0.0, %v3844
        %v3846 = vpop.f32.mrb[0].mxu0
        %v3847 = vadd.f32 0.0, %v3846
        %v3848 = vpop.f32.mrb[0].mxu0
        %v3849 = vadd.f32 0.0, %v3848
        %v3850 = vpop.f32.mrb[0].mxu0
        %v3851 = vadd.f32 0.0, %v3850
        %3852 = vmatprep.mubr.bf16.mxu0 0
        %3853 = vmatmul.mubr.bf16.gmra.mrb[0].mxu0 %v3631
        %v3854 = vpop.f32.mrb[0].mxu0
        %v3855 = vadd.f32 0.0, %v3854
        %v3856 = vpop.f32.mrb[0].mxu0
        %v3857 = vadd.f32 0.0, %v3856
        %v3858 = vpop.f32.mrb[0].mxu0
        %v3859 = vadd.f32 0.0, %v3858
        %v3860 = vpop.f32.mrb[0].mxu0
        %v3861 = vadd.f32 0.0, %v3860
        %3862 = vmatprep.mubr.bf16.mxu0 0
        %3863 = vmatmul.mubr.bf16.gmra.mrb[0].mxu0 %v3632
        %v3864 = vpop.f32.mrb[0].mxu0
        %v3865 = vadd.f32 0.0, %v3864
        %v3866 = vpop.f32.mrb[0].mxu0
        %v3867 = vadd.f32 0.0, %v3866
        %v3868 = vpop.f32.mrb[0].mxu0
        %v3869 = vadd.f32 0.0, %v3868
        %v3870 = vpop.f32.mrb[0].mxu0
        %v3871 = vadd.f32 0.0, %v3870
        %3872 = vmatprep.mubr.bf16.mxu0 0
        %3873 = vmatmul.mubr.bf16.gmra.mrb[0].mxu0 %v3633
        %v3874 = vpop.f32.mrb[0].mxu0
        %v3875 = vadd.f32 0.0, %v3874
        %v3876 = vpop.f32.mrb[0].mxu0
        %v3877 = vadd.f32 0.0, %v3876
        %v3878 = vpop.f32.mrb[0].mxu0
        %v3879 = vadd.f32 0.0, %v3878
        %v3880 = vpop.f32.mrb[0].mxu0
        %v3881 = vadd.f32 0.0, %v3880
        %3882 = vdwg.mxu0
        %3883 = vmatprep.subr.bf16.mxu0 0
        %3884 = vmatpush1.bf16.msra.mxu0 %v3724
        %3885 = vmatprep.subr.bf16.mxu0 0
        %3886 = vmatpush1.bf16.msra.mxu0 %v3727
        %3887 = vmatprep.subr.bf16.mxu0 0
        %3888 = vmatpush1.bf16.msra.mxu0 %v3730
        %3889 = vmatprep.subr.bf16.mxu0 0
        %3890 = vmatpush1.bf16.msra.mxu0 %v3733
        %3891 = vmatprep.subr.bf16.mxu0 0
        %3892 = vmatpush1.bf16.msra.mxu0 %v3736
        %3893 = vmatprep.subr.bf16.mxu0 0
        %3894 = vmatpush1.bf16.msra.mxu0 %v3739
        %3895 = vmatprep.subr.bf16.mxu0 0
        %3896 = vmatpush1.bf16.msra.mxu0 %v3742
        %3897 = vmatprep.subr.bf16.mxu0 0
        %3898 = vmatpush1.bf16.msra.mxu0 %v3745
        %3899 = vmatprep.subr.bf16.mxu0 0
        %3900 = vmatpush1.bf16.msra.mxu0 0
        %3901 = vmatprep.subr.bf16.mxu0 0
        %3902 = vmatpush1.bf16.msra.mxu0 0
        %3903 = vmatprep.subr.bf16.mxu0 0
        %3904 = vmatpush1.bf16.msra.mxu0 0
        %3905 = vmatprep.subr.bf16.mxu0 0
        %3906 = vmatpush1.bf16.msra.mxu0 0
        %3907 = vmatprep.subr.bf16.mxu0 0
        %3908 = vmatpush1.bf16.msra.mxu0 0
        %3909 = vmatprep.subr.bf16.mxu0 0
        %3910 = vmatpush1.bf16.msra.mxu0 0
        %3911 = vmatprep.subr.bf16.mxu0 0
        %3912 = vmatpush1.bf16.msra.mxu0 0
        %3913 = vmatprep.subr.bf16.mxu0 0
        %3914 = vmatpush1.bf16.msra.mxu0 0
        %3915 = vmatprep.mubr.bf16.mxu0 0
        %3916 = vmatmul.mubr.bf16.gmra.mrb[0].mxu0 %v3626
        %v3917 = vpop.f32.mrb[0].mxu0
        %v3918 = vadd.f32 0.0, %v3917
        %v3919 = vpop.f32.mrb[0].mxu0
        %v3920 = vpop.f32.mrb[0].mxu0
        %v3921 = vadd.f32 0.0, %v3920
        %v3922 = vpop.f32.mrb[0].mxu0
        %3923 = vmatprep.mubr.bf16.mxu0 0
        %3924 = vmatmul.mubr.bf16.gmra.mrb[0].mxu0 %v3627
        %v3925 = vpop.f32.mrb[0].mxu0
        %v3926 = vadd.f32 0.0, %v3925
        %v3927 = vpop.f32.mrb[0].mxu0
        %v3928 = vpop.f32.mrb[0].mxu0
        %v3929 = vadd.f32 0.0, %v3928
        %v3930 = vpop.f32.mrb[0].mxu0
        %3931 = vmatprep.mubr.bf16.mxu0 0
        %3932 = vmatmul.mubr.bf16.gmra.mrb[0].mxu0 %v3628
        %v3933 = vpop.f32.mrb[0].mxu0
        %v3934 = vadd.f32 0.0, %v3933
        %v3935 = vpop.f32.mrb[0].mxu0
        %v3936 = vpop.f32.mrb[0].mxu0
        %v3937 = vadd.f32 0.0, %v3936
        %v3938 = vpop.f32.mrb[0].mxu0
        %3939 = vmatprep.mubr.bf16.mxu0 0
        %3940 = vmatmul.mubr.bf16.gmra.mrb[0].mxu0 %v3629
        %v3941 = vpop.f32.mrb[0].mxu0
        %v3942 = vadd.f32 0.0, %v3941
        %v3943 = vpop.f32.mrb[0].mxu0
        %v3944 = vpop.f32.mrb[0].mxu0
        %v3945 = vadd.f32 0.0, %v3944
        %v3946 = vpop.f32.mrb[0].mxu0
        %3947 = vmatprep.mubr.bf16.mxu0 0
        %3948 = vmatmul.mubr.bf16.gmra.mrb[0].mxu0 %v3630
        %v3949 = vpop.f32.mrb[0].mxu0
        %v3950 = vadd.f32 0.0, %v3949
        %v3951 = vpop.f32.mrb[0].mxu0
        %v3952 = vpop.f32.mrb[0].mxu0
        %v3953 = vadd.f32 0.0, %v3952
        %v3954 = vpop.f32.mrb[0].mxu0
        %3955 = vmatprep.mubr.bf16.mxu0 0
        %3956 = vmatmul.mubr.bf16.gmra.mrb[0].mxu0 %v3631
        %v3957 = vpop.f32.mrb[0].mxu0
        %v3958 = vadd.f32 0.0, %v3957
        %v3959 = vpop.f32.mrb[0].mxu0
        %v3960 = vpop.f32.mrb[0].mxu0
        %v3961 = vadd.f32 0.0, %v3960
        %v3962 = vpop.f32.mrb[0].mxu0
        %3963 = vmatprep.mubr.bf16.mxu0 0
        %3964 = vmatmul.mubr.bf16.gmra.mrb[0].mxu0 %v3632
        %v3965 = vpop.f32.mrb[0].mxu0
        %v3966 = vadd.f32 0.0, %v3965
        %v3967 = vpop.f32.mrb[0].mxu0
        %v3968 = vpop.f32.mrb[0].mxu0
        %v3969 = vadd.f32 0.0, %v3968
        %v3970 = vpop.f32.mrb[0].mxu0
        %3971 = vmatprep.mubr.bf16.mxu0 0
        %3972 = vmatmul.mubr.bf16.gmra.mrb[0].mxu0 %v3633
        %v3973 = vpop.f32.mrb[0].mxu0
        %v3974 = vadd.f32 0.0, %v3973
        %v3975 = vpop.f32.mrb[0].mxu0
        %v3976 = vpop.f32.mrb[0].mxu0
        %v3977 = vadd.f32 0.0, %v3976
        %v3978 = vpop.f32.mrb[0].mxu0
        %3979 = vdwg.mxu0
        %v3980 = vadd.f32 %v3442, %v3805
        %v3981 = vadd.f32 %v3443, %v3807
        %v3982 = vadd.f32 %v3444, %v3918
        %v3983 = vadd.f32 %v3445, %v3809
        %v3984 = vadd.f32 %v3446, %v3811
        %v3985 = vadd.f32 %v3447, %v3921
        %v3986 = vadd.f32 %v3448, %v3815
        %v3987 = vadd.f32 %v3449, %v3817
        %v3988 = vadd.f32 %v3450, %v3926
        %v3989 = vadd.f32 %v3451, %v3819
        %v3990 = vadd.f32 %v3452, %v3821
        %v3991 = vadd.f32 %v3453, %v3929
        %v3992 = vadd.f32 %v3454, %v3825
        %v3993 = vadd.f32 %v3455, %v3827
        %v3994 = vadd.f32 %v3456, %v3934
        %v3995 = vadd.f32 %v3457, %v3829
        %v3996 = vadd.f32 %v3458, %v3831
        %v3997 = vadd.f32 %v3459, %v3937
        %v3998 = vadd.f32 %v3460, %v3835
        %v3999 = vadd.f32 %v3461, %v3837
        %v4000 = vadd.f32 %v3462, %v3942
        %v4001 = vadd.f32 %v3463, %v3839
        %v4002 = vadd.f32 %v3464, %v3841
        %v4003 = vadd.f32 %v3465, %v3945
        %v4004 = vadd.f32 %v3466, %v3845
        %v4005 = vadd.f32 %v3467, %v3847
        %v4006 = vadd.f32 %v3468, %v3950
        %v4007 = vadd.f32 %v3469, %v3849
        %v4008 = vadd.f32 %v3470, %v3851
        %v4009 = vadd.f32 %v3471, %v3953
        %v4010 = vadd.f32 %v3472, %v3855
        %v4011 = vadd.f32 %v3473, %v3857
        %v4012 = vadd.f32 %v3474, %v3958
        %v4013 = vadd.f32 %v3475, %v3859
        %v4014 = vadd.f32 %v3476, %v3861
        %v4015 = vadd.f32 %v3477, %v3961
        %v4016 = vadd.f32 %v3478, %v3865
        %v4017 = vadd.f32 %v3479, %v3867
        %v4018 = vadd.f32 %v3480, %v3966
        %v4019 = vadd.f32 %v3481, %v3869
        %v4020 = vadd.f32 %v3482, %v3871
        %v4021 = vadd.f32 %v3483, %v3969
        %v4022 = vadd.f32 %v3484, %v3875
        %v4023 = vadd.f32 %v3485, %v3877
        %v4024 = vadd.f32 %v3486, %v3974
        %v4025 = vadd.f32 %v3487, %v3879
        %v4026 = vadd.f32 %v3488, %v3881
        %v4027 = vadd.f32 %v3489, %v3977
        %s4028 = scalar_lea.vmem [#allocation2], 24
        %v4029 = vld [vmem:[%s4028] sm:$0xf]
        %v4030 = vld [vmem:[%s4028 + $0x4] sm:$0xf]
        %v4031 = vld [vmem:[%s4028 + $0xc] sm:$0xf]
        %v4032 = vld [vmem:[%s4028 + $0x10] sm:$0xf]
        %v4033 = vld [vmem:[%s4028 + $0x18] sm:$0xf]
        %v4034 = vld [vmem:[%s4028 + $0x1c] sm:$0xf]
        %v4035 = vld [vmem:[%s4028 + $0x24] sm:$0xf]
        %v4036 = vld [vmem:[%s4028 + $0x28] sm:$0xf]
        %v4037 = vld [vmem:[%s4028 + $0x30] sm:$0xf]
        %v4038 = vld [vmem:[%s4028 + $0x34] sm:$0xf]
        %v4039 = vld [vmem:[%s4028 + $0x3c] sm:$0xf]
        %v4040 = vld [vmem:[%s4028 + $0x40] sm:$0xf]
        %v4041 = vld [vmem:[%s4028 + $0x48] sm:$0xf]
        %v4042 = vld [vmem:[%s4028 + $0x4c] sm:$0xf]
        %v4043 = vld [vmem:[%s4028 + $0x54] sm:$0xf]
        %v4044 = vld [vmem:[%s4028 + $0x58] sm:$0xf]
        %v4045 = vld [vmem:[#allocation9 + $0x480] sm:$0xff]
        %v4046 = vld [vmem:[#allocation9 + $0x488] sm:$0xf]
        %v4047 = vld [vmem:[#allocation9 + $0x48c] sm:$0xff]
        %v4048 = vld [vmem:[#allocation9 + $0x494] sm:$0xf]
        %v4049 = vld [vmem:[#allocation9 + $0x498] sm:$0xff]
        %v4050 = vld [vmem:[#allocation9 + $0x4a0] sm:$0xf]
        %v4051 = vld [vmem:[#allocation9 + $0x4a4] sm:$0xff]
        %v4052 = vld [vmem:[#allocation9 + $0x4ac] sm:$0xf]
        %v4053 = vld [vmem:[#allocation9 + $0x4b0] sm:$0xff]
        %v4054 = vld [vmem:[#allocation9 + $0x4b8] sm:$0xf]
        %v4055 = vld [vmem:[#allocation9 + $0x4bc] sm:$0xff]
        %v4056 = vld [vmem:[#allocation9 + $0x4c4] sm:$0xf]
        %v4057 = vld [vmem:[#allocation9 + $0x4c8] sm:$0xff]
        %v4058 = vld [vmem:[#allocation9 + $0x4d0] sm:$0xf]
        %v4059 = vld [vmem:[#allocation9 + $0x4d4] sm:$0xff]
        %v4060 = vld [vmem:[#allocation9 + $0x4dc] sm:$0xf]
        %v4061 = vld [vmem:[#allocation9 + $0x4e0] sm:$0xff]
        %v4062 = vld [vmem:[#allocation9 + $0x4e8] sm:$0xf]
        %v4063 = vld [vmem:[#allocation9 + $0x4ec] sm:$0xff]
        %v4064 = vld [vmem:[#allocation9 + $0x4f4] sm:$0xf]
        %v4065 = vld [vmem:[#allocation9 + $0x4f8] sm:$0xff]
        %v4066 = vld [vmem:[#allocation9 + $0x500] sm:$0xf]
        %v4067 = vld [vmem:[#allocation9 + $0x504] sm:$0xff]
        %v4068 = vld [vmem:[#allocation9 + $0x50c] sm:$0xf]
        %v4069 = vld [vmem:[#allocation9 + $0x510] sm:$0xff]
        %v4070 = vld [vmem:[#allocation9 + $0x518] sm:$0xf]
        %v4071 = vld [vmem:[#allocation9 + $0x51c] sm:$0xff]
        %v4072 = vld [vmem:[#allocation9 + $0x524] sm:$0xf]
        %v4073 = vld [vmem:[#allocation9 + $0x528] sm:$0xff]
        %v4074 = vld [vmem:[#allocation9 + $0x530] sm:$0xf]
        %v4075 = vld [vmem:[#allocation9 + $0x534] sm:$0xff]
        %v4076 = vld [vmem:[#allocation9 + $0x53c] sm:$0xf]
        %v4093 = vunpack.c.l.b16 %v4029
        %v4094 = vunpack.c.l.b16 %v4030
        %v4095 = vunpack.c.l.b16 %v4031
        %v4096 = vunpack.c.l.b16 %v4032
        %v4097 = vunpack.c.l.b16 %v4033
        %v4098 = vunpack.c.l.b16 %v4034
        %v4099 = vunpack.c.l.b16 %v4035
        %v4100 = vunpack.c.l.b16 %v4036
        %v4101 = vunpack.c.l.b16 %v4037
        %v4102 = vunpack.c.l.b16 %v4038
        %v4103 = vunpack.c.l.b16 %v4039
        %v4104 = vunpack.c.l.b16 %v4040
        %v4105 = vunpack.c.l.b16 %v4041
        %v4106 = vunpack.c.l.b16 %v4042
        %v4107 = vunpack.c.l.b16 %v4043
        %v4108 = vunpack.c.l.b16 %v4044
        %v4109 = vpack.c.b16 %v4094, %v4093
        %v4110 = vpack.c.b16 %v4096, %v4095
        %v4111 = vpack.c.b16 %v4098, %v4097
        %v4112 = vpack.c.b16 %v4100, %v4099
        %v4113 = vpack.c.b16 %v4102, %v4101
        %v4114 = vpack.c.b16 %v4104, %v4103
        %v4115 = vpack.c.b16 %v4106, %v4105
        %v4116 = vpack.c.b16 %v4108, %v4107
        %v4157 = vunpack.c.l.b16 %v4045
        %v4158 = vunpack.c.h.b16 %v4045
        %v4159 = vunpack.c.l.b16 %v4046
        %v4160 = vunpack.c.l.b16 %v4047
        %v4161 = vunpack.c.h.b16 %v4047
        %v4162 = vunpack.c.l.b16 %v4048
        %v4163 = vunpack.c.l.b16 %v4049
        %v4164 = vunpack.c.h.b16 %v4049
        %v4165 = vunpack.c.l.b16 %v4050
        %v4166 = vunpack.c.l.b16 %v4051
        %v4167 = vunpack.c.h.b16 %v4051
        %v4168 = vunpack.c.l.b16 %v4052
        %v4169 = vunpack.c.l.b16 %v4053
        %v4170 = vunpack.c.h.b16 %v4053
        %v4171 = vunpack.c.l.b16 %v4054
        %v4172 = vunpack.c.l.b16 %v4055
        %v4173 = vunpack.c.h.b16 %v4055
        %v4174 = vunpack.c.l.b16 %v4056
        %v4175 = vunpack.c.l.b16 %v4057
        %v4176 = vunpack.c.h.b16 %v4057
        %v4177 = vunpack.c.l.b16 %v4058
        %v4178 = vunpack.c.l.b16 %v4059
        %v4179 = vunpack.c.h.b16 %v4059
        %v4180 = vunpack.c.l.b16 %v4060
        %v4181 = vunpack.c.l.b16 %v4061
        %v4182 = vunpack.c.h.b16 %v4061
        %v4183 = vunpack.c.l.b16 %v4062
        %v4184 = vunpack.c.l.b16 %v4063
        %v4185 = vunpack.c.h.b16 %v4063
        %v4186 = vunpack.c.l.b16 %v4064
        %v4187 = vunpack.c.l.b16 %v4065
        %v4188 = vunpack.c.h.b16 %v4065
        %v4189 = vunpack.c.l.b16 %v4066
        %v4190 = vunpack.c.l.b16 %v4067
        %v4191 = vunpack.c.h.b16 %v4067
        %v4192 = vunpack.c.l.b16 %v4068
        %v4193 = vunpack.c.l.b16 %v4069
        %v4194 = vunpack.c.h.b16 %v4069
        %v4195 = vunpack.c.l.b16 %v4070
        %v4196 = vunpack.c.l.b16 %v4071
        %v4197 = vunpack.c.h.b16 %v4071
        %v4198 = vunpack.c.l.b16 %v4072
        %v4199 = vunpack.c.l.b16 %v4073
        %v4200 = vunpack.c.h.b16 %v4073
        %v4201 = vunpack.c.l.b16 %v4074
        %v4202 = vunpack.c.l.b16 %v4075
        %v4203 = vunpack.c.h.b16 %v4075
        %v4204 = vunpack.c.l.b16 %v4076
        %v4205 = vpack.c.b16 %v4160, %v4157
        %v4206 = vpack.c.b16 %v4161, %v4158
        %v4207 = vpack.c.b16 %v4162, %v4159
        %v4208 = vpack.c.b16 %v4166, %v4163
        %v4209 = vpack.c.b16 %v4167, %v4164
        %v4210 = vpack.c.b16 %v4168, %v4165
        %v4211 = vpack.c.b16 %v4172, %v4169
        %v4212 = vpack.c.b16 %v4173, %v4170
        %v4213 = vpack.c.b16 %v4174, %v4171
        %v4214 = vpack.c.b16 %v4178, %v4175
        %v4215 = vpack.c.b16 %v4179, %v4176
        %v4216 = vpack.c.b16 %v4180, %v4177
        %v4217 = vpack.c.b16 %v4184, %v4181
        %v4218 = vpack.c.b16 %v4185, %v4182
        %v4219 = vpack.c.b16 %v4186, %v4183
        %v4220 = vpack.c.b16 %v4190, %v4187
        %v4221 = vpack.c.b16 %v4191, %v4188
        %v4222 = vpack.c.b16 %v4192, %v4189
        %v4223 = vpack.c.b16 %v4196, %v4193
        %v4224 = vpack.c.b16 %v4197, %v4194
        %v4225 = vpack.c.b16 %v4198, %v4195
        %v4226 = vpack.c.b16 %v4202, %v4199
        %v4227 = vpack.c.b16 %v4203, %v4200
        %v4228 = vpack.c.b16 %v4204, %v4201
        %4253 = vmatprep.subr.bf16.mxu0 %v4206
        %4254 = vmatpush1.bf16.msra.mxu0 %v4205
        %4255 = vmatprep.subr.bf16.mxu0 %v4209
        %4256 = vmatpush1.bf16.msra.mxu0 %v4208
        %4257 = vmatprep.subr.bf16.mxu0 %v4212
        %4258 = vmatpush1.bf16.msra.mxu0 %v4211
        %4259 = vmatprep.subr.bf16.mxu0 %v4215
        %4260 = vmatpush1.bf16.msra.mxu0 %v4214
        %4261 = vmatprep.subr.bf16.mxu0 %v4218
        %4262 = vmatpush1.bf16.msra.mxu0 %v4217
        %4263 = vmatprep.subr.bf16.mxu0 %v4221
        %4264 = vmatpush1.bf16.msra.mxu0 %v4220
        %4265 = vmatprep.subr.bf16.mxu0 %v4224
        %4266 = vmatpush1.bf16.msra.mxu0 %v4223
        %4267 = vmatprep.subr.bf16.mxu0 %v4227
        %4268 = vmatpush1.bf16.msra.mxu0 %v4226
        %4269 = vmatprep.subr.bf16.mxu0 0
        %4270 = vmatpush1.bf16.msra.mxu0 0
        %4271 = vmatprep.subr.bf16.mxu0 0
        %4272 = vmatpush1.bf16.msra.mxu0 0
        %4273 = vmatprep.subr.bf16.mxu0 0
        %4274 = vmatpush1.bf16.msra.mxu0 0
        %4275 = vmatprep.subr.bf16.mxu0 0
        %4276 = vmatpush1.bf16.msra.mxu0 0
        %4277 = vmatprep.subr.bf16.mxu0 0
        %4278 = vmatpush1.bf16.msra.mxu0 0
        %4279 = vmatprep.subr.bf16.mxu0 0
        %4280 = vmatpush1.bf16.msra.mxu0 0
        %4281 = vmatprep.subr.bf16.mxu0 0
        %4282 = vmatpush1.bf16.msra.mxu0 0
        %4283 = vmatprep.subr.bf16.mxu0 0
        %4284 = vmatpush1.bf16.msra.mxu0 0
        %4285 = vmatprep.mubr.bf16.mxu0 0
        %4286 = vmatmul.mubr.bf16.gmra.mrb[0].mxu0 %v4109
        %v4287 = vpop.f32.mrb[0].mxu0
        %v4288 = vadd.f32 0.0, %v4287
        %v4289 = vpop.f32.mrb[0].mxu0
        %v4290 = vadd.f32 0.0, %v4289
        %v4291 = vpop.f32.mrb[0].mxu0
        %v4292 = vadd.f32 0.0, %v4291
        %v4293 = vpop.f32.mrb[0].mxu0
        %v4294 = vadd.f32 0.0, %v4293
        %4295 = vmatprep.mubr.bf16.mxu0 0
        %4296 = vmatmul.mubr.bf16.gmra.mrb[0].mxu0 %v4110
        %v4297 = vpop.f32.mrb[0].mxu0
        %v4298 = vadd.f32 0.0, %v4297
        %v4299 = vpop.f32.mrb[0].mxu0
        %v4300 = vadd.f32 0.0, %v4299
        %v4301 = vpop.f32.mrb[0].mxu0
        %v4302 = vadd.f32 0.0, %v4301
        %v4303 = vpop.f32.mrb[0].mxu0
        %v4304 = vadd.f32 0.0, %v4303
        %4305 = vmatprep.mubr.bf16.mxu0 0
        %4306 = vmatmul.mubr.bf16.gmra.mrb[0].mxu0 %v4111
        %v4307 = vpop.f32.mrb[0].mxu0
        %v4308 = vadd.f32 0.0, %v4307
        %v4309 = vpop.f32.mrb[0].mxu0
        %v4310 = vadd.f32 0.0, %v4309
        %v4311 = vpop.f32.mrb[0].mxu0
        %v4312 = vadd.f32 0.0, %v4311
        %v4313 = vpop.f32.mrb[0].mxu0
        %v4314 = vadd.f32 0.0, %v4313
        %4315 = vmatprep.mubr.bf16.mxu0 0
        %4316 = vmatmul.mubr.bf16.gmra.mrb[0].mxu0 %v4112
        %v4317 = vpop.f32.mrb[0].mxu0
        %v4318 = vadd.f32 0.0, %v4317
        %v4319 = vpop.f32.mrb[0].mxu0
        %v4320 = vadd.f32 0.0, %v4319
        %v4321 = vpop.f32.mrb[0].mxu0
        %v4322 = vadd.f32 0.0, %v4321
        %v4323 = vpop.f32.mrb[0].mxu0
        %v4324 = vadd.f32 0.0, %v4323
        %4325 = vmatprep.mubr.bf16.mxu0 0
        %4326 = vmatmul.mubr.bf16.gmra.mrb[0].mxu0 %v4113
        %v4327 = vpop.f32.mrb[0].mxu0
        %v4328 = vadd.f32 0.0, %v4327
        %v4329 = vpop.f32.mrb[0].mxu0
        %v4330 = vadd.f32 0.0, %v4329
        %v4331 = vpop.f32.mrb[0].mxu0
        %v4332 = vadd.f32 0.0, %v4331
        %v4333 = vpop.f32.mrb[0].mxu0
        %v4334 = vadd.f32 0.0, %v4333
        %4335 = vmatprep.mubr.bf16.mxu0 0
        %4336 = vmatmul.mubr.bf16.gmra.mrb[0].mxu0 %v4114
        %v4337 = vpop.f32.mrb[0].mxu0
        %v4338 = vadd.f32 0.0, %v4337
        %v4339 = vpop.f32.mrb[0].mxu0
        %v4340 = vadd.f32 0.0, %v4339
        %v4341 = vpop.f32.mrb[0].mxu0
        %v4342 = vadd.f32 0.0, %v4341
        %v4343 = vpop.f32.mrb[0].mxu0
        %v4344 = vadd.f32 0.0, %v4343
        %4345 = vmatprep.mubr.bf16.mxu0 0
        %4346 = vmatmul.mubr.bf16.gmra.mrb[0].mxu0 %v4115
        %v4347 = vpop.f32.mrb[0].mxu0
        %v4348 = vadd.f32 0.0, %v4347
        %v4349 = vpop.f32.mrb[0].mxu0
        %v4350 = vadd.f32 0.0, %v4349
        %v4351 = vpop.f32.mrb[0].mxu0
        %v4352 = vadd.f32 0.0, %v4351
        %v4353 = vpop.f32.mrb[0].mxu0
        %v4354 = vadd.f32 0.0, %v4353
        %4355 = vmatprep.mubr.bf16.mxu0 0
        %4356 = vmatmul.mubr.bf16.gmra.mrb[0].mxu0 %v4116
        %v4357 = vpop.f32.mrb[0].mxu0
        %v4358 = vadd.f32 0.0, %v4357
        %v4359 = vpop.f32.mrb[0].mxu0
        %v4360 = vadd.f32 0.0, %v4359
        %v4361 = vpop.f32.mrb[0].mxu0
        %v4362 = vadd.f32 0.0, %v4361
        %v4363 = vpop.f32.mrb[0].mxu0
        %v4364 = vadd.f32 0.0, %v4363
        %4365 = vdwg.mxu0
        %4366 = vmatprep.subr.bf16.mxu0 0
        %4367 = vmatpush1.bf16.msra.mxu0 %v4207
        %4368 = vmatprep.subr.bf16.mxu0 0
        %4369 = vmatpush1.bf16.msra.mxu0 %v4210
        %4370 = vmatprep.subr.bf16.mxu0 0
        %4371 = vmatpush1.bf16.msra.mxu0 %v4213
        %4372 = vmatprep.subr.bf16.mxu0 0
        %4373 = vmatpush1.bf16.msra.mxu0 %v4216
        %4374 = vmatprep.subr.bf16.mxu0 0
        %4375 = vmatpush1.bf16.msra.mxu0 %v4219
        %4376 = vmatprep.subr.bf16.mxu0 0
        %4377 = vmatpush1.bf16.msra.mxu0 %v4222
        %4378 = vmatprep.subr.bf16.mxu0 0
        %4379 = vmatpush1.bf16.msra.mxu0 %v4225
        %4380 = vmatprep.subr.bf16.mxu0 0
        %4381 = vmatpush1.bf16.msra.mxu0 %v4228
        %4382 = vmatprep.subr.bf16.mxu0 0
        %4383 = vmatpush1.bf16.msra.mxu0 0
        %4384 = vmatprep.subr.bf16.mxu0 0
        %4385 = vmatpush1.bf16.msra.mxu0 0
        %4386 = vmatprep.subr.bf16.mxu0 0
        %4387 = vmatpush1.bf16.msra.mxu0 0
        %4388 = vmatprep.subr.bf16.mxu0 0
        %4389 = vmatpush1.bf16.msra.mxu0 0
        %4390 = vmatprep.subr.bf16.mxu0 0
        %4391 = vmatpush1.bf16.msra.mxu0 0
        %4392 = vmatprep.subr.bf16.mxu0 0
        %4393 = vmatpush1.bf16.msra.mxu0 0
        %4394 = vmatprep.subr.bf16.mxu0 0
        %4395 = vmatpush1.bf16.msra.mxu0 0
        %4396 = vmatprep.subr.bf16.mxu0 0
        %4397 = vmatpush1.bf16.msra.mxu0 0
        %4398 = vmatprep.mubr.bf16.mxu0 0
        %4399 = vmatmul.mubr.bf16.gmra.mrb[0].mxu0 %v4109
        %v4400 = vpop.f32.mrb[0].mxu0
        %v4401 = vadd.f32 0.0, %v4400
        %v4402 = vpop.f32.mrb[0].mxu0
        %v4403 = vpop.f32.mrb[0].mxu0
        %v4404 = vadd.f32 0.0, %v4403
        %v4405 = vpop.f32.mrb[0].mxu0
        %4406 = vmatprep.mubr.bf16.mxu0 0
        %4407 = vmatmul.mubr.bf16.gmra.mrb[0].mxu0 %v4110
        %v4408 = vpop.f32.mrb[0].mxu0
        %v4409 = vadd.f32 0.0, %v4408
        %v4410 = vpop.f32.mrb[0].mxu0
        %v4411 = vpop.f32.mrb[0].mxu0
        %v4412 = vadd.f32 0.0, %v4411
        %v4413 = vpop.f32.mrb[0].mxu0
        %4414 = vmatprep.mubr.bf16.mxu0 0
        %4415 = vmatmul.mubr.bf16.gmra.mrb[0].mxu0 %v4111
        %v4416 = vpop.f32.mrb[0].mxu0
        %v4417 = vadd.f32 0.0, %v4416
        %v4418 = vpop.f32.mrb[0].mxu0
        %v4419 = vpop.f32.mrb[0].mxu0
        %v4420 = vadd.f32 0.0, %v4419
        %v4421 = vpop.f32.mrb[0].mxu0
        %4422 = vmatprep.mubr.bf16.mxu0 0
        %4423 = vmatmul.mubr.bf16.gmra.mrb[0].mxu0 %v4112
        %v4424 = vpop.f32.mrb[0].mxu0
        %v4425 = vadd.f32 0.0, %v4424
        %v4426 = vpop.f32.mrb[0].mxu0
        %v4427 = vpop.f32.mrb[0].mxu0
        %v4428 = vadd.f32 0.0, %v4427
        %v4429 = vpop.f32.mrb[0].mxu0
        %4430 = vmatprep.mubr.bf16.mxu0 0
        %4431 = vmatmul.mubr.bf16.gmra.mrb[0].mxu0 %v4113
        %v4432 = vpop.f32.mrb[0].mxu0
        %v4433 = vadd.f32 0.0, %v4432
        %v4434 = vpop.f32.mrb[0].mxu0
        %v4435 = vpop.f32.mrb[0].mxu0
        %v4436 = vadd.f32 0.0, %v4435
        %v4437 = vpop.f32.mrb[0].mxu0
        %4438 = vmatprep.mubr.bf16.mxu0 0
        %4439 = vmatmul.mubr.bf16.gmra.mrb[0].mxu0 %v4114
        %v4440 = vpop.f32.mrb[0].mxu0
        %v4441 = vadd.f32 0.0, %v4440
        %v4442 = vpop.f32.mrb[0].mxu0
        %v4443 = vpop.f32.mrb[0].mxu0
        %v4444 = vadd.f32 0.0, %v4443
        %v4445 = vpop.f32.mrb[0].mxu0
        %4446 = vmatprep.mubr.bf16.mxu0 0
        %4447 = vmatmul.mubr.bf16.gmra.mrb[0].mxu0 %v4115
        %v4448 = vpop.f32.mrb[0].mxu0
        %v4449 = vadd.f32 0.0, %v4448
        %v4450 = vpop.f32.mrb[0].mxu0
        %v4451 = vpop.f32.mrb[0].mxu0
        %v4452 = vadd.f32 0.0, %v4451
        %v4453 = vpop.f32.mrb[0].mxu0
        %4454 = vmatprep.mubr.bf16.mxu0 0
        %4455 = vmatmul.mubr.bf16.gmra.mrb[0].mxu0 %v4116
        %v4456 = vpop.f32.mrb[0].mxu0
        %v4457 = vadd.f32 0.0, %v4456
        %v4458 = vpop.f32.mrb[0].mxu0
        %v4459 = vpop.f32.mrb[0].mxu0
        %v4460 = vadd.f32 0.0, %v4459
        %v4461 = vpop.f32.mrb[0].mxu0
        %4462 = vdwg.mxu0
        %v4463 = vadd.f32 %v3980, %v4288
        %v4464 = vadd.f32 %v3981, %v4290
        %v4465 = vadd.f32 %v3982, %v4401
        %v4466 = vadd.f32 %v3983, %v4292
        %v4467 = vadd.f32 %v3984, %v4294
        %v4468 = vadd.f32 %v3985, %v4404
        %v4469 = vadd.f32 %v3986, %v4298
        %v4470 = vadd.f32 %v3987, %v4300
        %v4471 = vadd.f32 %v3988, %v4409
        %v4472 = vadd.f32 %v3989, %v4302
        %v4473 = vadd.f32 %v3990, %v4304
        %v4474 = vadd.f32 %v3991, %v4412
        %v4475 = vadd.f32 %v3992, %v4308
        %v4476 = vadd.f32 %v3993, %v4310
        %v4477 = vadd.f32 %v3994, %v4417
        %v4478 = vadd.f32 %v3995, %v4312
        %v4479 = vadd.f32 %v3996, %v4314
        %v4480 = vadd.f32 %v3997, %v4420
        %v4481 = vadd.f32 %v3998, %v4318
        %v4482 = vadd.f32 %v3999, %v4320
        %v4483 = vadd.f32 %v4000, %v4425
        %v4484 = vadd.f32 %v4001, %v4322
        %v4485 = vadd.f32 %v4002, %v4324
        %v4486 = vadd.f32 %v4003, %v4428
        %v4487 = vadd.f32 %v4004, %v4328
        %v4488 = vadd.f32 %v4005, %v4330
        %v4489 = vadd.f32 %v4006, %v4433
        %v4490 = vadd.f32 %v4007, %v4332
        %v4491 = vadd.f32 %v4008, %v4334
        %v4492 = vadd.f32 %v4009, %v4436
        %v4493 = vadd.f32 %v4010, %v4338
        %v4494 = vadd.f32 %v4011, %v4340
        %v4495 = vadd.f32 %v4012, %v4441
        %v4496 = vadd.f32 %v4013, %v4342
        %v4497 = vadd.f32 %v4014, %v4344
        %v4498 = vadd.f32 %v4015, %v4444
        %v4499 = vadd.f32 %v4016, %v4348
        %v4500 = vadd.f32 %v4017, %v4350
        %v4501 = vadd.f32 %v4018, %v4449
        %v4502 = vadd.f32 %v4019, %v4352
        %v4503 = vadd.f32 %v4020, %v4354
        %v4504 = vadd.f32 %v4021, %v4452
        %v4505 = vadd.f32 %v4022, %v4358
        %v4506 = vadd.f32 %v4023, %v4360
        %v4507 = vadd.f32 %v4024, %v4457
        %v4508 = vadd.f32 %v4025, %v4362
        %v4509 = vadd.f32 %v4026, %v4364
        %v4510 = vadd.f32 %v4027, %v4460
        %v4511 = vld [vmem:[%s4028] sm:$0xf]
        %v4512 = vld [vmem:[%s4028 + $0x4] sm:$0xf]
        %v4513 = vld [vmem:[%s4028 + $0x8] sm:$0x1]
        %v4514 = vld [vmem:[%s4028 + $0xc] sm:$0xf]
        %v4515 = vld [vmem:[%s4028 + $0x10] sm:$0xf]
        %v4516 = vld [vmem:[%s4028 + $0x14] sm:$0x1]
        %v4517 = vld [vmem:[%s4028 + $0x18] sm:$0xf]
        %v4518 = vld [vmem:[%s4028 + $0x1c] sm:$0xf]
        %v4519 = vld [vmem:[%s4028 + $0x20] sm:$0x1]
        %v4520 = vld [vmem:[%s4028 + $0x24] sm:$0xf]
        %v4521 = vld [vmem:[%s4028 + $0x28] sm:$0xf]
        %v4522 = vld [vmem:[%s4028 + $0x2c] sm:$0x1]
        %v4523 = vld [vmem:[%s4028 + $0x30] sm:$0xf]
        %v4524 = vld [vmem:[%s4028 + $0x34] sm:$0xf]
        %v4525 = vld [vmem:[%s4028 + $0x38] sm:$0x1]
        %v4526 = vld [vmem:[%s4028 + $0x3c] sm:$0xf]
        %v4527 = vld [vmem:[%s4028 + $0x40] sm:$0xf]
        %v4528 = vld [vmem:[%s4028 + $0x44] sm:$0x1]
        %v4529 = vld [vmem:[%s4028 + $0x48] sm:$0xf]
        %v4530 = vld [vmem:[%s4028 + $0x4c] sm:$0xf]
        %v4531 = vld [vmem:[%s4028 + $0x50] sm:$0x1]
        %v4532 = vld [vmem:[%s4028 + $0x54] sm:$0xf]
        %v4533 = vld [vmem:[%s4028 + $0x58] sm:$0xf]
        %v4534 = vld [vmem:[%s4028 + $0x5c] sm:$0x1]
        %v4536 = vshrl.u32 %v4511, 16
        %v4538 = vrot.slane %v4536, 4
        %v4539 = vshll.u32 %v4511, 16
        %v4541 = vrot.slane %v4539, 5
        %v4542 = vor.u32 %v4538, %v4541
        %v4543 = vrot.slane %v4542, 4
        %v4545 = vshll.u32 %v4512, 16
        %v4547 = vrot.slane %v4545, 5
        %v4548 = vsel %vm828, %v4543, %v4547
        %v4549 = vshrl.u32 %v4512, 16
        %v4551 = vrot.slane %v4549, 4
        %v4552 = vor.u32 %v4551, %v4547
        %v4553 = vrot.slane %v4552, 4
        %v4555 = vshll.u32 %v4513, 16
        %v4557 = vrot.slane %v4555, 5
        %v4558 = vsel %vm828, %v4553, %v4557
        %v4560 = vshrl.u32 %v4514, 16
        %v4562 = vrot.slane %v4560, 4
        %v4563 = vshll.u32 %v4514, 16
        %v4565 = vrot.slane %v4563, 5
        %v4566 = vor.u32 %v4562, %v4565
        %v4567 = vrot.slane %v4566, 4
        %v4569 = vshll.u32 %v4515, 16
        %v4571 = vrot.slane %v4569, 5
        %v4572 = vsel %vm828, %v4567, %v4571
        %v4573 = vshrl.u32 %v4515, 16
        %v4575 = vrot.slane %v4573, 4
        %v4576 = vor.u32 %v4575, %v4571
        %v4577 = vrot.slane %v4576, 4
        %v4579 = vshll.u32 %v4516, 16
        %v4581 = vrot.slane %v4579, 5
        %v4582 = vsel %vm828, %v4577, %v4581
        %v4584 = vshrl.u32 %v4517, 16
        %v4586 = vrot.slane %v4584, 4
        %v4587 = vshll.u32 %v4517, 16
        %v4589 = vrot.slane %v4587, 5
        %v4590 = vor.u32 %v4586, %v4589
        %v4591 = vrot.slane %v4590, 4
        %v4593 = vshll.u32 %v4518, 16
        %v4595 = vrot.slane %v4593, 5
        %v4596 = vsel %vm828, %v4591, %v4595
        %v4597 = vshrl.u32 %v4518, 16
        %v4599 = vrot.slane %v4597, 4
        %v4600 = vor.u32 %v4599, %v4595
        %v4601 = vrot.slane %v4600, 4
        %v4603 = vshll.u32 %v4519, 16
        %v4605 = vrot.slane %v4603, 5
        %v4606 = vsel %vm828, %v4601, %v4605
        %v4608 = vshrl.u32 %v4520, 16
        %v4610 = vrot.slane %v4608, 4
        %v4611 = vshll.u32 %v4520, 16
        %v4613 = vrot.slane %v4611, 5
        %v4614 = vor.u32 %v4610, %v4613
        %v4615 = vrot.slane %v4614, 4
        %v4617 = vshll.u32 %v4521, 16
        %v4619 = vrot.slane %v4617, 5
        %v4620 = vsel %vm828, %v4615, %v4619
        %v4621 = vshrl.u32 %v4521, 16
        %v4623 = vrot.slane %v4621, 4
        %v4624 = vor.u32 %v4623, %v4619
        %v4625 = vrot.slane %v4624, 4
        %v4627 = vshll.u32 %v4522, 16
        %v4629 = vrot.slane %v4627, 5
        %v4630 = vsel %vm828, %v4625, %v4629
        %v4632 = vshrl.u32 %v4523, 16
        %v4634 = vrot.slane %v4632, 4
        %v4635 = vshll.u32 %v4523, 16
        %v4637 = vrot.slane %v4635, 5
        %v4638 = vor.u32 %v4634, %v4637
        %v4639 = vrot.slane %v4638, 4
        %v4641 = vshll.u32 %v4524, 16
        %v4643 = vrot.slane %v4641, 5
        %v4644 = vsel %vm828, %v4639, %v4643
        %v4645 = vshrl.u32 %v4524, 16
        %v4647 = vrot.slane %v4645, 4
        %v4648 = vor.u32 %v4647, %v4643
        %v4649 = vrot.slane %v4648, 4
        %v4651 = vshll.u32 %v4525, 16
        %v4653 = vrot.slane %v4651, 5
        %v4654 = vsel %vm828, %v4649, %v4653
        %v4656 = vshrl.u32 %v4526, 16
        %v4658 = vrot.slane %v4656, 4
        %v4659 = vshll.u32 %v4526, 16
        %v4661 = vrot.slane %v4659, 5
        %v4662 = vor.u32 %v4658, %v4661
        %v4663 = vrot.slane %v4662, 4
        %v4665 = vshll.u32 %v4527, 16
        %v4667 = vrot.slane %v4665, 5
        %v4668 = vsel %vm828, %v4663, %v4667
        %v4669 = vshrl.u32 %v4527, 16
        %v4671 = vrot.slane %v4669, 4
        %v4672 = vor.u32 %v4671, %v4667
        %v4673 = vrot.slane %v4672, 4
        %v4675 = vshll.u32 %v4528, 16
        %v4677 = vrot.slane %v4675, 5
        %v4678 = vsel %vm828, %v4673, %v4677
        %v4680 = vshrl.u32 %v4529, 16
        %v4682 = vrot.slane %v4680, 4
        %v4683 = vshll.u32 %v4529, 16
        %v4685 = vrot.slane %v4683, 5
        %v4686 = vor.u32 %v4682, %v4685
        %v4687 = vrot.slane %v4686, 4
        %v4689 = vshll.u32 %v4530, 16
        %v4691 = vrot.slane %v4689, 5
        %v4692 = vsel %vm828, %v4687, %v4691
        %v4693 = vshrl.u32 %v4530, 16
        %v4695 = vrot.slane %v4693, 4
        %v4696 = vor.u32 %v4695, %v4691
        %v4697 = vrot.slane %v4696, 4
        %v4699 = vshll.u32 %v4531, 16
        %v4701 = vrot.slane %v4699, 5
        %v4702 = vsel %vm828, %v4697, %v4701
        %v4704 = vshrl.u32 %v4532, 16
        %v4706 = vrot.slane %v4704, 4
        %v4707 = vshll.u32 %v4532, 16
        %v4709 = vrot.slane %v4707, 5
        %v4710 = vor.u32 %v4706, %v4709
        %v4711 = vrot.slane %v4710, 4
        %v4713 = vshll.u32 %v4533, 16
        %v4715 = vrot.slane %v4713, 5
        %v4716 = vsel %vm828, %v4711, %v4715
        %v4717 = vshrl.u32 %v4533, 16
        %v4719 = vrot.slane %v4717, 4
        %v4720 = vor.u32 %v4719, %v4715
        %v4721 = vrot.slane %v4720, 4
        %v4723 = vshll.u32 %v4534, 16
        %v4725 = vrot.slane %v4723, 5
        %v4726 = vsel %vm828, %v4721, %v4725
        %v4727 = vld [vmem:[#allocation9 + $0x540] sm:$0xff]
        %v4728 = vld [vmem:[#allocation9 + $0x548] sm:$0xf]
        %v4729 = vld [vmem:[#allocation9 + $0x54c] sm:$0xff]
        %v4730 = vld [vmem:[#allocation9 + $0x554] sm:$0xf]
        %v4731 = vld [vmem:[#allocation9 + $0x558] sm:$0xff]
        %v4732 = vld [vmem:[#allocation9 + $0x560] sm:$0xf]
        %v4733 = vld [vmem:[#allocation9 + $0x564] sm:$0xff]
        %v4734 = vld [vmem:[#allocation9 + $0x56c] sm:$0xf]
        %v4735 = vld [vmem:[#allocation9 + $0x570] sm:$0xff]
        %v4736 = vld [vmem:[#allocation9 + $0x578] sm:$0xf]
        %v4737 = vld [vmem:[#allocation9 + $0x57c] sm:$0xff]
        %v4738 = vld [vmem:[#allocation9 + $0x584] sm:$0xf]
        %v4739 = vld [vmem:[#allocation9 + $0x588] sm:$0xff]
        %v4740 = vld [vmem:[#allocation9 + $0x590] sm:$0xf]
        %v4741 = vld [vmem:[#allocation9 + $0x594] sm:$0xff]
        %v4742 = vld [vmem:[#allocation9 + $0x59c] sm:$0xf]
        %v4743 = vld [vmem:[#allocation9 + $0x5a0] sm:$0xff]
        %v4744 = vld [vmem:[#allocation9 + $0x5a8] sm:$0xf]
        %v4745 = vld [vmem:[#allocation9 + $0x5ac] sm:$0xff]
        %v4746 = vld [vmem:[#allocation9 + $0x5b4] sm:$0xf]
        %v4747 = vld [vmem:[#allocation9 + $0x5b8] sm:$0xff]
        %v4748 = vld [vmem:[#allocation9 + $0x5c0] sm:$0xf]
        %v4749 = vld [vmem:[#allocation9 + $0x5c4] sm:$0xff]
        %v4750 = vld [vmem:[#allocation9 + $0x5cc] sm:$0xf]
        %v4751 = vld [vmem:[#allocation9 + $0x5d0] sm:$0xff]
        %v4752 = vld [vmem:[#allocation9 + $0x5d8] sm:$0xf]
        %v4753 = vld [vmem:[#allocation9 + $0x5dc] sm:$0xff]
        %v4754 = vld [vmem:[#allocation9 + $0x5e4] sm:$0xf]
        %v4755 = vld [vmem:[#allocation9 + $0x5e8] sm:$0xff]
        %v4756 = vld [vmem:[#allocation9 + $0x5f0] sm:$0xf]
        %v4757 = vld [vmem:[#allocation9 + $0x5f4] sm:$0xff]
        %v4758 = vld [vmem:[#allocation9 + $0x5fc] sm:$0xf]
        %v4759 = vunpack.c.l.b16 %v4548
        %v4760 = vunpack.c.l.b16 %v4558
        %v4761 = vunpack.c.l.b16 %v4572
        %v4762 = vunpack.c.l.b16 %v4582
        %v4763 = vunpack.c.l.b16 %v4596
        %v4764 = vunpack.c.l.b16 %v4606
        %v4765 = vunpack.c.l.b16 %v4620
        %v4766 = vunpack.c.l.b16 %v4630
        %v4767 = vunpack.c.l.b16 %v4644
        %v4768 = vunpack.c.l.b16 %v4654
        %v4769 = vunpack.c.l.b16 %v4668
        %v4770 = vunpack.c.l.b16 %v4678
        %v4771 = vunpack.c.l.b16 %v4692
        %v4772 = vunpack.c.l.b16 %v4702
        %v4773 = vunpack.c.l.b16 %v4716
        %v4774 = vunpack.c.l.b16 %v4726
        %v4775 = vpack.c.b16 %v4760, %v4759
        %v4776 = vpack.c.b16 %v4762, %v4761
        %v4777 = vpack.c.b16 %v4764, %v4763
        %v4778 = vpack.c.b16 %v4766, %v4765
        %v4779 = vpack.c.b16 %v4768, %v4767
        %v4780 = vpack.c.b16 %v4770, %v4769
        %v4781 = vpack.c.b16 %v4772, %v4771
        %v4782 = vpack.c.b16 %v4774, %v4773
        %v4823 = vunpack.c.l.b16 %v4727
        %v4824 = vunpack.c.h.b16 %v4727
        %v4825 = vunpack.c.l.b16 %v4728
        %v4826 = vunpack.c.l.b16 %v4729
        %v4827 = vunpack.c.h.b16 %v4729
        %v4828 = vunpack.c.l.b16 %v4730
        %v4829 = vunpack.c.l.b16 %v4731
        %v4830 = vunpack.c.h.b16 %v4731
        %v4831 = vunpack.c.l.b16 %v4732
        %v4832 = vunpack.c.l.b16 %v4733
        %v4833 = vunpack.c.h.b16 %v4733
        %v4834 = vunpack.c.l.b16 %v4734
        %v4835 = vunpack.c.l.b16 %v4735
        %v4836 = vunpack.c.h.b16 %v4735
        %v4837 = vunpack.c.l.b16 %v4736
        %v4838 = vunpack.c.l.b16 %v4737
        %v4839 = vunpack.c.h.b16 %v4737
        %v4840 = vunpack.c.l.b16 %v4738
        %v4841 = vunpack.c.l.b16 %v4739
        %v4842 = vunpack.c.h.b16 %v4739
        %v4843 = vunpack.c.l.b16 %v4740
        %v4844 = vunpack.c.l.b16 %v4741
        %v4845 = vunpack.c.h.b16 %v4741
        %v4846 = vunpack.c.l.b16 %v4742
        %v4847 = vunpack.c.l.b16 %v4743
        %v4848 = vunpack.c.h.b16 %v4743
        %v4849 = vunpack.c.l.b16 %v4744
        %v4850 = vunpack.c.l.b16 %v4745
        %v4851 = vunpack.c.h.b16 %v4745
        %v4852 = vunpack.c.l.b16 %v4746
        %v4853 = vunpack.c.l.b16 %v4747
        %v4854 = vunpack.c.h.b16 %v4747
        %v4855 = vunpack.c.l.b16 %v4748
        %v4856 = vunpack.c.l.b16 %v4749
        %v4857 = vunpack.c.h.b16 %v4749
        %v4858 = vunpack.c.l.b16 %v4750
        %v4859 = vunpack.c.l.b16 %v4751
        %v4860 = vunpack.c.h.b16 %v4751
        %v4861 = vunpack.c.l.b16 %v4752
        %v4862 = vunpack.c.l.b16 %v4753
        %v4863 = vunpack.c.h.b16 %v4753
        %v4864 = vunpack.c.l.b16 %v4754
        %v4865 = vunpack.c.l.b16 %v4755
        %v4866 = vunpack.c.h.b16 %v4755
        %v4867 = vunpack.c.l.b16 %v4756
        %v4868 = vunpack.c.l.b16 %v4757
        %v4869 = vunpack.c.h.b16 %v4757
        %v4870 = vunpack.c.l.b16 %v4758
        %v4871 = vpack.c.b16 %v4826, %v4823
        %v4872 = vpack.c.b16 %v4827, %v4824
        %v4873 = vpack.c.b16 %v4828, %v4825
        %v4874 = vpack.c.b16 %v4832, %v4829
        %v4875 = vpack.c.b16 %v4833, %v4830
        %v4876 = vpack.c.b16 %v4834, %v4831
        %v4877 = vpack.c.b16 %v4838, %v4835
        %v4878 = vpack.c.b16 %v4839, %v4836
        %v4879 = vpack.c.b16 %v4840, %v4837
        %v4880 = vpack.c.b16 %v4844, %v4841
        %v4881 = vpack.c.b16 %v4845, %v4842
        %v4882 = vpack.c.b16 %v4846, %v4843
        %v4883 = vpack.c.b16 %v4850, %v4847
        %v4884 = vpack.c.b16 %v4851, %v4848
        %v4885 = vpack.c.b16 %v4852, %v4849
        %v4886 = vpack.c.b16 %v4856, %v4853
        %v4887 = vpack.c.b16 %v4857, %v4854
        %v4888 = vpack.c.b16 %v4858, %v4855
        %v4889 = vpack.c.b16 %v4862, %v4859
        %v4890 = vpack.c.b16 %v4863, %v4860
        %v4891 = vpack.c.b16 %v4864, %v4861
        %v4892 = vpack.c.b16 %v4868, %v4865
        %v4893 = vpack.c.b16 %v4869, %v4866
        %v4894 = vpack.c.b16 %v4870, %v4867
        %4919 = vmatprep.subr.bf16.mxu0 %v4872
        %4920 = vmatpush1.bf16.msra.mxu0 %v4871
        %4921 = vmatprep.subr.bf16.mxu0 %v4875
        %4922 = vmatpush1.bf16.msra.mxu0 %v4874
        %4923 = vmatprep.subr.bf16.mxu0 %v4878
        %4924 = vmatpush1.bf16.msra.mxu0 %v4877
        %4925 = vmatprep.subr.bf16.mxu0 %v4881
        %4926 = vmatpush1.bf16.msra.mxu0 %v4880
        %4927 = vmatprep.subr.bf16.mxu0 %v4884
        %4928 = vmatpush1.bf16.msra.mxu0 %v4883
        %4929 = vmatprep.subr.bf16.mxu0 %v4887
        %4930 = vmatpush1.bf16.msra.mxu0 %v4886
        %4931 = vmatprep.subr.bf16.mxu0 %v4890
        %4932 = vmatpush1.bf16.msra.mxu0 %v4889
        %4933 = vmatprep.subr.bf16.mxu0 %v4893
        %4934 = vmatpush1.bf16.msra.mxu0 %v4892
        %4935 = vmatprep.subr.bf16.mxu0 0
        %4936 = vmatpush1.bf16.msra.mxu0 0
        %4937 = vmatprep.subr.bf16.mxu0 0
        %4938 = vmatpush1.bf16.msra.mxu0 0
        %4939 = vmatprep.subr.bf16.mxu0 0
        %4940 = vmatpush1.bf16.msra.mxu0 0
        %4941 = vmatprep.subr.bf16.mxu0 0
        %4942 = vmatpush1.bf16.msra.mxu0 0
        %4943 = vmatprep.subr.bf16.mxu0 0
        %4944 = vmatpush1.bf16.msra.mxu0 0
        %4945 = vmatprep.subr.bf16.mxu0 0
        %4946 = vmatpush1.bf16.msra.mxu0 0
        %4947 = vmatprep.subr.bf16.mxu0 0
        %4948 = vmatpush1.bf16.msra.mxu0 0
        %4949 = vmatprep.subr.bf16.mxu0 0
        %4950 = vmatpush1.bf16.msra.mxu0 0
        %4951 = vmatprep.mubr.bf16.mxu0 0
        %4952 = vmatmul.mubr.bf16.gmra.mrb[0].mxu0 %v4775
        %v4953 = vpop.f32.mrb[0].mxu0
        %v4954 = vadd.f32 0.0, %v4953
        %v4955 = vpop.f32.mrb[0].mxu0
        %v4956 = vadd.f32 0.0, %v4955
        %v4957 = vpop.f32.mrb[0].mxu0
        %v4958 = vadd.f32 0.0, %v4957
        %v4959 = vpop.f32.mrb[0].mxu0
        %v4960 = vadd.f32 0.0, %v4959
        %4961 = vmatprep.mubr.bf16.mxu0 0
        %4962 = vmatmul.mubr.bf16.gmra.mrb[0].mxu0 %v4776
        %v4963 = vpop.f32.mrb[0].mxu0
        %v4964 = vadd.f32 0.0, %v4963
        %v4965 = vpop.f32.mrb[0].mxu0
        %v4966 = vadd.f32 0.0, %v4965
        %v4967 = vpop.f32.mrb[0].mxu0
        %v4968 = vadd.f32 0.0, %v4967
        %v4969 = vpop.f32.mrb[0].mxu0
        %v4970 = vadd.f32 0.0, %v4969
        %4971 = vmatprep.mubr.bf16.mxu0 0
        %4972 = vmatmul.mubr.bf16.gmra.mrb[0].mxu0 %v4777
        %v4973 = vpop.f32.mrb[0].mxu0
        %v4974 = vadd.f32 0.0, %v4973
        %v4975 = vpop.f32.mrb[0].mxu0
        %v4976 = vadd.f32 0.0, %v4975
        %v4977 = vpop.f32.mrb[0].mxu0
        %v4978 = vadd.f32 0.0, %v4977
        %v4979 = vpop.f32.mrb[0].mxu0
        %v4980 = vadd.f32 0.0, %v4979
        %4981 = vmatprep.mubr.bf16.mxu0 0
        %4982 = vmatmul.mubr.bf16.gmra.mrb[0].mxu0 %v4778
        %v4983 = vpop.f32.mrb[0].mxu0
        %v4984 = vadd.f32 0.0, %v4983
        %v4985 = vpop.f32.mrb[0].mxu0
        %v4986 = vadd.f32 0.0, %v4985
        %v4987 = vpop.f32.mrb[0].mxu0
        %v4988 = vadd.f32 0.0, %v4987
        %v4989 = vpop.f32.mrb[0].mxu0
        %v4990 = vadd.f32 0.0, %v4989
        %4991 = vmatprep.mubr.bf16.mxu0 0
        %4992 = vmatmul.mubr.bf16.gmra.mrb[0].mxu0 %v4779
        %v4993 = vpop.f32.mrb[0].mxu0
        %v4994 = vadd.f32 0.0, %v4993
        %v4995 = vpop.f32.mrb[0].mxu0
        %v4996 = vadd.f32 0.0, %v4995
        %v4997 = vpop.f32.mrb[0].mxu0
        %v4998 = vadd.f32 0.0, %v4997
        %v4999 = vpop.f32.mrb[0].mxu0
        %v5000 = vadd.f32 0.0, %v4999
        %5001 = vmatprep.mubr.bf16.mxu0 0
        %5002 = vmatmul.mubr.bf16.gmra.mrb[0].mxu0 %v4780
        %v5003 = vpop.f32.mrb[0].mxu0
        %v5004 = vadd.f32 0.0, %v5003
        %v5005 = vpop.f32.mrb[0].mxu0
        %v5006 = vadd.f32 0.0, %v5005
        %v5007 = vpop.f32.mrb[0].mxu0
        %v5008 = vadd.f32 0.0, %v5007
        %v5009 = vpop.f32.mrb[0].mxu0
        %v5010 = vadd.f32 0.0, %v5009
        %5011 = vmatprep.mubr.bf16.mxu0 0
        %5012 = vmatmul.mubr.bf16.gmra.mrb[0].mxu0 %v4781
        %v5013 = vpop.f32.mrb[0].mxu0
        %v5014 = vadd.f32 0.0, %v5013
        %v5015 = vpop.f32.mrb[0].mxu0
        %v5016 = vadd.f32 0.0, %v5015
        %v5017 = vpop.f32.mrb[0].mxu0
        %v5018 = vadd.f32 0.0, %v5017
        %v5019 = vpop.f32.mrb[0].mxu0
        %v5020 = vadd.f32 0.0, %v5019
        %5021 = vmatprep.mubr.bf16.mxu0 0
        %5022 = vmatmul.mubr.bf16.gmra.mrb[0].mxu0 %v4782
        %v5023 = vpop.f32.mrb[0].mxu0
        %v5024 = vadd.f32 0.0, %v5023
        %v5025 = vpop.f32.mrb[0].mxu0
        %v5026 = vadd.f32 0.0, %v5025
        %v5027 = vpop.f32.mrb[0].mxu0
        %v5028 = vadd.f32 0.0, %v5027
        %v5029 = vpop.f32.mrb[0].mxu0
        %v5030 = vadd.f32 0.0, %v5029
        %5031 = vdwg.mxu0
        %5032 = vmatprep.subr.bf16.mxu0 0
        %5033 = vmatpush1.bf16.msra.mxu0 %v4873
        %5034 = vmatprep.subr.bf16.mxu0 0
        %5035 = vmatpush1.bf16.msra.mxu0 %v4876
        %5036 = vmatprep.subr.bf16.mxu0 0
        %5037 = vmatpush1.bf16.msra.mxu0 %v4879
        %5038 = vmatprep.subr.bf16.mxu0 0
        %5039 = vmatpush1.bf16.msra.mxu0 %v4882
        %5040 = vmatprep.subr.bf16.mxu0 0
        %5041 = vmatpush1.bf16.msra.mxu0 %v4885
        %5042 = vmatprep.subr.bf16.mxu0 0
        %5043 = vmatpush1.bf16.msra.mxu0 %v4888
        %5044 = vmatprep.subr.bf16.mxu0 0
        %5045 = vmatpush1.bf16.msra.mxu0 %v4891
        %5046 = vmatprep.subr.bf16.mxu0 0
        %5047 = vmatpush1.bf16.msra.mxu0 %v4894
        %5048 = vmatprep.subr.bf16.mxu0 0
        %5049 = vmatpush1.bf16.msra.mxu0 0
        %5050 = vmatprep.subr.bf16.mxu0 0
        %5051 = vmatpush1.bf16.msra.mxu0 0
        %5052 = vmatprep.subr.bf16.mxu0 0
        %5053 = vmatpush1.bf16.msra.mxu0 0
        %5054 = vmatprep.subr.bf16.mxu0 0
        %5055 = vmatpush1.bf16.msra.mxu0 0
        %5056 = vmatprep.subr.bf16.mxu0 0
        %5057 = vmatpush1.bf16.msra.mxu0 0
        %5058 = vmatprep.subr.bf16.mxu0 0
        %5059 = vmatpush1.bf16.msra.mxu0 0
        %5060 = vmatprep.subr.bf16.mxu0 0
        %5061 = vmatpush1.bf16.msra.mxu0 0
        %5062 = vmatprep.subr.bf16.mxu0 0
        %5063 = vmatpush1.bf16.msra.mxu0 0
        %5064 = vmatprep.mubr.bf16.mxu0 0
        %5065 = vmatmul.mubr.bf16.gmra.mrb[0].mxu0 %v4775
        %v5066 = vpop.f32.mrb[0].mxu0
        %v5067 = vadd.f32 0.0, %v5066
        %v5068 = vpop.f32.mrb[0].mxu0
        %v5069 = vpop.f32.mrb[0].mxu0
        %v5070 = vadd.f32 0.0, %v5069
        %v5071 = vpop.f32.mrb[0].mxu0
        %5072 = vmatprep.mubr.bf16.mxu0 0
        %5073 = vmatmul.mubr.bf16.gmra.mrb[0].mxu0 %v4776
        %v5074 = vpop.f32.mrb[0].mxu0
        %v5075 = vadd.f32 0.0, %v5074
        %v5076 = vpop.f32.mrb[0].mxu0
        %v5077 = vpop.f32.mrb[0].mxu0
        %v5078 = vadd.f32 0.0, %v5077
        %v5079 = vpop.f32.mrb[0].mxu0
        %5080 = vmatprep.mubr.bf16.mxu0 0
        %5081 = vmatmul.mubr.bf16.gmra.mrb[0].mxu0 %v4777
        %v5082 = vpop.f32.mrb[0].mxu0
        %v5083 = vadd.f32 0.0, %v5082
        %v5084 = vpop.f32.mrb[0].mxu0
        %v5085 = vpop.f32.mrb[0].mxu0
        %v5086 = vadd.f32 0.0, %v5085
        %v5087 = vpop.f32.mrb[0].mxu0
        %5088 = vmatprep.mubr.bf16.mxu0 0
        %5089 = vmatmul.mubr.bf16.gmra.mrb[0].mxu0 %v4778
        %v5090 = vpop.f32.mrb[0].mxu0
        %v5091 = vadd.f32 0.0, %v5090
        %v5092 = vpop.f32.mrb[0].mxu0
        %v5093 = vpop.f32.mrb[0].mxu0
        %v5094 = vadd.f32 0.0, %v5093
        %v5095 = vpop.f32.mrb[0].mxu0
        %5096 = vmatprep.mubr.bf16.mxu0 0
        %5097 = vmatmul.mubr.bf16.gmra.mrb[0].mxu0 %v4779
        %v5098 = vpop.f32.mrb[0].mxu0
        %v5099 = vadd.f32 0.0, %v5098
        %v5100 = vpop.f32.mrb[0].mxu0
        %v5101 = vpop.f32.mrb[0].mxu0
        %v5102 = vadd.f32 0.0, %v5101
        %v5103 = vpop.f32.mrb[0].mxu0
        %5104 = vmatprep.mubr.bf16.mxu0 0
        %5105 = vmatmul.mubr.bf16.gmra.mrb[0].mxu0 %v4780
        %v5106 = vpop.f32.mrb[0].mxu0
        %v5107 = vadd.f32 0.0, %v5106
        %v5108 = vpop.f32.mrb[0].mxu0
        %v5109 = vpop.f32.mrb[0].mxu0
        %v5110 = vadd.f32 0.0, %v5109
        %v5111 = vpop.f32.mrb[0].mxu0
        %5112 = vmatprep.mubr.bf16.mxu0 0
        %5113 = vmatmul.mubr.bf16.gmra.mrb[0].mxu0 %v4781
        %v5114 = vpop.f32.mrb[0].mxu0
        %v5115 = vadd.f32 0.0, %v5114
        %v5116 = vpop.f32.mrb[0].mxu0
        %v5117 = vpop.f32.mrb[0].mxu0
        %v5118 = vadd.f32 0.0, %v5117
        %v5119 = vpop.f32.mrb[0].mxu0
        %5120 = vmatprep.mubr.bf16.mxu0 0
        %5121 = vmatmul.mubr.bf16.gmra.mrb[0].mxu0 %v4782
        %v5122 = vpop.f32.mrb[0].mxu0
        %v5123 = vadd.f32 0.0, %v5122
        %v5124 = vpop.f32.mrb[0].mxu0
        %v5125 = vpop.f32.mrb[0].mxu0
        %v5126 = vadd.f32 0.0, %v5125
        %v5127 = vpop.f32.mrb[0].mxu0
        %5128 = vdwg.mxu0
        %v5129 = vadd.f32 %v4463, %v4954
        %v5130 = vadd.f32 %v4464, %v4956
        %v5131 = vadd.f32 %v4465, %v5067
        %v5132 = vadd.f32 %v4466, %v4958
        %v5133 = vadd.f32 %v4467, %v4960
        %v5134 = vadd.f32 %v4468, %v5070
        %v5135 = vadd.f32 %v4469, %v4964
        %v5136 = vadd.f32 %v4470, %v4966
        %v5137 = vadd.f32 %v4471, %v5075
        %v5138 = vadd.f32 %v4472, %v4968
        %v5139 = vadd.f32 %v4473, %v4970
        %v5140 = vadd.f32 %v4474, %v5078
        %v5141 = vadd.f32 %v4475, %v4974
        %v5142 = vadd.f32 %v4476, %v4976
        %v5143 = vadd.f32 %v4477, %v5083
        %v5144 = vadd.f32 %v4478, %v4978
        %v5145 = vadd.f32 %v4479, %v4980
        %v5146 = vadd.f32 %v4480, %v5086
        %v5147 = vadd.f32 %v4481, %v4984
        %v5148 = vadd.f32 %v4482, %v4986
        %v5149 = vadd.f32 %v4483, %v5091
        %v5150 = vadd.f32 %v4484, %v4988
        %v5151 = vadd.f32 %v4485, %v4990
        %v5152 = vadd.f32 %v4486, %v5094
        %v5153 = vadd.f32 %v4487, %v4994
        %v5154 = vadd.f32 %v4488, %v4996
        %v5155 = vadd.f32 %v4489, %v5099
        %v5156 = vadd.f32 %v4490, %v4998
        %v5157 = vadd.f32 %v4491, %v5000
        %v5158 = vadd.f32 %v4492, %v5102
        %v5159 = vadd.f32 %v4493, %v5004
        %v5160 = vadd.f32 %v4494, %v5006
        %v5161 = vadd.f32 %v4495, %v5107
        %v5162 = vadd.f32 %v4496, %v5008
        %v5163 = vadd.f32 %v4497, %v5010
        %v5164 = vadd.f32 %v4498, %v5110
        %v5165 = vadd.f32 %v4499, %v5014
        %v5166 = vadd.f32 %v4500, %v5016
        %v5167 = vadd.f32 %v4501, %v5115
        %v5168 = vadd.f32 %v4502, %v5018
        %v5169 = vadd.f32 %v4503, %v5020
        %v5170 = vadd.f32 %v4504, %v5118
        %v5171 = vadd.f32 %v4505, %v5024
        %v5172 = vadd.f32 %v4506, %v5026
        %v5173 = vadd.f32 %v4507, %v5123
        %v5174 = vadd.f32 %v4508, %v5028
        %v5175 = vadd.f32 %v4509, %v5030
        %v5176 = vadd.f32 %v4510, %v5126
        %v5177 = vld [vmem:[%s4028] sm:$0xe]
        %v5178 = vld [vmem:[%s4028 + $0xc] sm:$0xe]
        %v5179 = vld [vmem:[%s4028 + $0x18] sm:$0xe]
        %v5180 = vld [vmem:[%s4028 + $0x24] sm:$0xe]
        %v5181 = vld [vmem:[%s4028 + $0x30] sm:$0xe]
        %v5182 = vld [vmem:[%s4028 + $0x3c] sm:$0xe]
        %v5183 = vld [vmem:[%s4028 + $0x48] sm:$0xe]
        %v5184 = vld [vmem:[%s4028 + $0x54] sm:$0xe]
        %v5209 = vrot.slane %v5177, 5
        %v5210 = vrot.slane %v5209, 4
        %v5211 = vrot.slane %v4512, 5
        %v5212 = vsel %vm1835, %v5210, %v5211
        %v5213 = vrot.slane %v5211, 4
        %v5214 = vrot.slane %v4513, 5
        %v5215 = vsel %vm1835, %v5213, %v5214
        %v5216 = vrot.slane %v5178, 5
        %v5217 = vrot.slane %v5216, 4
        %v5218 = vrot.slane %v4515, 5
        %v5219 = vsel %vm1835, %v5217, %v5218
        %v5220 = vrot.slane %v5218, 4
        %v5221 = vrot.slane %v4516, 5
        %v5222 = vsel %vm1835, %v5220, %v5221
        %v5223 = vrot.slane %v5179, 5
        %v5224 = vrot.slane %v5223, 4
        %v5225 = vrot.slane %v4518, 5
        %v5226 = vsel %vm1835, %v5224, %v5225
        %v5227 = vrot.slane %v5225, 4
        %v5228 = vrot.slane %v4519, 5
        %v5229 = vsel %vm1835, %v5227, %v5228
        %v5230 = vrot.slane %v5180, 5
        %v5231 = vrot.slane %v5230, 4
        %v5232 = vrot.slane %v4521, 5
        %v5233 = vsel %vm1835, %v5231, %v5232
        %v5234 = vrot.slane %v5232, 4
        %v5235 = vrot.slane %v4522, 5
        %v5236 = vsel %vm1835, %v5234, %v5235
        %v5237 = vrot.slane %v5181, 5
        %v5238 = vrot.slane %v5237, 4
        %v5239 = vrot.slane %v4524, 5
        %v5240 = vsel %vm1835, %v5238, %v5239
        %v5241 = vrot.slane %v5239, 4
        %v5242 = vrot.slane %v4525, 5
        %v5243 = vsel %vm1835, %v5241, %v5242
        %v5244 = vrot.slane %v5182, 5
        %v5245 = vrot.slane %v5244, 4
        %v5246 = vrot.slane %v4527, 5
        %v5247 = vsel %vm1835, %v5245, %v5246
        %v5248 = vrot.slane %v5246, 4
        %v5249 = vrot.slane %v4528, 5
        %v5250 = vsel %vm1835, %v5248, %v5249
        %v5251 = vrot.slane %v5183, 5
        %v5252 = vrot.slane %v5251, 4
        %v5253 = vrot.slane %v4530, 5
        %v5254 = vsel %vm1835, %v5252, %v5253
        %v5255 = vrot.slane %v5253, 4
        %v5256 = vrot.slane %v4531, 5
        %v5257 = vsel %vm1835, %v5255, %v5256
        %v5258 = vrot.slane %v5184, 5
        %v5259 = vrot.slane %v5258, 4
        %v5260 = vrot.slane %v4533, 5
        %v5261 = vsel %vm1835, %v5259, %v5260
        %v5262 = vrot.slane %v5260, 4
        %v5263 = vrot.slane %v4534, 5
        %v5264 = vsel %vm1835, %v5262, %v5263
        %v5265 = vld [vmem:[#allocation9 + $0x600] sm:$0xff]
        %v5266 = vld [vmem:[#allocation9 + $0x608] sm:$0xf]
        %v5267 = vld [vmem:[#allocation9 + $0x60c] sm:$0xff]
        %v5268 = vld [vmem:[#allocation9 + $0x614] sm:$0xf]
        %v5269 = vld [vmem:[#allocation9 + $0x618] sm:$0xff]
        %v5270 = vld [vmem:[#allocation9 + $0x620] sm:$0xf]
        %v5271 = vld [vmem:[#allocation9 + $0x624] sm:$0xff]
        %v5272 = vld [vmem:[#allocation9 + $0x62c] sm:$0xf]
        %v5273 = vld [vmem:[#allocation9 + $0x630] sm:$0xff]
        %v5274 = vld [vmem:[#allocation9 + $0x638] sm:$0xf]
        %v5275 = vld [vmem:[#allocation9 + $0x63c] sm:$0xff]
        %v5276 = vld [vmem:[#allocation9 + $0x644] sm:$0xf]
        %v5277 = vld [vmem:[#allocation9 + $0x648] sm:$0xff]
        %v5278 = vld [vmem:[#allocation9 + $0x650] sm:$0xf]
        %v5279 = vld [vmem:[#allocation9 + $0x654] sm:$0xff]
        %v5280 = vld [vmem:[#allocation9 + $0x65c] sm:$0xf]
        %v5281 = vld [vmem:[#allocation9 + $0x660] sm:$0xff]
        %v5282 = vld [vmem:[#allocation9 + $0x668] sm:$0xf]
        %v5283 = vld [vmem:[#allocation9 + $0x66c] sm:$0xff]
        %v5284 = vld [vmem:[#allocation9 + $0x674] sm:$0xf]
        %v5285 = vld [vmem:[#allocation9 + $0x678] sm:$0xff]
        %v5286 = vld [vmem:[#allocation9 + $0x680] sm:$0xf]
        %v5287 = vld [vmem:[#allocation9 + $0x684] sm:$0xff]
        %v5288 = vld [vmem:[#allocation9 + $0x68c] sm:$0xf]
        %v5289 = vld [vmem:[#allocation9 + $0x690] sm:$0xff]
        %v5290 = vld [vmem:[#allocation9 + $0x698] sm:$0xf]
        %v5291 = vld [vmem:[#allocation9 + $0x69c] sm:$0xff]
        %v5292 = vld [vmem:[#allocation9 + $0x6a4] sm:$0xf]
        %v5293 = vld [vmem:[#allocation9 + $0x6a8] sm:$0xff]
        %v5294 = vld [vmem:[#allocation9 + $0x6b0] sm:$0xf]
        %v5295 = vld [vmem:[#allocation9 + $0x6b4] sm:$0xff]
        %v5296 = vld [vmem:[#allocation9 + $0x6bc] sm:$0xf]
        %v5297 = vunpack.c.l.b16 %v5212
        %v5298 = vunpack.c.l.b16 %v5215
        %v5299 = vunpack.c.l.b16 %v5219
        %v5300 = vunpack.c.l.b16 %v5222
        %v5301 = vunpack.c.l.b16 %v5226
        %v5302 = vunpack.c.l.b16 %v5229
        %v5303 = vunpack.c.l.b16 %v5233
        %v5304 = vunpack.c.l.b16 %v5236
        %v5305 = vunpack.c.l.b16 %v5240
        %v5306 = vunpack.c.l.b16 %v5243
        %v5307 = vunpack.c.l.b16 %v5247
        %v5308 = vunpack.c.l.b16 %v5250
        %v5309 = vunpack.c.l.b16 %v5254
        %v5310 = vunpack.c.l.b16 %v5257
        %v5311 = vunpack.c.l.b16 %v5261
        %v5312 = vunpack.c.l.b16 %v5264
        %v5313 = vpack.c.b16 %v5298, %v5297
        %v5314 = vpack.c.b16 %v5300, %v5299
        %v5315 = vpack.c.b16 %v5302, %v5301
        %v5316 = vpack.c.b16 %v5304, %v5303
        %v5317 = vpack.c.b16 %v5306, %v5305
        %v5318 = vpack.c.b16 %v5308, %v5307
        %v5319 = vpack.c.b16 %v5310, %v5309
        %v5320 = vpack.c.b16 %v5312, %v5311
        %v5361 = vunpack.c.l.b16 %v5265
        %v5362 = vunpack.c.h.b16 %v5265
        %v5363 = vunpack.c.l.b16 %v5266
        %v5364 = vunpack.c.l.b16 %v5267
        %v5365 = vunpack.c.h.b16 %v5267
        %v5366 = vunpack.c.l.b16 %v5268
        %v5367 = vunpack.c.l.b16 %v5269
        %v5368 = vunpack.c.h.b16 %v5269
        %v5369 = vunpack.c.l.b16 %v5270
        %v5370 = vunpack.c.l.b16 %v5271
        %v5371 = vunpack.c.h.b16 %v5271
        %v5372 = vunpack.c.l.b16 %v5272
        %v5373 = vunpack.c.l.b16 %v5273
        %v5374 = vunpack.c.h.b16 %v5273
        %v5375 = vunpack.c.l.b16 %v5274
        %v5376 = vunpack.c.l.b16 %v5275
        %v5377 = vunpack.c.h.b16 %v5275
        %v5378 = vunpack.c.l.b16 %v5276
        %v5379 = vunpack.c.l.b16 %v5277
        %v5380 = vunpack.c.h.b16 %v5277
        %v5381 = vunpack.c.l.b16 %v5278
        %v5382 = vunpack.c.l.b16 %v5279
        %v5383 = vunpack.c.h.b16 %v5279
        %v5384 = vunpack.c.l.b16 %v5280
        %v5385 = vunpack.c.l.b16 %v5281
        %v5386 = vunpack.c.h.b16 %v5281
        %v5387 = vunpack.c.l.b16 %v5282
        %v5388 = vunpack.c.l.b16 %v5283
        %v5389 = vunpack.c.h.b16 %v5283
        %v5390 = vunpack.c.l.b16 %v5284
        %v5391 = vunpack.c.l.b16 %v5285
        %v5392 = vunpack.c.h.b16 %v5285
        %v5393 = vunpack.c.l.b16 %v5286
        %v5394 = vunpack.c.l.b16 %v5287
        %v5395 = vunpack.c.h.b16 %v5287
        %v5396 = vunpack.c.l.b16 %v5288
        %v5397 = vunpack.c.l.b16 %v5289
        %v5398 = vunpack.c.h.b16 %v5289
        %v5399 = vunpack.c.l.b16 %v5290
        %v5400 = vunpack.c.l.b16 %v5291
        %v5401 = vunpack.c.h.b16 %v5291
        %v5402 = vunpack.c.l.b16 %v5292
        %v5403 = vunpack.c.l.b16 %v5293
        %v5404 = vunpack.c.h.b16 %v5293
        %v5405 = vunpack.c.l.b16 %v5294
        %v5406 = vunpack.c.l.b16 %v5295
        %v5407 = vunpack.c.h.b16 %v5295
        %v5408 = vunpack.c.l.b16 %v5296
        %v5409 = vpack.c.b16 %v5364, %v5361
        %v5410 = vpack.c.b16 %v5365, %v5362
        %v5411 = vpack.c.b16 %v5366, %v5363
        %v5412 = vpack.c.b16 %v5370, %v5367
        %v5413 = vpack.c.b16 %v5371, %v5368
        %v5414 = vpack.c.b16 %v5372, %v5369
        %v5415 = vpack.c.b16 %v5376, %v5373
        %v5416 = vpack.c.b16 %v5377, %v5374
        %v5417 = vpack.c.b16 %v5378, %v5375
        %v5418 = vpack.c.b16 %v5382, %v5379
        %v5419 = vpack.c.b16 %v5383, %v5380
        %v5420 = vpack.c.b16 %v5384, %v5381
        %v5421 = vpack.c.b16 %v5388, %v5385
        %v5422 = vpack.c.b16 %v5389, %v5386
        %v5423 = vpack.c.b16 %v5390, %v5387
        %v5424 = vpack.c.b16 %v5394, %v5391
        %v5425 = vpack.c.b16 %v5395, %v5392
        %v5426 = vpack.c.b16 %v5396, %v5393
        %v5427 = vpack.c.b16 %v5400, %v5397
        %v5428 = vpack.c.b16 %v5401, %v5398
        %v5429 = vpack.c.b16 %v5402, %v5399
        %v5430 = vpack.c.b16 %v5406, %v5403
        %v5431 = vpack.c.b16 %v5407, %v5404
        %v5432 = vpack.c.b16 %v5408, %v5405
        %5457 = vmatprep.subr.bf16.mxu0 %v5410
        %5458 = vmatpush1.bf16.msra.mxu0 %v5409
        %5459 = vmatprep.subr.bf16.mxu0 %v5413
        %5460 = vmatpush1.bf16.msra.mxu0 %v5412
        %5461 = vmatprep.subr.bf16.mxu0 %v5416
        %5462 = vmatpush1.bf16.msra.mxu0 %v5415
        %5463 = vmatprep.subr.bf16.mxu0 %v5419
        %5464 = vmatpush1.bf16.msra.mxu0 %v5418
        %5465 = vmatprep.subr.bf16.mxu0 %v5422
        %5466 = vmatpush1.bf16.msra.mxu0 %v5421
        %5467 = vmatprep.subr.bf16.mxu0 %v5425
        %5468 = vmatpush1.bf16.msra.mxu0 %v5424
        %5469 = vmatprep.subr.bf16.mxu0 %v5428
        %5470 = vmatpush1.bf16.msra.mxu0 %v5427
        %5471 = vmatprep.subr.bf16.mxu0 %v5431
        %5472 = vmatpush1.bf16.msra.mxu0 %v5430
        %5473 = vmatprep.subr.bf16.mxu0 0
        %5474 = vmatpush1.bf16.msra.mxu0 0
        %5475 = vmatprep.subr.bf16.mxu0 0
        %5476 = vmatpush1.bf16.msra.mxu0 0
        %5477 = vmatprep.subr.bf16.mxu0 0
        %5478 = vmatpush1.bf16.msra.mxu0 0
        %5479 = vmatprep.subr.bf16.mxu0 0
        %5480 = vmatpush1.bf16.msra.mxu0 0
        %5481 = vmatprep.subr.bf16.mxu0 0
        %5482 = vmatpush1.bf16.msra.mxu0 0
        %5483 = vmatprep.subr.bf16.mxu0 0
        %5484 = vmatpush1.bf16.msra.mxu0 0
        %5485 = vmatprep.subr.bf16.mxu0 0
        %5486 = vmatpush1.bf16.msra.mxu0 0
        %5487 = vmatprep.subr.bf16.mxu0 0
        %5488 = vmatpush1.bf16.msra.mxu0 0
        %5489 = vmatprep.mubr.bf16.mxu0 0
        %5490 = vmatmul.mubr.bf16.gmra.mrb[0].mxu0 %v5313
        %v5491 = vpop.f32.mrb[0].mxu0
        %v5492 = vadd.f32 0.0, %v5491
        %v5493 = vpop.f32.mrb[0].mxu0
        %v5494 = vadd.f32 0.0, %v5493
        %v5495 = vpop.f32.mrb[0].mxu0
        %v5496 = vadd.f32 0.0, %v5495
        %v5497 = vpop.f32.mrb[0].mxu0
        %v5498 = vadd.f32 0.0, %v5497
        %5499 = vmatprep.mubr.bf16.mxu0 0
        %5500 = vmatmul.mubr.bf16.gmra.mrb[0].mxu0 %v5314
        %v5501 = vpop.f32.mrb[0].mxu0
        %v5502 = vadd.f32 0.0, %v5501
        %v5503 = vpop.f32.mrb[0].mxu0
        %v5504 = vadd.f32 0.0, %v5503
        %v5505 = vpop.f32.mrb[0].mxu0
        %v5506 = vadd.f32 0.0, %v5505
        %v5507 = vpop.f32.mrb[0].mxu0
        %v5508 = vadd.f32 0.0, %v5507
        %5509 = vmatprep.mubr.bf16.mxu0 0
        %5510 = vmatmul.mubr.bf16.gmra.mrb[0].mxu0 %v5315
        %v5511 = vpop.f32.mrb[0].mxu0
        %v5512 = vadd.f32 0.0, %v5511
        %v5513 = vpop.f32.mrb[0].mxu0
        %v5514 = vadd.f32 0.0, %v5513
        %v5515 = vpop.f32.mrb[0].mxu0
        %v5516 = vadd.f32 0.0, %v5515
        %v5517 = vpop.f32.mrb[0].mxu0
        %v5518 = vadd.f32 0.0, %v5517
        %5519 = vmatprep.mubr.bf16.mxu0 0
        %5520 = vmatmul.mubr.bf16.gmra.mrb[0].mxu0 %v5316
        %v5521 = vpop.f32.mrb[0].mxu0
        %v5522 = vadd.f32 0.0, %v5521
        %v5523 = vpop.f32.mrb[0].mxu0
        %v5524 = vadd.f32 0.0, %v5523
        %v5525 = vpop.f32.mrb[0].mxu0
        %v5526 = vadd.f32 0.0, %v5525
        %v5527 = vpop.f32.mrb[0].mxu0
        %v5528 = vadd.f32 0.0, %v5527
        %5529 = vmatprep.mubr.bf16.mxu0 0
        %5530 = vmatmul.mubr.bf16.gmra.mrb[0].mxu0 %v5317
        %v5531 = vpop.f32.mrb[0].mxu0
        %v5532 = vadd.f32 0.0, %v5531
        %v5533 = vpop.f32.mrb[0].mxu0
        %v5534 = vadd.f32 0.0, %v5533
        %v5535 = vpop.f32.mrb[0].mxu0
        %v5536 = vadd.f32 0.0, %v5535
        %v5537 = vpop.f32.mrb[0].mxu0
        %v5538 = vadd.f32 0.0, %v5537
        %5539 = vmatprep.mubr.bf16.mxu0 0
        %5540 = vmatmul.mubr.bf16.gmra.mrb[0].mxu0 %v5318
        %v5541 = vpop.f32.mrb[0].mxu0
        %v5542 = vadd.f32 0.0, %v5541
        %v5543 = vpop.f32.mrb[0].mxu0
        %v5544 = vadd.f32 0.0, %v5543
        %v5545 = vpop.f32.mrb[0].mxu0
        %v5546 = vadd.f32 0.0, %v5545
        %v5547 = vpop.f32.mrb[0].mxu0
        %v5548 = vadd.f32 0.0, %v5547
        %5549 = vmatprep.mubr.bf16.mxu0 0
        %5550 = vmatmul.mubr.bf16.gmra.mrb[0].mxu0 %v5319
        %v5551 = vpop.f32.mrb[0].mxu0
        %v5552 = vadd.f32 0.0, %v5551
        %v5553 = vpop.f32.mrb[0].mxu0
        %v5554 = vadd.f32 0.0, %v5553
        %v5555 = vpop.f32.mrb[0].mxu0
        %v5556 = vadd.f32 0.0, %v5555
        %v5557 = vpop.f32.mrb[0].mxu0
        %v5558 = vadd.f32 0.0, %v5557
        %5559 = vmatprep.mubr.bf16.mxu0 0
        %5560 = vmatmul.mubr.bf16.gmra.mrb[0].mxu0 %v5320
        %v5561 = vpop.f32.mrb[0].mxu0
        %v5562 = vadd.f32 0.0, %v5561
        %v5563 = vpop.f32.mrb[0].mxu0
        %v5564 = vadd.f32 0.0, %v5563
        %v5565 = vpop.f32.mrb[0].mxu0
        %v5566 = vadd.f32 0.0, %v5565
        %v5567 = vpop.f32.mrb[0].mxu0
        %v5568 = vadd.f32 0.0, %v5567
        %5569 = vdwg.mxu0
        %5570 = vmatprep.subr.bf16.mxu0 0
        %5571 = vmatpush1.bf16.msra.mxu0 %v5411
        %5572 = vmatprep.subr.bf16.mxu0 0
        %5573 = vmatpush1.bf16.msra.mxu0 %v5414
        %5574 = vmatprep.subr.bf16.mxu0 0
        %5575 = vmatpush1.bf16.msra.mxu0 %v5417
        %5576 = vmatprep.subr.bf16.mxu0 0
        %5577 = vmatpush1.bf16.msra.mxu0 %v5420
        %5578 = vmatprep.subr.bf16.mxu0 0
        %5579 = vmatpush1.bf16.msra.mxu0 %v5423
        %5580 = vmatprep.subr.bf16.mxu0 0
        %5581 = vmatpush1.bf16.msra.mxu0 %v5426
        %5582 = vmatprep.subr.bf16.mxu0 0
        %5583 = vmatpush1.bf16.msra.mxu0 %v5429
        %5584 = vmatprep.subr.bf16.mxu0 0
        %5585 = vmatpush1.bf16.msra.mxu0 %v5432
        %5586 = vmatprep.subr.bf16.mxu0 0
        %5587 = vmatpush1.bf16.msra.mxu0 0
        %5588 = vmatprep.subr.bf16.mxu0 0
        %5589 = vmatpush1.bf16.msra.mxu0 0
        %5590 = vmatprep.subr.bf16.mxu0 0
        %5591 = vmatpush1.bf16.msra.mxu0 0
        %5592 = vmatprep.subr.bf16.mxu0 0
        %5593 = vmatpush1.bf16.msra.mxu0 0
        %5594 = vmatprep.subr.bf16.mxu0 0
        %5595 = vmatpush1.bf16.msra.mxu0 0
        %5596 = vmatprep.subr.bf16.mxu0 0
        %5597 = vmatpush1.bf16.msra.mxu0 0
        %5598 = vmatprep.subr.bf16.mxu0 0
        %5599 = vmatpush1.bf16.msra.mxu0 0
        %5600 = vmatprep.subr.bf16.mxu0 0
        %5601 = vmatpush1.bf16.msra.mxu0 0
        %5602 = vmatprep.mubr.bf16.mxu0 0
        %5603 = vmatmul.mubr.bf16.gmra.mrb[0].mxu0 %v5313
        %v5604 = vpop.f32.mrb[0].mxu0
        %v5605 = vadd.f32 0.0, %v5604
        %v5606 = vpop.f32.mrb[0].mxu0
        %v5607 = vpop.f32.mrb[0].mxu0
        %v5608 = vadd.f32 0.0, %v5607
        %v5609 = vpop.f32.mrb[0].mxu0
        %5610 = vmatprep.mubr.bf16.mxu0 0
        %5611 = vmatmul.mubr.bf16.gmra.mrb[0].mxu0 %v5314
        %v5612 = vpop.f32.mrb[0].mxu0
        %v5613 = vadd.f32 0.0, %v5612
        %v5614 = vpop.f32.mrb[0].mxu0
        %v5615 = vpop.f32.mrb[0].mxu0
        %v5616 = vadd.f32 0.0, %v5615
        %v5617 = vpop.f32.mrb[0].mxu0
        %5618 = vmatprep.mubr.bf16.mxu0 0
        %5619 = vmatmul.mubr.bf16.gmra.mrb[0].mxu0 %v5315
        %v5620 = vpop.f32.mrb[0].mxu0
        %v5621 = vadd.f32 0.0, %v5620
        %v5622 = vpop.f32.mrb[0].mxu0
        %v5623 = vpop.f32.mrb[0].mxu0
        %v5624 = vadd.f32 0.0, %v5623
        %v5625 = vpop.f32.mrb[0].mxu0
        %5626 = vmatprep.mubr.bf16.mxu0 0
        %5627 = vmatmul.mubr.bf16.gmra.mrb[0].mxu0 %v5316
        %v5628 = vpop.f32.mrb[0].mxu0
        %v5629 = vadd.f32 0.0, %v5628
        %v5630 = vpop.f32.mrb[0].mxu0
        %v5631 = vpop.f32.mrb[0].mxu0
        %v5632 = vadd.f32 0.0, %v5631
        %v5633 = vpop.f32.mrb[0].mxu0
        %5634 = vmatprep.mubr.bf16.mxu0 0
        %5635 = vmatmul.mubr.bf16.gmra.mrb[0].mxu0 %v5317
        %v5636 = vpop.f32.mrb[0].mxu0
        %v5637 = vadd.f32 0.0, %v5636
        %v5638 = vpop.f32.mrb[0].mxu0
        %v5639 = vpop.f32.mrb[0].mxu0
        %v5640 = vadd.f32 0.0, %v5639
        %v5641 = vpop.f32.mrb[0].mxu0
        %5642 = vmatprep.mubr.bf16.mxu0 0
        %5643 = vmatmul.mubr.bf16.gmra.mrb[0].mxu0 %v5318
        %v5644 = vpop.f32.mrb[0].mxu0
        %v5645 = vadd.f32 0.0, %v5644
        %v5646 = vpop.f32.mrb[0].mxu0
        %v5647 = vpop.f32.mrb[0].mxu0
        %v5648 = vadd.f32 0.0, %v5647
        %v5649 = vpop.f32.mrb[0].mxu0
        %5650 = vmatprep.mubr.bf16.mxu0 0
        %5651 = vmatmul.mubr.bf16.gmra.mrb[0].mxu0 %v5319
        %v5652 = vpop.f32.mrb[0].mxu0
        %v5653 = vadd.f32 0.0, %v5652
        %v5654 = vpop.f32.mrb[0].mxu0
        %v5655 = vpop.f32.mrb[0].mxu0
        %v5656 = vadd.f32 0.0, %v5655
        %v5657 = vpop.f32.mrb[0].mxu0
        %5658 = vmatprep.mubr.bf16.mxu0 0
        %5659 = vmatmul.mubr.bf16.gmra.mrb[0].mxu0 %v5320
        %v5660 = vpop.f32.mrb[0].mxu0
        %v5661 = vadd.f32 0.0, %v5660
        %v5662 = vpop.f32.mrb[0].mxu0
        %v5663 = vpop.f32.mrb[0].mxu0
        %v5664 = vadd.f32 0.0, %v5663
        %v5665 = vpop.f32.mrb[0].mxu0
        %5666 = vdwg.mxu0
        %v5667 = vadd.f32 %v5129, %v5492
        %v5668 = vadd.f32 %v5130, %v5494
        %v5669 = vadd.f32 %v5131, %v5605
        %v5670 = vadd.f32 %v5132, %v5496
        %v5671 = vadd.f32 %v5133, %v5498
        %v5672 = vadd.f32 %v5134, %v5608
        %v5673 = vadd.f32 %v5135, %v5502
        %v5674 = vadd.f32 %v5136, %v5504
        %v5675 = vadd.f32 %v5137, %v5613
        %v5676 = vadd.f32 %v5138, %v5506
        %v5677 = vadd.f32 %v5139, %v5508
        %v5678 = vadd.f32 %v5140, %v5616
        %v5679 = vadd.f32 %v5141, %v5512
        %v5680 = vadd.f32 %v5142, %v5514
        %v5681 = vadd.f32 %v5143, %v5621
        %v5682 = vadd.f32 %v5144, %v5516
        %v5683 = vadd.f32 %v5145, %v5518
        %v5684 = vadd.f32 %v5146, %v5624
        %v5685 = vadd.f32 %v5147, %v5522
        %v5686 = vadd.f32 %v5148, %v5524
        %v5687 = vadd.f32 %v5149, %v5629
        %v5688 = vadd.f32 %v5150, %v5526
        %v5689 = vadd.f32 %v5151, %v5528
        %v5690 = vadd.f32 %v5152, %v5632
        %v5691 = vadd.f32 %v5153, %v5532
        %v5692 = vadd.f32 %v5154, %v5534
        %v5693 = vadd.f32 %v5155, %v5637
        %v5694 = vadd.f32 %v5156, %v5536
        %v5695 = vadd.f32 %v5157, %v5538
        %v5696 = vadd.f32 %v5158, %v5640
        %v5697 = vadd.f32 %v5159, %v5542
        %v5698 = vadd.f32 %v5160, %v5544
        %v5699 = vadd.f32 %v5161, %v5645
        %v5700 = vadd.f32 %v5162, %v5546
        %v5701 = vadd.f32 %v5163, %v5548
        %v5702 = vadd.f32 %v5164, %v5648
        %v5703 = vadd.f32 %v5165, %v5552
        %v5704 = vadd.f32 %v5166, %v5554
        %v5705 = vadd.f32 %v5167, %v5653
        %v5706 = vadd.f32 %v5168, %v5556
        %v5707 = vadd.f32 %v5169, %v5558
        %v5708 = vadd.f32 %v5170, %v5656
        %v5709 = vadd.f32 %v5171, %v5562
        %v5710 = vadd.f32 %v5172, %v5564
        %v5711 = vadd.f32 %v5173, %v5661
        %v5712 = vadd.f32 %v5174, %v5566
        %v5713 = vadd.f32 %v5175, %v5568
        %v5714 = vadd.f32 %v5176, %v5664
        %v5715 = vld [vmem:[%s4] sm:$0x7]
        %v5717 = vlaneseq
        %v5718 = vshrl.u32 %v5717, 7
        %v5719 = vsub.s32 0, %v5718
        %v5720 = vrot.slane %v5715, %v5719
        %v5721 = vlaneseq
        %v5722 = vshrl.u32 %v5721, 7
        %v5723 = vsub.s32 1, %v5722
        %v5724 = vrot.slane %v5715, %v5723
        %v5725 = vlaneseq
        %v5726 = vshrl.u32 %v5725, 7
        %v5727 = vsub.s32 2, %v5726
        %v5728 = vrot.slane %v5715, %v5727
        %v5732 = vadd.f32 %v5667, %v5720
        %v5733 = vadd.f32 %v5668, %v5724
        %v5734 = vadd.f32 %v5669, %v5728
        %v5735 = vadd.f32 %v5670, %v5720
        %v5736 = vadd.f32 %v5671, %v5724
        %v5737 = vadd.f32 %v5672, %v5728
        %v5738 = vadd.f32 %v5673, %v5720
        %v5739 = vadd.f32 %v5674, %v5724
        %v5740 = vadd.f32 %v5675, %v5728
        %v5741 = vadd.f32 %v5676, %v5720
        %v5742 = vadd.f32 %v5677, %v5724
        %v5743 = vadd.f32 %v5678, %v5728
        %v5744 = vadd.f32 %v5679, %v5720
        %v5745 = vadd.f32 %v5680, %v5724
        %v5746 = vadd.f32 %v5681, %v5728
        %v5747 = vadd.f32 %v5682, %v5720
        %v5748 = vadd.f32 %v5683, %v5724
        %v5749 = vadd.f32 %v5684, %v5728
        %v5750 = vadd.f32 %v5685, %v5720
        %v5751 = vadd.f32 %v5686, %v5724
        %v5752 = vadd.f32 %v5687, %v5728
        %v5753 = vadd.f32 %v5688, %v5720
        %v5754 = vadd.f32 %v5689, %v5724
        %v5755 = vadd.f32 %v5690, %v5728
        %v5756 = vadd.f32 %v5691, %v5720
        %v5757 = vadd.f32 %v5692, %v5724
        %v5758 = vadd.f32 %v5693, %v5728
        %v5759 = vadd.f32 %v5694, %v5720
        %v5760 = vadd.f32 %v5695, %v5724
        %v5761 = vadd.f32 %v5696, %v5728
        %v5762 = vadd.f32 %v5697, %v5720
        %v5763 = vadd.f32 %v5698, %v5724
        %v5764 = vadd.f32 %v5699, %v5728
        %v5765 = vadd.f32 %v5700, %v5720
        %v5766 = vadd.f32 %v5701, %v5724
        %v5767 = vadd.f32 %v5702, %v5728
        %v5768 = vadd.f32 %v5703, %v5720
        %v5769 = vadd.f32 %v5704, %v5724
        %v5770 = vadd.f32 %v5705, %v5728
        %v5771 = vadd.f32 %v5706, %v5720
        %v5772 = vadd.f32 %v5707, %v5724
        %v5773 = vadd.f32 %v5708, %v5728
        %v5774 = vadd.f32 %v5709, %v5720
        %v5775 = vadd.f32 %v5710, %v5724
        %v5776 = vadd.f32 %v5711, %v5728
        %v5777 = vadd.f32 %v5712, %v5720
        %v5778 = vadd.f32 %v5713, %v5724
        %v5779 = vadd.f32 %v5714, %v5728
        %v5780 = vmax.f32 %v5732, 0.0
        %v5781 = vmax.f32 %v5733, 0.0
        %v5782 = vmax.f32 %v5734, 0.0
        %v5783 = vmax.f32 %v5735, 0.0
        %v5784 = vmax.f32 %v5736, 0.0
        %v5785 = vmax.f32 %v5737, 0.0
        %v5786 = vmax.f32 %v5738, 0.0
        %v5787 = vmax.f32 %v5739, 0.0
        %v5788 = vmax.f32 %v5740, 0.0
        %v5789 = vmax.f32 %v5741, 0.0
        %v5790 = vmax.f32 %v5742, 0.0
        %v5791 = vmax.f32 %v5743, 0.0
        %v5792 = vmax.f32 %v5744, 0.0
        %v5793 = vmax.f32 %v5745, 0.0
        %v5794 = vmax.f32 %v5746, 0.0
        %v5795 = vmax.f32 %v5747, 0.0
        %v5796 = vmax.f32 %v5748, 0.0
        %v5797 = vmax.f32 %v5749, 0.0
        %v5798 = vmax.f32 %v5750, 0.0
        %v5799 = vmax.f32 %v5751, 0.0
        %v5800 = vmax.f32 %v5752, 0.0
        %v5801 = vmax.f32 %v5753, 0.0
        %v5802 = vmax.f32 %v5754, 0.0
        %v5803 = vmax.f32 %v5755, 0.0
        %v5804 = vmax.f32 %v5756, 0.0
        %v5805 = vmax.f32 %v5757, 0.0
        %v5806 = vmax.f32 %v5758, 0.0
        %v5807 = vmax.f32 %v5759, 0.0
        %v5808 = vmax.f32 %v5760, 0.0
        %v5809 = vmax.f32 %v5761, 0.0
        %v5810 = vmax.f32 %v5762, 0.0
        %v5811 = vmax.f32 %v5763, 0.0
        %v5812 = vmax.f32 %v5764, 0.0
        %v5813 = vmax.f32 %v5765, 0.0
        %v5814 = vmax.f32 %v5766, 0.0
        %v5815 = vmax.f32 %v5767, 0.0
        %v5816 = vmax.f32 %v5768, 0.0
        %v5817 = vmax.f32 %v5769, 0.0
        %v5818 = vmax.f32 %v5770, 0.0
        %v5819 = vmax.f32 %v5771, 0.0
        %v5820 = vmax.f32 %v5772, 0.0
        %v5821 = vmax.f32 %v5773, 0.0
        %v5822 = vmax.f32 %v5774, 0.0
        %v5823 = vmax.f32 %v5775, 0.0
        %v5824 = vmax.f32 %v5776, 0.0
        %v5825 = vmax.f32 %v5777, 0.0
        %v5826 = vmax.f32 %v5778, 0.0
        %v5827 = vmax.f32 %v5779, 0.0
        %v5828 = vpack.c.bf16 %v5783, %v5780
        %v5829 = vpack.c.bf16 %v5784, %v5781
        %v5830 = vpack.c.bf16 %v5785, %v5782
        %v5831 = vpack.c.bf16 %v5789, %v5786
        %v5832 = vpack.c.bf16 %v5790, %v5787
        %v5833 = vpack.c.bf16 %v5791, %v5788
        %v5834 = vpack.c.bf16 %v5795, %v5792
        %v5835 = vpack.c.bf16 %v5796, %v5793
        %v5836 = vpack.c.bf16 %v5797, %v5794
        %v5837 = vpack.c.bf16 %v5801, %v5798
        %v5838 = vpack.c.bf16 %v5802, %v5799
        %v5839 = vpack.c.bf16 %v5803, %v5800
        %v5840 = vpack.c.bf16 %v5807, %v5804
        %v5841 = vpack.c.bf16 %v5808, %v5805
        %v5842 = vpack.c.bf16 %v5809, %v5806
        %v5843 = vpack.c.bf16 %v5813, %v5810
        %v5844 = vpack.c.bf16 %v5814, %v5811
        %v5845 = vpack.c.bf16 %v5815, %v5812
        %v5846 = vpack.c.bf16 %v5819, %v5816
        %v5847 = vpack.c.bf16 %v5820, %v5817
        %v5848 = vpack.c.bf16 %v5821, %v5818
        %v5849 = vpack.c.bf16 %v5825, %v5822
        %v5850 = vpack.c.bf16 %v5826, %v5823
        %v5851 = vpack.c.bf16 %v5827, %v5824
        %v5876 = vunpack.c.l.b16 %v5828
        %v5877 = vunpack.c.l.b16 %v5829
        %v5878 = vunpack.c.l.b16 %v5830
        %v5879 = vunpack.c.h.b16 %v5828
        %v5880 = vunpack.c.h.b16 %v5829
        %v5881 = vunpack.c.h.b16 %v5830
        %v5882 = vunpack.c.l.b16 %v5831
        %v5883 = vunpack.c.l.b16 %v5832
        %v5884 = vunpack.c.l.b16 %v5833
        %v5885 = vunpack.c.h.b16 %v5831
        %v5886 = vunpack.c.h.b16 %v5832
        %v5887 = vunpack.c.h.b16 %v5833
        %v5888 = vunpack.c.l.b16 %v5834
        %v5889 = vunpack.c.l.b16 %v5835
        %v5890 = vunpack.c.l.b16 %v5836
        %v5891 = vunpack.c.h.b16 %v5834
        %v5892 = vunpack.c.h.b16 %v5835
        %v5893 = vunpack.c.h.b16 %v5836
        %v5894 = vunpack.c.l.b16 %v5837
        %v5895 = vunpack.c.l.b16 %v5838
        %v5896 = vunpack.c.l.b16 %v5839
        %v5897 = vunpack.c.h.b16 %v5837
        %v5898 = vunpack.c.h.b16 %v5838
        %v5899 = vunpack.c.h.b16 %v5839
        %v5900 = vunpack.c.l.b16 %v5840
        %v5901 = vunpack.c.l.b16 %v5841
        %v5902 = vunpack.c.l.b16 %v5842
        %v5903 = vunpack.c.h.b16 %v5840
        %v5904 = vunpack.c.h.b16 %v5841
        %v5905 = vunpack.c.h.b16 %v5842
        %v5906 = vunpack.c.l.b16 %v5843
        %v5907 = vunpack.c.l.b16 %v5844
        %v5908 = vunpack.c.l.b16 %v5845
        %v5909 = vunpack.c.h.b16 %v5843
        %v5910 = vunpack.c.h.b16 %v5844
        %v5911 = vunpack.c.h.b16 %v5845
        %v5912 = vunpack.c.l.b16 %v5846
        %v5913 = vunpack.c.l.b16 %v5847
        %v5914 = vunpack.c.l.b16 %v5848
        %v5915 = vunpack.c.h.b16 %v5846
        %v5916 = vunpack.c.h.b16 %v5847
        %v5917 = vunpack.c.h.b16 %v5848
        %v5918 = vunpack.c.l.b16 %v5849
        %v5919 = vunpack.c.l.b16 %v5850
        %v5920 = vunpack.c.l.b16 %v5851
        %v5921 = vunpack.c.h.b16 %v5849
        %v5922 = vunpack.c.h.b16 %v5850
        %v5923 = vunpack.c.h.b16 %v5851
        %v5924 = vpack.c.b16 %v5877, %v5876
        %v5925 = vpack.c.b16 %v5878, %v5878
        %v5926 = vpack.c.b16 %v5880, %v5879
        %v5927 = vpack.c.b16 %v5881, %v5881
        %v5928 = vpack.c.b16 %v5883, %v5882
        %v5929 = vpack.c.b16 %v5884, %v5884
        %v5930 = vpack.c.b16 %v5886, %v5885
        %v5931 = vpack.c.b16 %v5887, %v5887
        %v5932 = vpack.c.b16 %v5889, %v5888
        %v5933 = vpack.c.b16 %v5890, %v5890
        %v5934 = vpack.c.b16 %v5892, %v5891
        %v5935 = vpack.c.b16 %v5893, %v5893
        %v5936 = vpack.c.b16 %v5895, %v5894
        %v5937 = vpack.c.b16 %v5896, %v5896
        %v5938 = vpack.c.b16 %v5898, %v5897
        %v5939 = vpack.c.b16 %v5899, %v5899
        %v5940 = vpack.c.b16 %v5901, %v5900
        %v5941 = vpack.c.b16 %v5902, %v5902
        %v5942 = vpack.c.b16 %v5904, %v5903
        %v5943 = vpack.c.b16 %v5905, %v5905
        %v5944 = vpack.c.b16 %v5907, %v5906
        %v5945 = vpack.c.b16 %v5908, %v5908
        %v5946 = vpack.c.b16 %v5910, %v5909
        %v5947 = vpack.c.b16 %v5911, %v5911
        %v5948 = vpack.c.b16 %v5913, %v5912
        %v5949 = vpack.c.b16 %v5914, %v5914
        %v5950 = vpack.c.b16 %v5916, %v5915
        %v5951 = vpack.c.b16 %v5917, %v5917
        %v5952 = vpack.c.b16 %v5919, %v5918
        %v5953 = vpack.c.b16 %v5920, %v5920
        %v5954 = vpack.c.b16 %v5922, %v5921
        %v5955 = vpack.c.b16 %v5923, %v5923
        %5988 = vst [vmem:[%s385] sm:$0xff] %v5924
        %5989 = vst [vmem:[%s385 + $0x8] sm:$0xf] %v5925
        %5990 = vst [vmem:[%s385 + $0xc] sm:$0xff] %v5926
        %5991 = vst [vmem:[%s385 + $0x14] sm:$0xf] %v5927
        %5992 = vst [vmem:[%s385 + $0x18] sm:$0xff] %v5928
        %5993 = vst [vmem:[%s385 + $0x20] sm:$0xf] %v5929
        %5994 = vst [vmem:[%s385 + $0x24] sm:$0xff] %v5930
        %5995 = vst [vmem:[%s385 + $0x2c] sm:$0xf] %v5931
        %5996 = vst [vmem:[%s385 + $0x30] sm:$0xff] %v5932
        %5997 = vst [vmem:[%s385 + $0x38] sm:$0xf] %v5933
        %5998 = vst [vmem:[%s385 + $0x3c] sm:$0xff] %v5934
        %5999 = vst [vmem:[%s385 + $0x44] sm:$0xf] %v5935
        %6000 = vst [vmem:[%s385 + $0x48] sm:$0xff] %v5936
        %6001 = vst [vmem:[%s385 + $0x50] sm:$0xf] %v5937
        %6002 = vst [vmem:[%s385 + $0x54] sm:$0xff] %v5938
        %6003 = vst [vmem:[%s385 + $0x5c] sm:$0xf] %v5939
        %6004 = vst [vmem:[%s385 + $0x60] sm:$0xff] %v5940
        %6005 = vst [vmem:[%s385 + $0x68] sm:$0xf] %v5941
        %6006 = vst [vmem:[%s385 + $0x6c] sm:$0xff] %v5942
        %6007 = vst [vmem:[%s385 + $0x74] sm:$0xf] %v5943
        %6008 = vst [vmem:[%s385 + $0x78] sm:$0xff] %v5944
        %6009 = vst [vmem:[%s385 + $0x80] sm:$0xf] %v5945
        %6010 = vst [vmem:[%s385 + $0x84] sm:$0xff] %v5946
        %6011 = vst [vmem:[%s385 + $0x8c] sm:$0xf] %v5947
        %6012 = vst [vmem:[%s385 + $0x90] sm:$0xff] %v5948
        %6013 = vst [vmem:[%s385 + $0x98] sm:$0xf] %v5949
        %6014 = vst [vmem:[%s385 + $0x9c] sm:$0xff] %v5950
        %6015 = vst [vmem:[%s385 + $0xa4] sm:$0xf] %v5951
        %6016 = vst [vmem:[%s385 + $0xa8] sm:$0xff] %v5952
        %6017 = vst [vmem:[%s385 + $0xb0] sm:$0xf] %v5953
        %6018 = vst [vmem:[%s385 + $0xb4] sm:$0xff] %v5954
        %6019 = vst [vmem:[%s385 + $0xbc] sm:$0xf] %v5955
        %s6020 = sand.u32 %s190, 1
        %s6021 = scalar_lea.sflag [#allocation5], %s6020
        %s6022 = sand.u32 %s190, 1
        %s6023 = smul.addr %s6022, 192
        %s6024 = scalar_lea.vmem [#allocation11], %s6023
        // Predicated region
        $region57: #{tpu_custom_call.1} parent=39 // pred_check
          %p6025 = pneg %p200
        $region58: #{tpu_custom_call.1} parent=39 // pred_check_branch
          %6027 = sbr.rel (%p6025) target = $region60
        $region59: #{tpu_custom_call.1} parent=39 // pred_region
          %s6028 = smul.u32 8, %s31
          %s6030 = ssub.s32 3072, 3072
          %6031 = vsyncadd %s6021, %s6030
          %s6032 = smul.addr %s6028, 6
          %s6033 = smul.addr %s30, 96
          %s6034 = sadd.s32 %s6032, %s6033
          %s6035 = smul.addr %s6034, 64
          %s6036 = scalar_lea.hbm %s5, %s6035
          %s6037 = sshll.u32 %s6024, 4
          %s6038 = int_to_ptr.vmem [resolvable:$true] %s6037
          %6043 = dma.vmem_to_hbm [thread:$0]  %s6038, 3072, %s6036, %s6021, 192, 192, 12
        $region60: #{tpu_custom_call.1} parent=39 // pred_fallthru
          _
      $region40: #{tpu_custom_call.1} parent=5 // pred_fallthru
        _
      %p6044 = scmp.le.s32.totalorder 2, %s21
      // Predicated region
      $region61: #{tpu_custom_call.1} parent=5 // pred_check
        %p6045 = pneg %p6044
      $region62: #{tpu_custom_call.1} parent=5 // pred_check_branch
        %6047 = sbr.rel (%p6045) target = $region64
      $region63: #{tpu_custom_call.1} parent=5 // pred_region
        %s6048 = ssub.s32 %s21, 2
        // Predicated region
        $region65: #{tpu_custom_call.1} parent=63 // pred_check
          %p6049 = pneg %p206
        $region66: #{tpu_custom_call.1} parent=63 // pred_check_branch
          %6051 = sbr.rel (%p6049) target = $region68
        $region67: #{tpu_custom_call.1} parent=63 // pred_region
          %s6052 = sand.u32 %s191, 1
          %s6053 = scalar_lea.sflag [#allocation5], %s6052
          %s6054 = sand.u32 %s191, 1
          %s6055 = smul.addr %s6054, 192
          %s6056 = scalar_lea.vmem [#allocation11], %s6055
          %6057 = dma.done %s6053, 3072
        $region68: #{tpu_custom_call.1} parent=63 // pred_fallthru
          _
      $region64: #{tpu_custom_call.1} parent=5 // pred_fallthru
        _
    $region6: #{tpu_custom_call.1} parent=1 // loop_footer
      %s25 = sadd.s32 1, %s21
    $region7: #{tpu_custom_call.1} parent=1 // loop_footer_branch
      %20 = sbr.rel target = $region3
    $region8: #{tpu_custom_call.1} parent=1 // loop_exit
      _
    %6058 = vsyncpa [#allocation4], 1
    %s6059 = scalar_lea.sflag [#allocation4], 1
    %6060 = vsyncpa %s6059, 1
    %6061 = vsyncpa [#allocation7], 1
    %s6062 = scalar_lea.sflag [#allocation7], 1
    %6063 = vsyncpa %s6062, 1
    %6064 = vsyncpa [#allocation10], 1
    %6065 = vsyncpa [#allocation5], 1
    %s6066 = scalar_lea.sflag [#allocation5], 1
    %6067 = vsyncpa %s6066, 1

</llo_original>
